<compile_context>
chip_gen: v5e
topology: v5e:2x2
jax: 0.10.0
libtpu: 0.0.40
codegen_flags: <defaults>
</compile_context>

<pallas_src>
import functools

import jax
import jax.numpy as jnp
from jax import lax
from jax.experimental import pallas as pl
from jax.experimental.pallas import tpu as pltpu


# ----------------------------------------------------------------------------
# Fused Pallas kernel: one grid step == full forward for one batch element.
# ----------------------------------------------------------------------------

def _dbda_kernel(x_ref, *refs, H, W, gamma_cam, gamma_pam):
    (w11, b11, s11, t11,
     w12, b12, s12, t12,
     w13, b13, s13, t13,
     w14, b14, s14, t14,
     w15, b15,
     w21, b21, s21, t21,
     w22, b22, s22, t22,
     w23, b23, s23, t23,
     w24, b24,
     wqk, bqk,
     wfc1, wfc2, bfc,
     mask_ref,
     o_ref) = refs

    N = H * W
    x0 = x_ref[...]                                        # (N, band)

    def mm(a, w_r, b_r):                                   # 1x1 conv == matmul + bias
        return jnp.dot(a, w_r[...], preferred_element_type=jnp.float32) + b_r[...]

    def bnrelu(a, s_r, t_r):                               # folded eval-BN + ReLU epilogue
        return jnp.maximum(a * s_r[...] + t_r[...], 0.0)

    def softmax_lastdim(e):                                # numerically-stable softmax
        e = e - jnp.max(e, axis=-1, keepdims=True)
        p = jnp.exp(e)
        return p * pl.reciprocal(jnp.sum(p, axis=-1, keepdims=True), approx=True)

    tap_mask = mask_ref[...]                               # (9, N, 1), hoisted once

    def conv3x3(a, w_r, b_r):
        # a: (N, Cin); w_r: (9, Cin, Cout) with tap k = (dh, dw) row-major over
        # (-1,0,1)x(-1,0,1)  (== torch_weight.permute(2,3,1,0).reshape(9,Cin,Cout)).
        # 3x3 / pad=1 / stride=1 conv as 9 shifted matmul taps, all in VMEM.
        w9 = w_r[...]
        acc = jnp.zeros((N, w9.shape[-1]), jnp.float32) + b_r[...]
        k = 0
        for dh in (-1, 0, 1):
            for dw in (-1, 0, 1):
                shift = dh * W + dw
                rolled = a if shift == 0 else pltpu.roll(a, (-shift) % N, axis=0)
                tap = rolled * tap_mask[k]                 # zero out-of-image pixels
                acc = acc + jnp.dot(tap, w9[k], preferred_element_type=jnp.float32)
                k += 1
        return acc

    # ---------------- spectral branch: dense 1x1 block + CAM ----------------
    x11 = mm(x0, w11, b11)                                 # (N, 24)
    x12 = mm(bnrelu(x11, s11, t11), w12, b12)              # (N, 24)
    c13 = jnp.concatenate([x11, x12], axis=-1)             # (N, 48)
    x13 = mm(bnrelu(c13, s12, t12), w13, b13)              # (N, 24)
    c14 = jnp.concatenate([x11, x12, x13], axis=-1)        # (N, 72)
    x14 = mm(bnrelu(c14, s13, t13), w14, b14)              # (N, 24)
    c15 = jnp.concatenate([x11, x12, x13, x14], axis=-1)   # (N, 96)
    x16 = mm(bnrelu(c15, s14, t14), w15, b15)              # (N, 60)

    # CAM_Module: energy[c1,c2] = sum_n x[n,c1] * x[n,c2]
    e1 = lax.dot_general(x16, x16, (((0,), (0,)), ((), ())),
                         preferred_element_type=jnp.float32)        # (60, 60)
    a1 = softmax_lastdim(jnp.max(e1, axis=-1, keepdims=True) - e1)  # (60, 60)
    cam = lax.dot_general(x16, a1, (((1,), (1,)), ((), ())),
                          preferred_element_type=jnp.float32)       # (N, 60)
    x1 = gamma_cam * cam + x16

    # ---------------- spatial branch: dense 3x3 block + PAM ----------------
    x21 = mm(x0, w21, b21)                                 # (N, 24)
    x22 = conv3x3(bnrelu(x21, s21, t21), w22, b22)         # (N, 12)
    c23 = jnp.concatenate([x21, x22], axis=-1)             # (N, 36)
    x23 = conv3x3(bnrelu(c23, s22, t22), w23, b23)         # (N, 12)
    c24 = jnp.concatenate([x21, x22, x23], axis=-1)        # (N, 48)
    x24 = conv3x3(bnrelu(c24, s23, t23), w24, b24)         # (N, 12)
    x25 = jnp.concatenate([x21, x22, x23, x24], axis=-1)   # (N, 60)

    # PAM_Module: fused query/key projection (each zero-padded to 8 lanes).
    qk = mm(x25, wqk, bqk)                                 # (N, 16)
    q = qk[:, 0:8]
    kk = qk[:, 8:16]
    e2 = lax.dot_general(q, kk, (((1,), (1,)), ((), ())),
                         preferred_element_type=jnp.float32)        # (N, N)
    a2 = softmax_lastdim(e2)
    pam = jnp.dot(a2, x25, preferred_element_type=jnp.float32)      # (N, 60)
    x2 = gamma_pam * pam + x25

    # -------- fused global-average-pool + Linear(120, classes) head --------
    # FC(cat(mean_n x1, mean_n x2)) == mean_n(x1 @ W1 + x2 @ W2) + b
    y = (jnp.dot(x1, wfc1[...], preferred_element_type=jnp.float32)
         + jnp.dot(x2, wfc2[...], preferred_element_type=jnp.float32))  # (N, classes)
    o_ref[...] = jnp.mean(y, axis=0, keepdims=True) + bfc[...]          # (1, classes)


# ----------------------------------------------------------------------------
# Glue: parameter setup and the single pallas_call wrapper.
# ----------------------------------------------------------------------------

def _tap_masks(H, W):
    """mask[k, n, 0] = 1 if for pixel n=(h,w) the 3x3 tap k=(dh,dw) stays inside
    the image (i.e. the implicit zero padding is not hit)."""
    N = H * W
    n = jnp.arange(N)
    h, w = n // W, n % W
    rows = []
    for dh in (-1, 0, 1):
        for dw in (-1, 0, 1):
            ok = (h + dh >= 0) & (h + dh < H) & (w + dw >= 0) & (w + dw < W)
            rows.append(ok.astype(jnp.float32))
    return jnp.stack(rows, axis=0).reshape(9, N, 1)


def _const_spec(a):
    # Full-array block that stays resident across all grid steps.
    return pl.BlockSpec(a.shape, lambda b, _nd=a.ndim: (0,) * _nd)


def dbda_forward(X, p):
    """X: (B, band, H, W) NCHW (PyTorch convention) -> (B, classes)."""
    B, band, H, W = X.shape
    N = H * W
    x = jnp.transpose(X, (0, 2, 3, 1)).reshape(B, N, band).astype(jnp.float32)

    weights = [
        p['w11'], p['b11'], p['bn11_s'], p['bn11_t'],
        p['w12'], p['b12'], p['bn12_s'], p['bn12_t'],
        p['w13'], p['b13'], p['bn13_s'], p['bn13_t'],
        p['w14'], p['b14'], p['bn14_s'], p['bn14_t'],
        p['w15'], p['b15'],
        p['w21'], p['b21'], p['bn21_s'], p['bn21_t'],
        p['w22'], p['b22'], p['bn22_s'], p['bn22_t'],
        p['w23'], p['b23'], p['bn23_s'], p['bn23_t'],
        p['w24'], p['b24'],
        p['wqk'], p['bqk'],
        p['wfc1'], p['wfc2'], p['bfc'],
        _tap_masks(H, W),
    ]
    classes = p['bfc'].shape[-1]

    kernel = functools.partial(
        _dbda_kernel, H=H, W=W,
        gamma_cam=p['gamma_cam'], gamma_pam=p['gamma_pam'])

    out = pl.pallas_call(
        kernel,
        out_shape=jax.ShapeDtypeStruct((B, 1, classes), jnp.float32),
        grid=(B,),
        in_specs=[pl.BlockSpec((None, N, band), lambda b: (b, 0, 0))]
                 + [_const_spec(a) for a in weights],
        out_specs=pl.BlockSpec((None, 1, classes), lambda b: (b, 0, 0)),
        compiler_params=pltpu.CompilerParams(
            dimension_semantics=("parallel",)),
    )(x, *weights)
    return out.reshape(B, classes)


def init_params(key, band, classes):
    ks = iter(jax.random.split(key, 64))

    def conv1x1(cin, cout):
        # matmul-ready: (cin, cout) == torch_weight.reshape(cout, cin).T
        w = jax.random.normal(next(ks), (cin, cout), jnp.float32) * 0.1
        b = jax.random.normal(next(ks), (1, cout), jnp.float32) * 0.01
        return w, b

    def conv3x3(cin, cout):
        # tap-major: (9, cin, cout) == torch_weight.permute(2, 3, 1, 0).reshape(9, cin, cout)
        w = jax.random.normal(next(ks), (9, cin, cout), jnp.float32) * 0.05
        b = jax.random.normal(next(ks), (1, cout), jnp.float32) * 0.01
        return w, b

    def bn(c):
        # eval-mode BatchNorm folded into per-channel scale/shift
        weight = 1.0 + 0.1 * jax.random.normal(next(ks), (c,), jnp.float32)
        bias = 0.05 * jax.random.normal(next(ks), (c,), jnp.float32)
        mean = 0.1 * jax.random.normal(next(ks), (c,), jnp.float32)
        var = 1.0 + 0.1 * jnp.abs(jax.random.normal(next(ks), (c,), jnp.float32))
        scale = weight / jnp.sqrt(var + 1e-5)
        shift = bias - mean * scale
        return scale.reshape(1, c), shift.reshape(1, c)

    p = {}
    # spectral branch (1x1 convs)
    p['w11'], p['b11'] = conv1x1(band, 24)
    p['bn11_s'], p['bn11_t'] = bn(24)
    p['w12'], p['b12'] = conv1x1(24, 24)
    p['bn12_s'], p['bn12_t'] = bn(48)
    p['w13'], p['b13'] = conv1x1(48, 24)
    p['bn13_s'], p['bn13_t'] = bn(72)
    p['w14'], p['b14'] = conv1x1(72, 24)
    p['bn14_s'], p['bn14_t'] = bn(96)
    p['w15'], p['b15'] = conv1x1(96, 60)
    p['gamma_cam'] = 0.5   # torch init is 0 (attention would be a no-op)

    # spatial branch (1x1 + 3x3 convs)
    p['w21'], p['b21'] = conv1x1(band, 24)
    p['bn21_s'], p['bn21_t'] = bn(24)
    p['w22'], p['b22'] = conv3x3(24, 12)
    p['bn22_s'], p['bn22_t'] = bn(36)
    p['w23'], p['b23'] = conv3x3(36, 12)
    p['bn23_s'], p['bn23_t'] = bn(48)
    p['w24'], p['b24'] = conv3x3(48, 12)

    # PAM query/key 1x1 convs (60 -> 60//8 = 7), fused and zero-padded to 8 lanes each
    cq = 60 // 8
    wq, bq = conv1x1(60, cq)
    wk, bk = conv1x1(60, cq)
    wqk = jnp.zeros((60, 16), jnp.float32)
    wqk = wqk.at[:, 0:cq].set(wq).at[:, 8:8 + cq].set(wk)
    bqk = jnp.zeros((1, 16), jnp.float32)
    bqk = bqk.at[:, 0:cq].set(bq).at[:, 8:8 + cq].set(bk)
    p['wqk'], p['bqk'] = wqk, bqk
    p['gamma_pam'] = 0.5   # torch init is 0

    # final Linear(120, classes), split into the spectral / spatial halves
    wfc, bfc = conv1x1(120, classes)
    p['wfc1'], p['wfc2'], p['bfc'] = wfc[:60, :], wfc[60:, :], bfc
    return p


if __name__ == "__main__":
    B, band, H, W, classes = 2, 4, 8, 8, 5
    key = jax.random.PRNGKey(0)
    kx, kp = jax.random.split(key)
    X = jax.random.normal(kx, (B, band, H, W), dtype=jnp.float32)
    params = init_params(kp, band, classes)

    out = dbda_forward(X, params)
    out = jax.block_until_ready(out)
    assert out.shape == (B, classes)
    assert bool(jnp.all(jnp.isfinite(out)))
    print("KERNEL_OK")
</pallas_src>

<mosaic_0001>
module attributes {stable_mosaic.version = 11 : i64} {
  func.func @_dbda_kernel(%arg0: i32, %arg1: memref<1x64x4xf32, #tpu.memory_space<vmem>>, %arg2: memref<4x24xf32, #tpu.memory_space<vmem>>, %arg3: memref<1x24xf32, #tpu.memory_space<vmem>>, %arg4: memref<1x24xf32, #tpu.memory_space<vmem>>, %arg5: memref<1x24xf32, #tpu.memory_space<vmem>>, %arg6: memref<24x24xf32, #tpu.memory_space<vmem>>, %arg7: memref<1x24xf32, #tpu.memory_space<vmem>>, %arg8: memref<1x48xf32, #tpu.memory_space<vmem>>, %arg9: memref<1x48xf32, #tpu.memory_space<vmem>>, %arg10: memref<48x24xf32, #tpu.memory_space<vmem>>, %arg11: memref<1x24xf32, #tpu.memory_space<vmem>>, %arg12: memref<1x72xf32, #tpu.memory_space<vmem>>, %arg13: memref<1x72xf32, #tpu.memory_space<vmem>>, %arg14: memref<72x24xf32, #tpu.memory_space<vmem>>, %arg15: memref<1x24xf32, #tpu.memory_space<vmem>>, %arg16: memref<1x96xf32, #tpu.memory_space<vmem>>, %arg17: memref<1x96xf32, #tpu.memory_space<vmem>>, %arg18: memref<96x60xf32, #tpu.memory_space<vmem>>, %arg19: memref<1x60xf32, #tpu.memory_space<vmem>>, %arg20: memref<4x24xf32, #tpu.memory_space<vmem>>, %arg21: memref<1x24xf32, #tpu.memory_space<vmem>>, %arg22: memref<1x24xf32, #tpu.memory_space<vmem>>, %arg23: memref<1x24xf32, #tpu.memory_space<vmem>>, %arg24: memref<9x24x12xf32, #tpu.memory_space<vmem>>, %arg25: memref<1x12xf32, #tpu.memory_space<vmem>>, %arg26: memref<1x36xf32, #tpu.memory_space<vmem>>, %arg27: memref<1x36xf32, #tpu.memory_space<vmem>>, %arg28: memref<9x36x12xf32, #tpu.memory_space<vmem>>, %arg29: memref<1x12xf32, #tpu.memory_space<vmem>>, %arg30: memref<1x48xf32, #tpu.memory_space<vmem>>, %arg31: memref<1x48xf32, #tpu.memory_space<vmem>>, %arg32: memref<9x48x12xf32, #tpu.memory_space<vmem>>, %arg33: memref<1x12xf32, #tpu.memory_space<vmem>>, %arg34: memref<60x16xf32, #tpu.memory_space<vmem>>, %arg35: memref<1x16xf32, #tpu.memory_space<vmem>>, %arg36: memref<60x5xf32, #tpu.memory_space<vmem>>, %arg37: memref<60x5xf32, #tpu.memory_space<vmem>>, %arg38: memref<1x5xf32, #tpu.memory_space<vmem>>, %arg39: memref<9x64x1xf32, #tpu.memory_space<vmem>>, %arg40: memref<1x1x5xf32, #tpu.memory_space<vmem>>) attributes {dimension_semantics = [#tpu.dimension_semantics<parallel>], iteration_bounds = array<i64: 2>, scalar_prefetch = 0 : i64, scratch_operands = 0 : i64, tpu.core_type = #tpu.core_type<tc>, window_params = [{transform_indices = @transform_0, window_bounds = array<i64: 1, 64, 4>}, {pipeline_mode = #tpu.pipeline_mode<synchronous>, transform_indices = @transform_1, window_bounds = array<i64: 4, 24>}, {pipeline_mode = #tpu.pipeline_mode<synchronous>, transform_indices = @transform_2, window_bounds = array<i64: 1, 24>}, {pipeline_mode = #tpu.pipeline_mode<synchronous>, transform_indices = @transform_3, window_bounds = array<i64: 1, 24>}, {pipeline_mode = #tpu.pipeline_mode<synchronous>, transform_indices = @transform_4, window_bounds = array<i64: 1, 24>}, {pipeline_mode = #tpu.pipeline_mode<synchronous>, transform_indices = @transform_5, window_bounds = array<i64: 24, 24>}, {pipeline_mode = #tpu.pipeline_mode<synchronous>, transform_indices = @transform_6, window_bounds = array<i64: 1, 24>}, {pipeline_mode = #tpu.pipeline_mode<synchronous>, transform_indices = @transform_7, window_bounds = array<i64: 1, 48>}, {pipeline_mode = #tpu.pipeline_mode<synchronous>, transform_indices = @transform_8, window_bounds = array<i64: 1, 48>}, {pipeline_mode = #tpu.pipeline_mode<synchronous>, transform_indices = @transform_9, window_bounds = array<i64: 48, 24>}, {pipeline_mode = #tpu.pipeline_mode<synchronous>, transform_indices = @transform_10, window_bounds = array<i64: 1, 24>}, {pipeline_mode = #tpu.pipeline_mode<synchronous>, transform_indices = @transform_11, window_bounds = array<i64: 1, 72>}, {pipeline_mode = #tpu.pipeline_mode<synchronous>, transform_indices = @transform_12, window_bounds = array<i64: 1, 72>}, {pipeline_mode = #tpu.pipeline_mode<synchronous>, transform_indices = @transform_13, window_bounds = array<i64: 72, 24>}, {pipeline_mode = #tpu.pipeline_mode<synchronous>, transform_indices = @transform_14, window_bounds = array<i64: 1, 24>}, {pipeline_mode = #tpu.pipeline_mode<synchronous>, transform_indices = @transform_15, window_bounds = array<i64: 1, 96>}, {pipeline_mode = #tpu.pipeline_mode<synchronous>, transform_indices = @transform_16, window_bounds = array<i64: 1, 96>}, {pipeline_mode = #tpu.pipeline_mode<synchronous>, transform_indices = @transform_17, window_bounds = array<i64: 96, 60>}, {pipeline_mode = #tpu.pipeline_mode<synchronous>, transform_indices = @transform_18, window_bounds = array<i64: 1, 60>}, {pipeline_mode = #tpu.pipeline_mode<synchronous>, transform_indices = @transform_19, window_bounds = array<i64: 4, 24>}, {pipeline_mode = #tpu.pipeline_mode<synchronous>, transform_indices = @transform_20, window_bounds = array<i64: 1, 24>}, {pipeline_mode = #tpu.pipeline_mode<synchronous>, transform_indices = @transform_21, window_bounds = array<i64: 1, 24>}, {pipeline_mode = #tpu.pipeline_mode<synchronous>, transform_indices = @transform_22, window_bounds = array<i64: 1, 24>}, {pipeline_mode = #tpu.pipeline_mode<synchronous>, transform_indices = @transform_23, window_bounds = array<i64: 9, 24, 12>}, {pipeline_mode = #tpu.pipeline_mode<synchronous>, transform_indices = @transform_24, window_bounds = array<i64: 1, 12>}, {pipeline_mode = #tpu.pipeline_mode<synchronous>, transform_indices = @transform_25, window_bounds = array<i64: 1, 36>}, {pipeline_mode = #tpu.pipeline_mode<synchronous>, transform_indices = @transform_26, window_bounds = array<i64: 1, 36>}, {pipeline_mode = #tpu.pipeline_mode<synchronous>, transform_indices = @transform_27, window_bounds = array<i64: 9, 36, 12>}, {pipeline_mode = #tpu.pipeline_mode<synchronous>, transform_indices = @transform_28, window_bounds = array<i64: 1, 12>}, {pipeline_mode = #tpu.pipeline_mode<synchronous>, transform_indices = @transform_29, window_bounds = array<i64: 1, 48>}, {pipeline_mode = #tpu.pipeline_mode<synchronous>, transform_indices = @transform_30, window_bounds = array<i64: 1, 48>}, {pipeline_mode = #tpu.pipeline_mode<synchronous>, transform_indices = @transform_31, window_bounds = array<i64: 9, 48, 12>}, {pipeline_mode = #tpu.pipeline_mode<synchronous>, transform_indices = @transform_32, window_bounds = array<i64: 1, 12>}, {pipeline_mode = #tpu.pipeline_mode<synchronous>, transform_indices = @transform_33, window_bounds = array<i64: 60, 16>}, {pipeline_mode = #tpu.pipeline_mode<synchronous>, transform_indices = @transform_34, window_bounds = array<i64: 1, 16>}, {pipeline_mode = #tpu.pipeline_mode<synchronous>, transform_indices = @transform_35, window_bounds = array<i64: 60, 5>}, {pipeline_mode = #tpu.pipeline_mode<synchronous>, transform_indices = @transform_36, window_bounds = array<i64: 60, 5>}, {pipeline_mode = #tpu.pipeline_mode<synchronous>, transform_indices = @transform_37, window_bounds = array<i64: 1, 5>}, {pipeline_mode = #tpu.pipeline_mode<synchronous>, transform_indices = @transform_38, window_bounds = array<i64: 9, 64, 1>}, {transform_indices = @transform_39, window_bounds = array<i64: 1, 1, 5>}]} {
    %c0 = arith.constant 0 : index
    %c0_0 = arith.constant 0 : index
    %c0_1 = arith.constant 0 : index
    %0 = vector.load %arg1[%c0, %c0_0, %c0_1] : memref<1x64x4xf32, #tpu.memory_space<vmem>>, vector<1x64x4xf32>
    %1 = vector.shape_cast %0 : vector<1x64x4xf32> to vector<64x4xf32>
    %c0_2 = arith.constant 0 : index
    %c0_3 = arith.constant 0 : index
    %c0_4 = arith.constant 0 : index
    %2 = vector.load %arg39[%c0_2, %c0_3, %c0_4] : memref<9x64x1xf32, #tpu.memory_space<vmem>>, vector<9x64x1xf32>
    %c0_5 = arith.constant 0 : index
    %c0_6 = arith.constant 0 : index
    %3 = vector.load %arg2[%c0_5, %c0_6] : memref<4x24xf32, #tpu.memory_space<vmem>>, vector<4x24xf32>
    %cst = arith.constant dense<0.000000e+00> : vector<64x24xf32>
    %4 = tpu.matmul %1, %3, %cst {dimension_numbers = #tpu.dot_dimension_numbers<[1], [0], [0], [1], [0, 0, 1, 1], [], []>} : vector<64x4xf32>, vector<4x24xf32>, vector<64x24xf32> -> vector<64x24xf32>
    %c0_7 = arith.constant 0 : index
    %c0_8 = arith.constant 0 : index
    %5 = vector.load %arg3[%c0_7, %c0_8] : memref<1x24xf32, #tpu.memory_space<vmem>>, vector<1x24xf32>
    %6 = vector.broadcast %5 : vector<1x24xf32> to vector<64x24xf32>
    %7 = arith.addf %4, %6 : vector<64x24xf32>
    %c0_9 = arith.constant 0 : index
    %c0_10 = arith.constant 0 : index
    %8 = vector.load %arg4[%c0_9, %c0_10] : memref<1x24xf32, #tpu.memory_space<vmem>>, vector<1x24xf32>
    %9 = vector.broadcast %8 : vector<1x24xf32> to vector<64x24xf32>
    %10 = arith.mulf %7, %9 : vector<64x24xf32>
    %c0_11 = arith.constant 0 : index
    %c0_12 = arith.constant 0 : index
    %11 = vector.load %arg5[%c0_11, %c0_12] : memref<1x24xf32, #tpu.memory_space<vmem>>, vector<1x24xf32>
    %12 = vector.broadcast %11 : vector<1x24xf32> to vector<64x24xf32>
    %13 = arith.addf %10, %12 : vector<64x24xf32>
    %cst_13 = arith.constant 0.000000e+00 : f32
    %14 = vector.broadcast %cst_13 : f32 to vector<64x24xf32>
    %15 = arith.maximumf %13, %14 : vector<64x24xf32>
    %c0_14 = arith.constant 0 : index
    %c0_15 = arith.constant 0 : index
    %16 = vector.load %arg6[%c0_14, %c0_15] : memref<24x24xf32, #tpu.memory_space<vmem>>, vector<24x24xf32>
    %cst_16 = arith.constant dense<0.000000e+00> : vector<64x24xf32>
    %17 = tpu.matmul %15, %16, %cst_16 {dimension_numbers = #tpu.dot_dimension_numbers<[1], [0], [0], [1], [0, 0, 1, 1], [], []>} : vector<64x24xf32>, vector<24x24xf32>, vector<64x24xf32> -> vector<64x24xf32>
    %c0_17 = arith.constant 0 : index
    %c0_18 = arith.constant 0 : index
    %18 = vector.load %arg7[%c0_17, %c0_18] : memref<1x24xf32, #tpu.memory_space<vmem>>, vector<1x24xf32>
    %19 = vector.broadcast %18 : vector<1x24xf32> to vector<64x24xf32>
    %20 = arith.addf %17, %19 : vector<64x24xf32>
    %21 = tpu.concatenate %7, %20 in 1 : vector<64x24xf32>, vector<64x24xf32> -> vector<64x48xf32>
    %c0_19 = arith.constant 0 : index
    %c0_20 = arith.constant 0 : index
    %22 = vector.load %arg8[%c0_19, %c0_20] : memref<1x48xf32, #tpu.memory_space<vmem>>, vector<1x48xf32>
    %23 = vector.broadcast %22 : vector<1x48xf32> to vector<64x48xf32>
    %24 = arith.mulf %21, %23 : vector<64x48xf32>
    %c0_21 = arith.constant 0 : index
    %c0_22 = arith.constant 0 : index
    %25 = vector.load %arg9[%c0_21, %c0_22] : memref<1x48xf32, #tpu.memory_space<vmem>>, vector<1x48xf32>
    %26 = vector.broadcast %25 : vector<1x48xf32> to vector<64x48xf32>
    %27 = arith.addf %24, %26 : vector<64x48xf32>
    %cst_23 = arith.constant 0.000000e+00 : f32
    %28 = vector.broadcast %cst_23 : f32 to vector<64x48xf32>
    %29 = arith.maximumf %27, %28 : vector<64x48xf32>
    %c0_24 = arith.constant 0 : index
    %c0_25 = arith.constant 0 : index
    %30 = vector.load %arg10[%c0_24, %c0_25] : memref<48x24xf32, #tpu.memory_space<vmem>>, vector<48x24xf32>
    %cst_26 = arith.constant dense<0.000000e+00> : vector<64x24xf32>
    %31 = tpu.matmul %29, %30, %cst_26 {dimension_numbers = #tpu.dot_dimension_numbers<[1], [0], [0], [1], [0, 0, 1, 1], [], []>} : vector<64x48xf32>, vector<48x24xf32>, vector<64x24xf32> -> vector<64x24xf32>
    %c0_27 = arith.constant 0 : index
    %c0_28 = arith.constant 0 : index
    %32 = vector.load %arg11[%c0_27, %c0_28] : memref<1x24xf32, #tpu.memory_space<vmem>>, vector<1x24xf32>
    %33 = vector.broadcast %32 : vector<1x24xf32> to vector<64x24xf32>
    %34 = arith.addf %31, %33 : vector<64x24xf32>
    %35 = tpu.concatenate %7, %20, %34 in 1 : vector<64x24xf32>, vector<64x24xf32>, vector<64x24xf32> -> vector<64x72xf32>
    %c0_29 = arith.constant 0 : index
    %c0_30 = arith.constant 0 : index
    %36 = vector.load %arg12[%c0_29, %c0_30] : memref<1x72xf32, #tpu.memory_space<vmem>>, vector<1x72xf32>
    %37 = vector.broadcast %36 : vector<1x72xf32> to vector<64x72xf32>
    %38 = arith.mulf %35, %37 : vector<64x72xf32>
    %c0_31 = arith.constant 0 : index
    %c0_32 = arith.constant 0 : index
    %39 = vector.load %arg13[%c0_31, %c0_32] : memref<1x72xf32, #tpu.memory_space<vmem>>, vector<1x72xf32>
    %40 = vector.broadcast %39 : vector<1x72xf32> to vector<64x72xf32>
    %41 = arith.addf %38, %40 : vector<64x72xf32>
    %cst_33 = arith.constant 0.000000e+00 : f32
    %42 = vector.broadcast %cst_33 : f32 to vector<64x72xf32>
    %43 = arith.maximumf %41, %42 : vector<64x72xf32>
    %c0_34 = arith.constant 0 : index
    %c0_35 = arith.constant 0 : index
    %44 = vector.load %arg14[%c0_34, %c0_35] : memref<72x24xf32, #tpu.memory_space<vmem>>, vector<72x24xf32>
    %cst_36 = arith.constant dense<0.000000e+00> : vector<64x24xf32>
    %45 = tpu.matmul %43, %44, %cst_36 {dimension_numbers = #tpu.dot_dimension_numbers<[1], [0], [0], [1], [0, 0, 1, 1], [], []>} : vector<64x72xf32>, vector<72x24xf32>, vector<64x24xf32> -> vector<64x24xf32>
    %c0_37 = arith.constant 0 : index
    %c0_38 = arith.constant 0 : index
    %46 = vector.load %arg15[%c0_37, %c0_38] : memref<1x24xf32, #tpu.memory_space<vmem>>, vector<1x24xf32>
    %47 = vector.broadcast %46 : vector<1x24xf32> to vector<64x24xf32>
    %48 = arith.addf %45, %47 : vector<64x24xf32>
    %49 = tpu.concatenate %7, %20, %34, %48 in 1 : vector<64x24xf32>, vector<64x24xf32>, vector<64x24xf32>, vector<64x24xf32> -> vector<64x96xf32>
    %c0_39 = arith.constant 0 : index
    %c0_40 = arith.constant 0 : index
    %50 = vector.load %arg16[%c0_39, %c0_40] : memref<1x96xf32, #tpu.memory_space<vmem>>, vector<1x96xf32>
    %51 = vector.broadcast %50 : vector<1x96xf32> to vector<64x96xf32>
    %52 = arith.mulf %49, %51 : vector<64x96xf32>
    %c0_41 = arith.constant 0 : index
    %c0_42 = arith.constant 0 : index
    %53 = vector.load %arg17[%c0_41, %c0_42] : memref<1x96xf32, #tpu.memory_space<vmem>>, vector<1x96xf32>
    %54 = vector.broadcast %53 : vector<1x96xf32> to vector<64x96xf32>
    %55 = arith.addf %52, %54 : vector<64x96xf32>
    %cst_43 = arith.constant 0.000000e+00 : f32
    %56 = vector.broadcast %cst_43 : f32 to vector<64x96xf32>
    %57 = arith.maximumf %55, %56 : vector<64x96xf32>
    %c0_44 = arith.constant 0 : index
    %c0_45 = arith.constant 0 : index
    %58 = vector.load %arg18[%c0_44, %c0_45] : memref<96x60xf32, #tpu.memory_space<vmem>>, vector<96x60xf32>
    %cst_46 = arith.constant dense<0.000000e+00> : vector<64x60xf32>
    %59 = tpu.matmul %57, %58, %cst_46 {dimension_numbers = #tpu.dot_dimension_numbers<[1], [0], [0], [1], [0, 0, 1, 1], [], []>} : vector<64x96xf32>, vector<96x60xf32>, vector<64x60xf32> -> vector<64x60xf32>
    %c0_47 = arith.constant 0 : index
    %c0_48 = arith.constant 0 : index
    %60 = vector.load %arg19[%c0_47, %c0_48] : memref<1x60xf32, #tpu.memory_space<vmem>>, vector<1x60xf32>
    %61 = vector.broadcast %60 : vector<1x60xf32> to vector<64x60xf32>
    %62 = arith.addf %59, %61 : vector<64x60xf32>
    %cst_49 = arith.constant dense<0.000000e+00> : vector<60x60xf32>
    %63 = tpu.matmul %62, %62, %cst_49 {dimension_numbers = #tpu.dot_dimension_numbers<[0], [0], [1], [1], [0, 1, 1, 1], [], []>} : vector<64x60xf32>, vector<64x60xf32>, vector<60x60xf32> -> vector<60x60xf32>
    %cst_50 = arith.constant dense<0xFF800000> : vector<60xf32>
    %64 = vector.multi_reduction <maximumf>, %63, %cst_50 [1] : vector<60x60xf32> to vector<60xf32>
    %65 = vector.shape_cast %64 : vector<60xf32> to vector<60x1xf32>
    %66 = vector.broadcast %65 : vector<60x1xf32> to vector<60x60xf32>
    %67 = arith.subf %66, %63 : vector<60x60xf32>
    %cst_51 = arith.constant dense<0xFF800000> : vector<60xf32>
    %68 = vector.multi_reduction <maximumf>, %67, %cst_51 [1] : vector<60x60xf32> to vector<60xf32>
    %69 = vector.shape_cast %68 : vector<60xf32> to vector<60x1xf32>
    %70 = vector.broadcast %69 : vector<60x1xf32> to vector<60x60xf32>
    %71 = arith.subf %67, %70 : vector<60x60xf32>
    %72 = math.exp %71 : vector<60x60xf32>
    %cst_52 = arith.constant dense<0.000000e+00> : vector<60xf32>
    %73 = vector.multi_reduction <add>, %72, %cst_52 [1] : vector<60x60xf32> to vector<60xf32>
    %74 = vector.shape_cast %73 : vector<60xf32> to vector<60x1xf32>
    %75 = tpu.reciprocal %74 {approx = true} : vector<60x1xf32> -> vector<60x1xf32>
    %76 = vector.broadcast %75 : vector<60x1xf32> to vector<60x60xf32>
    %77 = arith.mulf %72, %76 : vector<60x60xf32>
    %cst_53 = arith.constant dense<0.000000e+00> : vector<64x60xf32>
    %78 = tpu.matmul %62, %77, %cst_53 {dimension_numbers = #tpu.dot_dimension_numbers<[1], [1], [0], [0], [0, 0, 1, 0], [], []>} : vector<64x60xf32>, vector<60x60xf32>, vector<64x60xf32> -> vector<64x60xf32>
    %cst_54 = arith.constant 5.000000e-01 : f32
    %79 = vector.broadcast %cst_54 : f32 to vector<64x60xf32>
    %80 = arith.mulf %79, %78 : vector<64x60xf32>
    %81 = arith.addf %80, %62 : vector<64x60xf32>
    %c0_55 = arith.constant 0 : index
    %c0_56 = arith.constant 0 : index
    %82 = vector.load %arg20[%c0_55, %c0_56] : memref<4x24xf32, #tpu.memory_space<vmem>>, vector<4x24xf32>
    %cst_57 = arith.constant dense<0.000000e+00> : vector<64x24xf32>
    %83 = tpu.matmul %1, %82, %cst_57 {dimension_numbers = #tpu.dot_dimension_numbers<[1], [0], [0], [1], [0, 0, 1, 1], [], []>} : vector<64x4xf32>, vector<4x24xf32>, vector<64x24xf32> -> vector<64x24xf32>
    %c0_58 = arith.constant 0 : index
    %c0_59 = arith.constant 0 : index
    %84 = vector.load %arg21[%c0_58, %c0_59] : memref<1x24xf32, #tpu.memory_space<vmem>>, vector<1x24xf32>
    %85 = vector.broadcast %84 : vector<1x24xf32> to vector<64x24xf32>
    %86 = arith.addf %83, %85 : vector<64x24xf32>
    %c0_60 = arith.constant 0 : index
    %c0_61 = arith.constant 0 : index
    %87 = vector.load %arg22[%c0_60, %c0_61] : memref<1x24xf32, #tpu.memory_space<vmem>>, vector<1x24xf32>
    %88 = vector.broadcast %87 : vector<1x24xf32> to vector<64x24xf32>
    %89 = arith.mulf %86, %88 : vector<64x24xf32>
    %c0_62 = arith.constant 0 : index
    %c0_63 = arith.constant 0 : index
    %90 = vector.load %arg23[%c0_62, %c0_63] : memref<1x24xf32, #tpu.memory_space<vmem>>, vector<1x24xf32>
    %91 = vector.broadcast %90 : vector<1x24xf32> to vector<64x24xf32>
    %92 = arith.addf %89, %91 : vector<64x24xf32>
    %cst_64 = arith.constant 0.000000e+00 : f32
    %93 = vector.broadcast %cst_64 : f32 to vector<64x24xf32>
    %94 = arith.maximumf %92, %93 : vector<64x24xf32>
    %c0_65 = arith.constant 0 : index
    %c0_66 = arith.constant 0 : index
    %c0_67 = arith.constant 0 : index
    %95 = vector.load %arg24[%c0_65, %c0_66, %c0_67] : memref<9x24x12xf32, #tpu.memory_space<vmem>>, vector<9x24x12xf32>
    %cst_68 = arith.constant 0.000000e+00 : f32
    %96 = vector.broadcast %cst_68 : f32 to vector<64x12xf32>
    %c0_69 = arith.constant 0 : index
    %c0_70 = arith.constant 0 : index
    %97 = vector.load %arg25[%c0_69, %c0_70] : memref<1x12xf32, #tpu.memory_space<vmem>>, vector<1x12xf32>
    %98 = vector.broadcast %97 : vector<1x12xf32> to vector<64x12xf32>
    %99 = arith.addf %96, %98 : vector<64x12xf32>
    %c9_i32 = arith.constant 9 : i32
    %100 = tpu.dynamic_rotate %94 by %c9_i32 dim 0 : vector<64x24xf32>, i32 -> vector<64x24xf32>
    %101 = vector.extract_strided_slice %2 {offsets = [0, 0, 0], sizes = [1, 64, 1], strides = [1, 1, 1]} : vector<9x64x1xf32> to vector<1x64x1xf32>
    %102 = vector.shape_cast %101 : vector<1x64x1xf32> to vector<64x1xf32>
    %103 = vector.broadcast %102 : vector<64x1xf32> to vector<64x24xf32>
    %104 = arith.mulf %100, %103 : vector<64x24xf32>
    %105 = vector.extract_strided_slice %95 {offsets = [0, 0, 0], sizes = [1, 24, 12], strides = [1, 1, 1]} : vector<9x24x12xf32> to vector<1x24x12xf32>
    %106 = vector.shape_cast %105 : vector<1x24x12xf32> to vector<24x12xf32>
    %cst_71 = arith.constant dense<0.000000e+00> : vector<64x12xf32>
    %107 = tpu.matmul %104, %106, %cst_71 {dimension_numbers = #tpu.dot_dimension_numbers<[1], [0], [0], [1], [0, 0, 1, 1], [], []>} : vector<64x24xf32>, vector<24x12xf32>, vector<64x12xf32> -> vector<64x12xf32>
    %108 = arith.addf %99, %107 : vector<64x12xf32>
    %c8_i32 = arith.constant 8 : i32
    %109 = tpu.dynamic_rotate %94 by %c8_i32 dim 0 : vector<64x24xf32>, i32 -> vector<64x24xf32>
    %110 = vector.extract_strided_slice %2 {offsets = [1, 0, 0], sizes = [1, 64, 1], strides = [1, 1, 1]} : vector<9x64x1xf32> to vector<1x64x1xf32>
    %111 = vector.shape_cast %110 : vector<1x64x1xf32> to vector<64x1xf32>
    %112 = vector.broadcast %111 : vector<64x1xf32> to vector<64x24xf32>
    %113 = arith.mulf %109, %112 : vector<64x24xf32>
    %114 = vector.extract_strided_slice %95 {offsets = [1, 0, 0], sizes = [1, 24, 12], strides = [1, 1, 1]} : vector<9x24x12xf32> to vector<1x24x12xf32>
    %115 = vector.shape_cast %114 : vector<1x24x12xf32> to vector<24x12xf32>
    %cst_72 = arith.constant dense<0.000000e+00> : vector<64x12xf32>
    %116 = tpu.matmul %113, %115, %cst_72 {dimension_numbers = #tpu.dot_dimension_numbers<[1], [0], [0], [1], [0, 0, 1, 1], [], []>} : vector<64x24xf32>, vector<24x12xf32>, vector<64x12xf32> -> vector<64x12xf32>
    %117 = arith.addf %108, %116 : vector<64x12xf32>
    %c7_i32 = arith.constant 7 : i32
    %118 = tpu.dynamic_rotate %94 by %c7_i32 dim 0 : vector<64x24xf32>, i32 -> vector<64x24xf32>
    %119 = vector.extract_strided_slice %2 {offsets = [2, 0, 0], sizes = [1, 64, 1], strides = [1, 1, 1]} : vector<9x64x1xf32> to vector<1x64x1xf32>
    %120 = vector.shape_cast %119 : vector<1x64x1xf32> to vector<64x1xf32>
    %121 = vector.broadcast %120 : vector<64x1xf32> to vector<64x24xf32>
    %122 = arith.mulf %118, %121 : vector<64x24xf32>
    %123 = vector.extract_strided_slice %95 {offsets = [2, 0, 0], sizes = [1, 24, 12], strides = [1, 1, 1]} : vector<9x24x12xf32> to vector<1x24x12xf32>
    %124 = vector.shape_cast %123 : vector<1x24x12xf32> to vector<24x12xf32>
    %cst_73 = arith.constant dense<0.000000e+00> : vector<64x12xf32>
    %125 = tpu.matmul %122, %124, %cst_73 {dimension_numbers = #tpu.dot_dimension_numbers<[1], [0], [0], [1], [0, 0, 1, 1], [], []>} : vector<64x24xf32>, vector<24x12xf32>, vector<64x12xf32> -> vector<64x12xf32>
    %126 = arith.addf %117, %125 : vector<64x12xf32>
    %c1_i32 = arith.constant 1 : i32
    %127 = tpu.dynamic_rotate %94 by %c1_i32 dim 0 : vector<64x24xf32>, i32 -> vector<64x24xf32>
    %128 = vector.extract_strided_slice %2 {offsets = [3, 0, 0], sizes = [1, 64, 1], strides = [1, 1, 1]} : vector<9x64x1xf32> to vector<1x64x1xf32>
    %129 = vector.shape_cast %128 : vector<1x64x1xf32> to vector<64x1xf32>
    %130 = vector.broadcast %129 : vector<64x1xf32> to vector<64x24xf32>
    %131 = arith.mulf %127, %130 : vector<64x24xf32>
    %132 = vector.extract_strided_slice %95 {offsets = [3, 0, 0], sizes = [1, 24, 12], strides = [1, 1, 1]} : vector<9x24x12xf32> to vector<1x24x12xf32>
    %133 = vector.shape_cast %132 : vector<1x24x12xf32> to vector<24x12xf32>
    %cst_74 = arith.constant dense<0.000000e+00> : vector<64x12xf32>
    %134 = tpu.matmul %131, %133, %cst_74 {dimension_numbers = #tpu.dot_dimension_numbers<[1], [0], [0], [1], [0, 0, 1, 1], [], []>} : vector<64x24xf32>, vector<24x12xf32>, vector<64x12xf32> -> vector<64x12xf32>
    %135 = arith.addf %126, %134 : vector<64x12xf32>
    %136 = vector.extract_strided_slice %2 {offsets = [4, 0, 0], sizes = [1, 64, 1], strides = [1, 1, 1]} : vector<9x64x1xf32> to vector<1x64x1xf32>
    %137 = vector.shape_cast %136 : vector<1x64x1xf32> to vector<64x1xf32>
    %138 = vector.broadcast %137 : vector<64x1xf32> to vector<64x24xf32>
    %139 = arith.mulf %94, %138 : vector<64x24xf32>
    %140 = vector.extract_strided_slice %95 {offsets = [4, 0, 0], sizes = [1, 24, 12], strides = [1, 1, 1]} : vector<9x24x12xf32> to vector<1x24x12xf32>
    %141 = vector.shape_cast %140 : vector<1x24x12xf32> to vector<24x12xf32>
    %cst_75 = arith.constant dense<0.000000e+00> : vector<64x12xf32>
    %142 = tpu.matmul %139, %141, %cst_75 {dimension_numbers = #tpu.dot_dimension_numbers<[1], [0], [0], [1], [0, 0, 1, 1], [], []>} : vector<64x24xf32>, vector<24x12xf32>, vector<64x12xf32> -> vector<64x12xf32>
    %143 = arith.addf %135, %142 : vector<64x12xf32>
    %c63_i32 = arith.constant 63 : i32
    %144 = tpu.dynamic_rotate %94 by %c63_i32 dim 0 : vector<64x24xf32>, i32 -> vector<64x24xf32>
    %145 = vector.extract_strided_slice %2 {offsets = [5, 0, 0], sizes = [1, 64, 1], strides = [1, 1, 1]} : vector<9x64x1xf32> to vector<1x64x1xf32>
    %146 = vector.shape_cast %145 : vector<1x64x1xf32> to vector<64x1xf32>
    %147 = vector.broadcast %146 : vector<64x1xf32> to vector<64x24xf32>
    %148 = arith.mulf %144, %147 : vector<64x24xf32>
    %149 = vector.extract_strided_slice %95 {offsets = [5, 0, 0], sizes = [1, 24, 12], strides = [1, 1, 1]} : vector<9x24x12xf32> to vector<1x24x12xf32>
    %150 = vector.shape_cast %149 : vector<1x24x12xf32> to vector<24x12xf32>
    %cst_76 = arith.constant dense<0.000000e+00> : vector<64x12xf32>
    %151 = tpu.matmul %148, %150, %cst_76 {dimension_numbers = #tpu.dot_dimension_numbers<[1], [0], [0], [1], [0, 0, 1, 1], [], []>} : vector<64x24xf32>, vector<24x12xf32>, vector<64x12xf32> -> vector<64x12xf32>
    %152 = arith.addf %143, %151 : vector<64x12xf32>
    %c57_i32 = arith.constant 57 : i32
    %153 = tpu.dynamic_rotate %94 by %c57_i32 dim 0 : vector<64x24xf32>, i32 -> vector<64x24xf32>
    %154 = vector.extract_strided_slice %2 {offsets = [6, 0, 0], sizes = [1, 64, 1], strides = [1, 1, 1]} : vector<9x64x1xf32> to vector<1x64x1xf32>
    %155 = vector.shape_cast %154 : vector<1x64x1xf32> to vector<64x1xf32>
    %156 = vector.broadcast %155 : vector<64x1xf32> to vector<64x24xf32>
    %157 = arith.mulf %153, %156 : vector<64x24xf32>
    %158 = vector.extract_strided_slice %95 {offsets = [6, 0, 0], sizes = [1, 24, 12], strides = [1, 1, 1]} : vector<9x24x12xf32> to vector<1x24x12xf32>
    %159 = vector.shape_cast %158 : vector<1x24x12xf32> to vector<24x12xf32>
    %cst_77 = arith.constant dense<0.000000e+00> : vector<64x12xf32>
    %160 = tpu.matmul %157, %159, %cst_77 {dimension_numbers = #tpu.dot_dimension_numbers<[1], [0], [0], [1], [0, 0, 1, 1], [], []>} : vector<64x24xf32>, vector<24x12xf32>, vector<64x12xf32> -> vector<64x12xf32>
    %161 = arith.addf %152, %160 : vector<64x12xf32>
    %c56_i32 = arith.constant 56 : i32
    %162 = tpu.dynamic_rotate %94 by %c56_i32 dim 0 : vector<64x24xf32>, i32 -> vector<64x24xf32>
    %163 = vector.extract_strided_slice %2 {offsets = [7, 0, 0], sizes = [1, 64, 1], strides = [1, 1, 1]} : vector<9x64x1xf32> to vector<1x64x1xf32>
    %164 = vector.shape_cast %163 : vector<1x64x1xf32> to vector<64x1xf32>
    %165 = vector.broadcast %164 : vector<64x1xf32> to vector<64x24xf32>
    %166 = arith.mulf %162, %165 : vector<64x24xf32>
    %167 = vector.extract_strided_slice %95 {offsets = [7, 0, 0], sizes = [1, 24, 12], strides = [1, 1, 1]} : vector<9x24x12xf32> to vector<1x24x12xf32>
    %168 = vector.shape_cast %167 : vector<1x24x12xf32> to vector<24x12xf32>
    %cst_78 = arith.constant dense<0.000000e+00> : vector<64x12xf32>
    %169 = tpu.matmul %166, %168, %cst_78 {dimension_numbers = #tpu.dot_dimension_numbers<[1], [0], [0], [1], [0, 0, 1, 1], [], []>} : vector<64x24xf32>, vector<24x12xf32>, vector<64x12xf32> -> vector<64x12xf32>
    %170 = arith.addf %161, %169 : vector<64x12xf32>
    %c55_i32 = arith.constant 55 : i32
    %171 = tpu.dynamic_rotate %94 by %c55_i32 dim 0 : vector<64x24xf32>, i32 -> vector<64x24xf32>
    %172 = vector.extract_strided_slice %2 {offsets = [8, 0, 0], sizes = [1, 64, 1], strides = [1, 1, 1]} : vector<9x64x1xf32> to vector<1x64x1xf32>
    %173 = vector.shape_cast %172 : vector<1x64x1xf32> to vector<64x1xf32>
    %174 = vector.broadcast %173 : vector<64x1xf32> to vector<64x24xf32>
    %175 = arith.mulf %171, %174 : vector<64x24xf32>
    %176 = vector.extract_strided_slice %95 {offsets = [8, 0, 0], sizes = [1, 24, 12], strides = [1, 1, 1]} : vector<9x24x12xf32> to vector<1x24x12xf32>
    %177 = vector.shape_cast %176 : vector<1x24x12xf32> to vector<24x12xf32>
    %cst_79 = arith.constant dense<0.000000e+00> : vector<64x12xf32>
    %178 = tpu.matmul %175, %177, %cst_79 {dimension_numbers = #tpu.dot_dimension_numbers<[1], [0], [0], [1], [0, 0, 1, 1], [], []>} : vector<64x24xf32>, vector<24x12xf32>, vector<64x12xf32> -> vector<64x12xf32>
    %179 = arith.addf %170, %178 : vector<64x12xf32>
    %180 = tpu.concatenate %86, %179 in 1 : vector<64x24xf32>, vector<64x12xf32> -> vector<64x36xf32>
    %c0_80 = arith.constant 0 : index
    %c0_81 = arith.constant 0 : index
    %181 = vector.load %arg26[%c0_80, %c0_81] : memref<1x36xf32, #tpu.memory_space<vmem>>, vector<1x36xf32>
    %182 = vector.broadcast %181 : vector<1x36xf32> to vector<64x36xf32>
    %183 = arith.mulf %180, %182 : vector<64x36xf32>
    %c0_82 = arith.constant 0 : index
    %c0_83 = arith.constant 0 : index
    %184 = vector.load %arg27[%c0_82, %c0_83] : memref<1x36xf32, #tpu.memory_space<vmem>>, vector<1x36xf32>
    %185 = vector.broadcast %184 : vector<1x36xf32> to vector<64x36xf32>
    %186 = arith.addf %183, %185 : vector<64x36xf32>
    %cst_84 = arith.constant 0.000000e+00 : f32
    %187 = vector.broadcast %cst_84 : f32 to vector<64x36xf32>
    %188 = arith.maximumf %186, %187 : vector<64x36xf32>
    %c0_85 = arith.constant 0 : index
    %c0_86 = arith.constant 0 : index
    %c0_87 = arith.constant 0 : index
    %189 = vector.load %arg28[%c0_85, %c0_86, %c0_87] : memref<9x36x12xf32, #tpu.memory_space<vmem>>, vector<9x36x12xf32>
    %cst_88 = arith.constant 0.000000e+00 : f32
    %190 = vector.broadcast %cst_88 : f32 to vector<64x12xf32>
    %c0_89 = arith.constant 0 : index
    %c0_90 = arith.constant 0 : index
    %191 = vector.load %arg29[%c0_89, %c0_90] : memref<1x12xf32, #tpu.memory_space<vmem>>, vector<1x12xf32>
    %192 = vector.broadcast %191 : vector<1x12xf32> to vector<64x12xf32>
    %193 = arith.addf %190, %192 : vector<64x12xf32>
    %c9_i32_91 = arith.constant 9 : i32
    %194 = tpu.dynamic_rotate %188 by %c9_i32_91 dim 0 : vector<64x36xf32>, i32 -> vector<64x36xf32>
    %195 = vector.extract_strided_slice %2 {offsets = [0, 0, 0], sizes = [1, 64, 1], strides = [1, 1, 1]} : vector<9x64x1xf32> to vector<1x64x1xf32>
    %196 = vector.shape_cast %195 : vector<1x64x1xf32> to vector<64x1xf32>
    %197 = vector.broadcast %196 : vector<64x1xf32> to vector<64x36xf32>
    %198 = arith.mulf %194, %197 : vector<64x36xf32>
    %199 = vector.extract_strided_slice %189 {offsets = [0, 0, 0], sizes = [1, 36, 12], strides = [1, 1, 1]} : vector<9x36x12xf32> to vector<1x36x12xf32>
    %200 = vector.shape_cast %199 : vector<1x36x12xf32> to vector<36x12xf32>
    %cst_92 = arith.constant dense<0.000000e+00> : vector<64x12xf32>
    %201 = tpu.matmul %198, %200, %cst_92 {dimension_numbers = #tpu.dot_dimension_numbers<[1], [0], [0], [1], [0, 0, 1, 1], [], []>} : vector<64x36xf32>, vector<36x12xf32>, vector<64x12xf32> -> vector<64x12xf32>
    %202 = arith.addf %193, %201 : vector<64x12xf32>
    %c8_i32_93 = arith.constant 8 : i32
    %203 = tpu.dynamic_rotate %188 by %c8_i32_93 dim 0 : vector<64x36xf32>, i32 -> vector<64x36xf32>
    %204 = vector.extract_strided_slice %2 {offsets = [1, 0, 0], sizes = [1, 64, 1], strides = [1, 1, 1]} : vector<9x64x1xf32> to vector<1x64x1xf32>
    %205 = vector.shape_cast %204 : vector<1x64x1xf32> to vector<64x1xf32>
    %206 = vector.broadcast %205 : vector<64x1xf32> to vector<64x36xf32>
    %207 = arith.mulf %203, %206 : vector<64x36xf32>
    %208 = vector.extract_strided_slice %189 {offsets = [1, 0, 0], sizes = [1, 36, 12], strides = [1, 1, 1]} : vector<9x36x12xf32> to vector<1x36x12xf32>
    %209 = vector.shape_cast %208 : vector<1x36x12xf32> to vector<36x12xf32>
    %cst_94 = arith.constant dense<0.000000e+00> : vector<64x12xf32>
    %210 = tpu.matmul %207, %209, %cst_94 {dimension_numbers = #tpu.dot_dimension_numbers<[1], [0], [0], [1], [0, 0, 1, 1], [], []>} : vector<64x36xf32>, vector<36x12xf32>, vector<64x12xf32> -> vector<64x12xf32>
    %211 = arith.addf %202, %210 : vector<64x12xf32>
    %c7_i32_95 = arith.constant 7 : i32
    %212 = tpu.dynamic_rotate %188 by %c7_i32_95 dim 0 : vector<64x36xf32>, i32 -> vector<64x36xf32>
    %213 = vector.extract_strided_slice %2 {offsets = [2, 0, 0], sizes = [1, 64, 1], strides = [1, 1, 1]} : vector<9x64x1xf32> to vector<1x64x1xf32>
    %214 = vector.shape_cast %213 : vector<1x64x1xf32> to vector<64x1xf32>
    %215 = vector.broadcast %214 : vector<64x1xf32> to vector<64x36xf32>
    %216 = arith.mulf %212, %215 : vector<64x36xf32>
    %217 = vector.extract_strided_slice %189 {offsets = [2, 0, 0], sizes = [1, 36, 12], strides = [1, 1, 1]} : vector<9x36x12xf32> to vector<1x36x12xf32>
    %218 = vector.shape_cast %217 : vector<1x36x12xf32> to vector<36x12xf32>
    %cst_96 = arith.constant dense<0.000000e+00> : vector<64x12xf32>
    %219 = tpu.matmul %216, %218, %cst_96 {dimension_numbers = #tpu.dot_dimension_numbers<[1], [0], [0], [1], [0, 0, 1, 1], [], []>} : vector<64x36xf32>, vector<36x12xf32>, vector<64x12xf32> -> vector<64x12xf32>
    %220 = arith.addf %211, %219 : vector<64x12xf32>
    %c1_i32_97 = arith.constant 1 : i32
    %221 = tpu.dynamic_rotate %188 by %c1_i32_97 dim 0 : vector<64x36xf32>, i32 -> vector<64x36xf32>
    %222 = vector.extract_strided_slice %2 {offsets = [3, 0, 0], sizes = [1, 64, 1], strides = [1, 1, 1]} : vector<9x64x1xf32> to vector<1x64x1xf32>
    %223 = vector.shape_cast %222 : vector<1x64x1xf32> to vector<64x1xf32>
    %224 = vector.broadcast %223 : vector<64x1xf32> to vector<64x36xf32>
    %225 = arith.mulf %221, %224 : vector<64x36xf32>
    %226 = vector.extract_strided_slice %189 {offsets = [3, 0, 0], sizes = [1, 36, 12], strides = [1, 1, 1]} : vector<9x36x12xf32> to vector<1x36x12xf32>
    %227 = vector.shape_cast %226 : vector<1x36x12xf32> to vector<36x12xf32>
    %cst_98 = arith.constant dense<0.000000e+00> : vector<64x12xf32>
    %228 = tpu.matmul %225, %227, %cst_98 {dimension_numbers = #tpu.dot_dimension_numbers<[1], [0], [0], [1], [0, 0, 1, 1], [], []>} : vector<64x36xf32>, vector<36x12xf32>, vector<64x12xf32> -> vector<64x12xf32>
    %229 = arith.addf %220, %228 : vector<64x12xf32>
    %230 = vector.extract_strided_slice %2 {offsets = [4, 0, 0], sizes = [1, 64, 1], strides = [1, 1, 1]} : vector<9x64x1xf32> to vector<1x64x1xf32>
    %231 = vector.shape_cast %230 : vector<1x64x1xf32> to vector<64x1xf32>
    %232 = vector.broadcast %231 : vector<64x1xf32> to vector<64x36xf32>
    %233 = arith.mulf %188, %232 : vector<64x36xf32>
    %234 = vector.extract_strided_slice %189 {offsets = [4, 0, 0], sizes = [1, 36, 12], strides = [1, 1, 1]} : vector<9x36x12xf32> to vector<1x36x12xf32>
    %235 = vector.shape_cast %234 : vector<1x36x12xf32> to vector<36x12xf32>
    %cst_99 = arith.constant dense<0.000000e+00> : vector<64x12xf32>
    %236 = tpu.matmul %233, %235, %cst_99 {dimension_numbers = #tpu.dot_dimension_numbers<[1], [0], [0], [1], [0, 0, 1, 1], [], []>} : vector<64x36xf32>, vector<36x12xf32>, vector<64x12xf32> -> vector<64x12xf32>
    %237 = arith.addf %229, %236 : vector<64x12xf32>
    %c63_i32_100 = arith.constant 63 : i32
    %238 = tpu.dynamic_rotate %188 by %c63_i32_100 dim 0 : vector<64x36xf32>, i32 -> vector<64x36xf32>
    %239 = vector.extract_strided_slice %2 {offsets = [5, 0, 0], sizes = [1, 64, 1], strides = [1, 1, 1]} : vector<9x64x1xf32> to vector<1x64x1xf32>
    %240 = vector.shape_cast %239 : vector<1x64x1xf32> to vector<64x1xf32>
    %241 = vector.broadcast %240 : vector<64x1xf32> to vector<64x36xf32>
    %242 = arith.mulf %238, %241 : vector<64x36xf32>
    %243 = vector.extract_strided_slice %189 {offsets = [5, 0, 0], sizes = [1, 36, 12], strides = [1, 1, 1]} : vector<9x36x12xf32> to vector<1x36x12xf32>
    %244 = vector.shape_cast %243 : vector<1x36x12xf32> to vector<36x12xf32>
    %cst_101 = arith.constant dense<0.000000e+00> : vector<64x12xf32>
    %245 = tpu.matmul %242, %244, %cst_101 {dimension_numbers = #tpu.dot_dimension_numbers<[1], [0], [0], [1], [0, 0, 1, 1], [], []>} : vector<64x36xf32>, vector<36x12xf32>, vector<64x12xf32> -> vector<64x12xf32>
    %246 = arith.addf %237, %245 : vector<64x12xf32>
    %c57_i32_102 = arith.constant 57 : i32
    %247 = tpu.dynamic_rotate %188 by %c57_i32_102 dim 0 : vector<64x36xf32>, i32 -> vector<64x36xf32>
    %248 = vector.extract_strided_slice %2 {offsets = [6, 0, 0], sizes = [1, 64, 1], strides = [1, 1, 1]} : vector<9x64x1xf32> to vector<1x64x1xf32>
    %249 = vector.shape_cast %248 : vector<1x64x1xf32> to vector<64x1xf32>
    %250 = vector.broadcast %249 : vector<64x1xf32> to vector<64x36xf32>
    %251 = arith.mulf %247, %250 : vector<64x36xf32>
    %252 = vector.extract_strided_slice %189 {offsets = [6, 0, 0], sizes = [1, 36, 12], strides = [1, 1, 1]} : vector<9x36x12xf32> to vector<1x36x12xf32>
    %253 = vector.shape_cast %252 : vector<1x36x12xf32> to vector<36x12xf32>
    %cst_103 = arith.constant dense<0.000000e+00> : vector<64x12xf32>
    %254 = tpu.matmul %251, %253, %cst_103 {dimension_numbers = #tpu.dot_dimension_numbers<[1], [0], [0], [1], [0, 0, 1, 1], [], []>} : vector<64x36xf32>, vector<36x12xf32>, vector<64x12xf32> -> vector<64x12xf32>
    %255 = arith.addf %246, %254 : vector<64x12xf32>
    %c56_i32_104 = arith.constant 56 : i32
    %256 = tpu.dynamic_rotate %188 by %c56_i32_104 dim 0 : vector<64x36xf32>, i32 -> vector<64x36xf32>
    %257 = vector.extract_strided_slice %2 {offsets = [7, 0, 0], sizes = [1, 64, 1], strides = [1, 1, 1]} : vector<9x64x1xf32> to vector<1x64x1xf32>
    %258 = vector.shape_cast %257 : vector<1x64x1xf32> to vector<64x1xf32>
    %259 = vector.broadcast %258 : vector<64x1xf32> to vector<64x36xf32>
    %260 = arith.mulf %256, %259 : vector<64x36xf32>
    %261 = vector.extract_strided_slice %189 {offsets = [7, 0, 0], sizes = [1, 36, 12], strides = [1, 1, 1]} : vector<9x36x12xf32> to vector<1x36x12xf32>
    %262 = vector.shape_cast %261 : vector<1x36x12xf32> to vector<36x12xf32>
    %cst_105 = arith.constant dense<0.000000e+00> : vector<64x12xf32>
    %263 = tpu.matmul %260, %262, %cst_105 {dimension_numbers = #tpu.dot_dimension_numbers<[1], [0], [0], [1], [0, 0, 1, 1], [], []>} : vector<64x36xf32>, vector<36x12xf32>, vector<64x12xf32> -> vector<64x12xf32>
    %264 = arith.addf %255, %263 : vector<64x12xf32>
    %c55_i32_106 = arith.constant 55 : i32
    %265 = tpu.dynamic_rotate %188 by %c55_i32_106 dim 0 : vector<64x36xf32>, i32 -> vector<64x36xf32>
    %266 = vector.extract_strided_slice %2 {offsets = [8, 0, 0], sizes = [1, 64, 1], strides = [1, 1, 1]} : vector<9x64x1xf32> to vector<1x64x1xf32>
    %267 = vector.shape_cast %266 : vector<1x64x1xf32> to vector<64x1xf32>
    %268 = vector.broadcast %267 : vector<64x1xf32> to vector<64x36xf32>
    %269 = arith.mulf %265, %268 : vector<64x36xf32>
    %270 = vector.extract_strided_slice %189 {offsets = [8, 0, 0], sizes = [1, 36, 12], strides = [1, 1, 1]} : vector<9x36x12xf32> to vector<1x36x12xf32>
    %271 = vector.shape_cast %270 : vector<1x36x12xf32> to vector<36x12xf32>
    %cst_107 = arith.constant dense<0.000000e+00> : vector<64x12xf32>
    %272 = tpu.matmul %269, %271, %cst_107 {dimension_numbers = #tpu.dot_dimension_numbers<[1], [0], [0], [1], [0, 0, 1, 1], [], []>} : vector<64x36xf32>, vector<36x12xf32>, vector<64x12xf32> -> vector<64x12xf32>
    %273 = arith.addf %264, %272 : vector<64x12xf32>
    %274 = tpu.concatenate %86, %179, %273 in 1 : vector<64x24xf32>, vector<64x12xf32>, vector<64x12xf32> -> vector<64x48xf32>
    %c0_108 = arith.constant 0 : index
    %c0_109 = arith.constant 0 : index
    %275 = vector.load %arg30[%c0_108, %c0_109] : memref<1x48xf32, #tpu.memory_space<vmem>>, vector<1x48xf32>
    %276 = vector.broadcast %275 : vector<1x48xf32> to vector<64x48xf32>
    %277 = arith.mulf %274, %276 : vector<64x48xf32>
    %c0_110 = arith.constant 0 : index
    %c0_111 = arith.constant 0 : index
    %278 = vector.load %arg31[%c0_110, %c0_111] : memref<1x48xf32, #tpu.memory_space<vmem>>, vector<1x48xf32>
    %279 = vector.broadcast %278 : vector<1x48xf32> to vector<64x48xf32>
    %280 = arith.addf %277, %279 : vector<64x48xf32>
    %cst_112 = arith.constant 0.000000e+00 : f32
    %281 = vector.broadcast %cst_112 : f32 to vector<64x48xf32>
    %282 = arith.maximumf %280, %281 : vector<64x48xf32>
    %c0_113 = arith.constant 0 : index
    %c0_114 = arith.constant 0 : index
    %c0_115 = arith.constant 0 : index
    %283 = vector.load %arg32[%c0_113, %c0_114, %c0_115] : memref<9x48x12xf32, #tpu.memory_space<vmem>>, vector<9x48x12xf32>
    %cst_116 = arith.constant 0.000000e+00 : f32
    %284 = vector.broadcast %cst_116 : f32 to vector<64x12xf32>
    %c0_117 = arith.constant 0 : index
    %c0_118 = arith.constant 0 : index
    %285 = vector.load %arg33[%c0_117, %c0_118] : memref<1x12xf32, #tpu.memory_space<vmem>>, vector<1x12xf32>
    %286 = vector.broadcast %285 : vector<1x12xf32> to vector<64x12xf32>
    %287 = arith.addf %284, %286 : vector<64x12xf32>
    %c9_i32_119 = arith.constant 9 : i32
    %288 = tpu.dynamic_rotate %282 by %c9_i32_119 dim 0 : vector<64x48xf32>, i32 -> vector<64x48xf32>
    %289 = vector.extract_strided_slice %2 {offsets = [0, 0, 0], sizes = [1, 64, 1], strides = [1, 1, 1]} : vector<9x64x1xf32> to vector<1x64x1xf32>
    %290 = vector.shape_cast %289 : vector<1x64x1xf32> to vector<64x1xf32>
    %291 = vector.broadcast %290 : vector<64x1xf32> to vector<64x48xf32>
    %292 = arith.mulf %288, %291 : vector<64x48xf32>
    %293 = vector.extract_strided_slice %283 {offsets = [0, 0, 0], sizes = [1, 48, 12], strides = [1, 1, 1]} : vector<9x48x12xf32> to vector<1x48x12xf32>
    %294 = vector.shape_cast %293 : vector<1x48x12xf32> to vector<48x12xf32>
    %cst_120 = arith.constant dense<0.000000e+00> : vector<64x12xf32>
    %295 = tpu.matmul %292, %294, %cst_120 {dimension_numbers = #tpu.dot_dimension_numbers<[1], [0], [0], [1], [0, 0, 1, 1], [], []>} : vector<64x48xf32>, vector<48x12xf32>, vector<64x12xf32> -> vector<64x12xf32>
    %296 = arith.addf %287, %295 : vector<64x12xf32>
    %c8_i32_121 = arith.constant 8 : i32
    %297 = tpu.dynamic_rotate %282 by %c8_i32_121 dim 0 : vector<64x48xf32>, i32 -> vector<64x48xf32>
    %298 = vector.extract_strided_slice %2 {offsets = [1, 0, 0], sizes = [1, 64, 1], strides = [1, 1, 1]} : vector<9x64x1xf32> to vector<1x64x1xf32>
    %299 = vector.shape_cast %298 : vector<1x64x1xf32> to vector<64x1xf32>
    %300 = vector.broadcast %299 : vector<64x1xf32> to vector<64x48xf32>
    %301 = arith.mulf %297, %300 : vector<64x48xf32>
    %302 = vector.extract_strided_slice %283 {offsets = [1, 0, 0], sizes = [1, 48, 12], strides = [1, 1, 1]} : vector<9x48x12xf32> to vector<1x48x12xf32>
    %303 = vector.shape_cast %302 : vector<1x48x12xf32> to vector<48x12xf32>
    %cst_122 = arith.constant dense<0.000000e+00> : vector<64x12xf32>
    %304 = tpu.matmul %301, %303, %cst_122 {dimension_numbers = #tpu.dot_dimension_numbers<[1], [0], [0], [1], [0, 0, 1, 1], [], []>} : vector<64x48xf32>, vector<48x12xf32>, vector<64x12xf32> -> vector<64x12xf32>
    %305 = arith.addf %296, %304 : vector<64x12xf32>
    %c7_i32_123 = arith.constant 7 : i32
    %306 = tpu.dynamic_rotate %282 by %c7_i32_123 dim 0 : vector<64x48xf32>, i32 -> vector<64x48xf32>
    %307 = vector.extract_strided_slice %2 {offsets = [2, 0, 0], sizes = [1, 64, 1], strides = [1, 1, 1]} : vector<9x64x1xf32> to vector<1x64x1xf32>
    %308 = vector.shape_cast %307 : vector<1x64x1xf32> to vector<64x1xf32>
    %309 = vector.broadcast %308 : vector<64x1xf32> to vector<64x48xf32>
    %310 = arith.mulf %306, %309 : vector<64x48xf32>
    %311 = vector.extract_strided_slice %283 {offsets = [2, 0, 0], sizes = [1, 48, 12], strides = [1, 1, 1]} : vector<9x48x12xf32> to vector<1x48x12xf32>
    %312 = vector.shape_cast %311 : vector<1x48x12xf32> to vector<48x12xf32>
    %cst_124 = arith.constant dense<0.000000e+00> : vector<64x12xf32>
    %313 = tpu.matmul %310, %312, %cst_124 {dimension_numbers = #tpu.dot_dimension_numbers<[1], [0], [0], [1], [0, 0, 1, 1], [], []>} : vector<64x48xf32>, vector<48x12xf32>, vector<64x12xf32> -> vector<64x12xf32>
    %314 = arith.addf %305, %313 : vector<64x12xf32>
    %c1_i32_125 = arith.constant 1 : i32
    %315 = tpu.dynamic_rotate %282 by %c1_i32_125 dim 0 : vector<64x48xf32>, i32 -> vector<64x48xf32>
    %316 = vector.extract_strided_slice %2 {offsets = [3, 0, 0], sizes = [1, 64, 1], strides = [1, 1, 1]} : vector<9x64x1xf32> to vector<1x64x1xf32>
    %317 = vector.shape_cast %316 : vector<1x64x1xf32> to vector<64x1xf32>
    %318 = vector.broadcast %317 : vector<64x1xf32> to vector<64x48xf32>
    %319 = arith.mulf %315, %318 : vector<64x48xf32>
    %320 = vector.extract_strided_slice %283 {offsets = [3, 0, 0], sizes = [1, 48, 12], strides = [1, 1, 1]} : vector<9x48x12xf32> to vector<1x48x12xf32>
    %321 = vector.shape_cast %320 : vector<1x48x12xf32> to vector<48x12xf32>
    %cst_126 = arith.constant dense<0.000000e+00> : vector<64x12xf32>
    %322 = tpu.matmul %319, %321, %cst_126 {dimension_numbers = #tpu.dot_dimension_numbers<[1], [0], [0], [1], [0, 0, 1, 1], [], []>} : vector<64x48xf32>, vector<48x12xf32>, vector<64x12xf32> -> vector<64x12xf32>
    %323 = arith.addf %314, %322 : vector<64x12xf32>
    %324 = vector.extract_strided_slice %2 {offsets = [4, 0, 0], sizes = [1, 64, 1], strides = [1, 1, 1]} : vector<9x64x1xf32> to vector<1x64x1xf32>
    %325 = vector.shape_cast %324 : vector<1x64x1xf32> to vector<64x1xf32>
    %326 = vector.broadcast %325 : vector<64x1xf32> to vector<64x48xf32>
    %327 = arith.mulf %282, %326 : vector<64x48xf32>
    %328 = vector.extract_strided_slice %283 {offsets = [4, 0, 0], sizes = [1, 48, 12], strides = [1, 1, 1]} : vector<9x48x12xf32> to vector<1x48x12xf32>
    %329 = vector.shape_cast %328 : vector<1x48x12xf32> to vector<48x12xf32>
    %cst_127 = arith.constant dense<0.000000e+00> : vector<64x12xf32>
    %330 = tpu.matmul %327, %329, %cst_127 {dimension_numbers = #tpu.dot_dimension_numbers<[1], [0], [0], [1], [0, 0, 1, 1], [], []>} : vector<64x48xf32>, vector<48x12xf32>, vector<64x12xf32> -> vector<64x12xf32>
    %331 = arith.addf %323, %330 : vector<64x12xf32>
    %c63_i32_128 = arith.constant 63 : i32
    %332 = tpu.dynamic_rotate %282 by %c63_i32_128 dim 0 : vector<64x48xf32>, i32 -> vector<64x48xf32>
    %333 = vector.extract_strided_slice %2 {offsets = [5, 0, 0], sizes = [1, 64, 1], strides = [1, 1, 1]} : vector<9x64x1xf32> to vector<1x64x1xf32>
    %334 = vector.shape_cast %333 : vector<1x64x1xf32> to vector<64x1xf32>
    %335 = vector.broadcast %334 : vector<64x1xf32> to vector<64x48xf32>
    %336 = arith.mulf %332, %335 : vector<64x48xf32>
    %337 = vector.extract_strided_slice %283 {offsets = [5, 0, 0], sizes = [1, 48, 12], strides = [1, 1, 1]} : vector<9x48x12xf32> to vector<1x48x12xf32>
    %338 = vector.shape_cast %337 : vector<1x48x12xf32> to vector<48x12xf32>
    %cst_129 = arith.constant dense<0.000000e+00> : vector<64x12xf32>
    %339 = tpu.matmul %336, %338, %cst_129 {dimension_numbers = #tpu.dot_dimension_numbers<[1], [0], [0], [1], [0, 0, 1, 1], [], []>} : vector<64x48xf32>, vector<48x12xf32>, vector<64x12xf32> -> vector<64x12xf32>
    %340 = arith.addf %331, %339 : vector<64x12xf32>
    %c57_i32_130 = arith.constant 57 : i32
    %341 = tpu.dynamic_rotate %282 by %c57_i32_130 dim 0 : vector<64x48xf32>, i32 -> vector<64x48xf32>
    %342 = vector.extract_strided_slice %2 {offsets = [6, 0, 0], sizes = [1, 64, 1], strides = [1, 1, 1]} : vector<9x64x1xf32> to vector<1x64x1xf32>
    %343 = vector.shape_cast %342 : vector<1x64x1xf32> to vector<64x1xf32>
    %344 = vector.broadcast %343 : vector<64x1xf32> to vector<64x48xf32>
    %345 = arith.mulf %341, %344 : vector<64x48xf32>
    %346 = vector.extract_strided_slice %283 {offsets = [6, 0, 0], sizes = [1, 48, 12], strides = [1, 1, 1]} : vector<9x48x12xf32> to vector<1x48x12xf32>
    %347 = vector.shape_cast %346 : vector<1x48x12xf32> to vector<48x12xf32>
    %cst_131 = arith.constant dense<0.000000e+00> : vector<64x12xf32>
    %348 = tpu.matmul %345, %347, %cst_131 {dimension_numbers = #tpu.dot_dimension_numbers<[1], [0], [0], [1], [0, 0, 1, 1], [], []>} : vector<64x48xf32>, vector<48x12xf32>, vector<64x12xf32> -> vector<64x12xf32>
    %349 = arith.addf %340, %348 : vector<64x12xf32>
    %c56_i32_132 = arith.constant 56 : i32
    %350 = tpu.dynamic_rotate %282 by %c56_i32_132 dim 0 : vector<64x48xf32>, i32 -> vector<64x48xf32>
    %351 = vector.extract_strided_slice %2 {offsets = [7, 0, 0], sizes = [1, 64, 1], strides = [1, 1, 1]} : vector<9x64x1xf32> to vector<1x64x1xf32>
    %352 = vector.shape_cast %351 : vector<1x64x1xf32> to vector<64x1xf32>
    %353 = vector.broadcast %352 : vector<64x1xf32> to vector<64x48xf32>
    %354 = arith.mulf %350, %353 : vector<64x48xf32>
    %355 = vector.extract_strided_slice %283 {offsets = [7, 0, 0], sizes = [1, 48, 12], strides = [1, 1, 1]} : vector<9x48x12xf32> to vector<1x48x12xf32>
    %356 = vector.shape_cast %355 : vector<1x48x12xf32> to vector<48x12xf32>
    %cst_133 = arith.constant dense<0.000000e+00> : vector<64x12xf32>
    %357 = tpu.matmul %354, %356, %cst_133 {dimension_numbers = #tpu.dot_dimension_numbers<[1], [0], [0], [1], [0, 0, 1, 1], [], []>} : vector<64x48xf32>, vector<48x12xf32>, vector<64x12xf32> -> vector<64x12xf32>
    %358 = arith.addf %349, %357 : vector<64x12xf32>
    %c55_i32_134 = arith.constant 55 : i32
    %359 = tpu.dynamic_rotate %282 by %c55_i32_134 dim 0 : vector<64x48xf32>, i32 -> vector<64x48xf32>
    %360 = vector.extract_strided_slice %2 {offsets = [8, 0, 0], sizes = [1, 64, 1], strides = [1, 1, 1]} : vector<9x64x1xf32> to vector<1x64x1xf32>
    %361 = vector.shape_cast %360 : vector<1x64x1xf32> to vector<64x1xf32>
    %362 = vector.broadcast %361 : vector<64x1xf32> to vector<64x48xf32>
    %363 = arith.mulf %359, %362 : vector<64x48xf32>
    %364 = vector.extract_strided_slice %283 {offsets = [8, 0, 0], sizes = [1, 48, 12], strides = [1, 1, 1]} : vector<9x48x12xf32> to vector<1x48x12xf32>
    %365 = vector.shape_cast %364 : vector<1x48x12xf32> to vector<48x12xf32>
    %cst_135 = arith.constant dense<0.000000e+00> : vector<64x12xf32>
    %366 = tpu.matmul %363, %365, %cst_135 {dimension_numbers = #tpu.dot_dimension_numbers<[1], [0], [0], [1], [0, 0, 1, 1], [], []>} : vector<64x48xf32>, vector<48x12xf32>, vector<64x12xf32> -> vector<64x12xf32>
    %367 = arith.addf %358, %366 : vector<64x12xf32>
    %368 = tpu.concatenate %86, %179, %273, %367 in 1 : vector<64x24xf32>, vector<64x12xf32>, vector<64x12xf32>, vector<64x12xf32> -> vector<64x60xf32>
    %c0_136 = arith.constant 0 : index
    %c0_137 = arith.constant 0 : index
    %369 = vector.load %arg34[%c0_136, %c0_137] : memref<60x16xf32, #tpu.memory_space<vmem>>, vector<60x16xf32>
    %cst_138 = arith.constant dense<0.000000e+00> : vector<64x16xf32>
    %370 = tpu.matmul %368, %369, %cst_138 {dimension_numbers = #tpu.dot_dimension_numbers<[1], [0], [0], [1], [0, 0, 1, 1], [], []>} : vector<64x60xf32>, vector<60x16xf32>, vector<64x16xf32> -> vector<64x16xf32>
    %c0_139 = arith.constant 0 : index
    %c0_140 = arith.constant 0 : index
    %371 = vector.load %arg35[%c0_139, %c0_140] : memref<1x16xf32, #tpu.memory_space<vmem>>, vector<1x16xf32>
    %372 = vector.broadcast %371 : vector<1x16xf32> to vector<64x16xf32>
    %373 = arith.addf %370, %372 : vector<64x16xf32>
    %374 = vector.extract_strided_slice %373 {offsets = [0, 0], sizes = [64, 8], strides = [1, 1]} : vector<64x16xf32> to vector<64x8xf32>
    %375 = vector.extract_strided_slice %373 {offsets = [0, 8], sizes = [64, 8], strides = [1, 1]} : vector<64x16xf32> to vector<64x8xf32>
    %cst_141 = arith.constant dense<0.000000e+00> : vector<64x64xf32>
    %376 = tpu.matmul %374, %375, %cst_141 {dimension_numbers = #tpu.dot_dimension_numbers<[1], [1], [0], [0], [0, 0, 1, 0], [], []>} : vector<64x8xf32>, vector<64x8xf32>, vector<64x64xf32> -> vector<64x64xf32>
    %cst_142 = arith.constant dense<0xFF800000> : vector<64xf32>
    %377 = vector.multi_reduction <maximumf>, %376, %cst_142 [1] : vector<64x64xf32> to vector<64xf32>
    %378 = vector.shape_cast %377 : vector<64xf32> to vector<64x1xf32>
    %379 = vector.broadcast %378 : vector<64x1xf32> to vector<64x64xf32>
    %380 = arith.subf %376, %379 : vector<64x64xf32>
    %381 = math.exp %380 : vector<64x64xf32>
    %cst_143 = arith.constant dense<0.000000e+00> : vector<64xf32>
    %382 = vector.multi_reduction <add>, %381, %cst_143 [1] : vector<64x64xf32> to vector<64xf32>
    %383 = vector.shape_cast %382 : vector<64xf32> to vector<64x1xf32>
    %384 = tpu.reciprocal %383 {approx = true} : vector<64x1xf32> -> vector<64x1xf32>
    %385 = vector.broadcast %384 : vector<64x1xf32> to vector<64x64xf32>
    %386 = arith.mulf %381, %385 : vector<64x64xf32>
    %cst_144 = arith.constant dense<0.000000e+00> : vector<64x60xf32>
    %387 = tpu.matmul %386, %368, %cst_144 {dimension_numbers = #tpu.dot_dimension_numbers<[1], [0], [0], [1], [0, 0, 1, 1], [], []>} : vector<64x64xf32>, vector<64x60xf32>, vector<64x60xf32> -> vector<64x60xf32>
    %cst_145 = arith.constant 5.000000e-01 : f32
    %388 = vector.broadcast %cst_145 : f32 to vector<64x60xf32>
    %389 = arith.mulf %388, %387 : vector<64x60xf32>
    %390 = arith.addf %389, %368 : vector<64x60xf32>
    %c0_146 = arith.constant 0 : index
    %c0_147 = arith.constant 0 : index
    %391 = vector.load %arg36[%c0_146, %c0_147] : memref<60x5xf32, #tpu.memory_space<vmem>>, vector<60x5xf32>
    %cst_148 = arith.constant dense<0.000000e+00> : vector<64x5xf32>
    %392 = tpu.matmul %81, %391, %cst_148 {dimension_numbers = #tpu.dot_dimension_numbers<[1], [0], [0], [1], [0, 0, 1, 1], [], []>} : vector<64x60xf32>, vector<60x5xf32>, vector<64x5xf32> -> vector<64x5xf32>
    %c0_149 = arith.constant 0 : index
    %c0_150 = arith.constant 0 : index
    %393 = vector.load %arg37[%c0_149, %c0_150] : memref<60x5xf32, #tpu.memory_space<vmem>>, vector<60x5xf32>
    %cst_151 = arith.constant dense<0.000000e+00> : vector<64x5xf32>
    %394 = tpu.matmul %390, %393, %cst_151 {dimension_numbers = #tpu.dot_dimension_numbers<[1], [0], [0], [1], [0, 0, 1, 1], [], []>} : vector<64x60xf32>, vector<60x5xf32>, vector<64x5xf32> -> vector<64x5xf32>
    %395 = arith.addf %392, %394 : vector<64x5xf32>
    %cst_152 = arith.constant dense<0.000000e+00> : vector<5xf32>
    %396 = vector.multi_reduction <add>, %395, %cst_152 [0] : vector<64x5xf32> to vector<5xf32>
    %397 = vector.shape_cast %396 : vector<5xf32> to vector<1x5xf32>
    %cst_153 = arith.constant 6.400000e+01 : f32
    %398 = vector.broadcast %cst_153 : f32 to vector<1x5xf32>
    %399 = arith.divf %397, %398 : vector<1x5xf32>
    %c0_154 = arith.constant 0 : index
    %c0_155 = arith.constant 0 : index
    %400 = vector.load %arg38[%c0_154, %c0_155] : memref<1x5xf32, #tpu.memory_space<vmem>>, vector<1x5xf32>
    %401 = arith.addf %399, %400 : vector<1x5xf32>
    %c0_156 = arith.constant 0 : index
    %c0_157 = arith.constant 0 : index
    %c0_158 = arith.constant 0 : index
    %402 = vector.load %arg40[%c0_156, %c0_157, %c0_158] : memref<1x1x5xf32, #tpu.memory_space<vmem>>, vector<1x1x5xf32>
    %403 = vector.shape_cast %402 : vector<1x1x5xf32> to vector<1x5xf32>
    %404 = vector.shape_cast %401 : vector<1x5xf32> to vector<1x1x5xf32>
    tpu.vector_store %arg40[%c0_156, %c0_157, %c0_158], %404 {strides = array<i32>} : memref<1x1x5xf32, #tpu.memory_space<vmem>>, vector<1x1x5xf32>,
    return
  }
  func.func @transform_0(%arg0: i32) -> (i32, i32, i32) {
    %c0_i32 = arith.constant 0 : i32
    %c0_i32_0 = arith.constant 0 : i32
    %c0_i32_1 = arith.constant 0 : i32
    return %arg0, %c0_i32, %c0_i32_0 : i32, i32, i32
  }
  func.func @transform_1(%arg0: i32) -> (i32, i32) {
    %c0_i32 = arith.constant 0 : i32
    %c0_i32_0 = arith.constant 0 : i32
    %c0_i32_1 = arith.constant 0 : i32
    return %c0_i32, %c0_i32_0 : i32, i32
  }
  func.func @transform_2(%arg0: i32) -> (i32, i32) {
    %c0_i32 = arith.constant 0 : i32
    %c0_i32_0 = arith.constant 0 : i32
    %c0_i32_1 = arith.constant 0 : i32
    return %c0_i32, %c0_i32_0 : i32, i32
  }
  func.func @transform_3(%arg0: i32) -> (i32, i32) {
    %c0_i32 = arith.constant 0 : i32
    %c0_i32_0 = arith.constant 0 : i32
    %c0_i32_1 = arith.constant 0 : i32
    return %c0_i32, %c0_i32_0 : i32, i32
  }
  func.func @transform_4(%arg0: i32) -> (i32, i32) {
    %c0_i32 = arith.constant 0 : i32
    %c0_i32_0 = arith.constant 0 : i32
    %c0_i32_1 = arith.constant 0 : i32
    return %c0_i32, %c0_i32_0 : i32, i32
  }
  func.func @transform_5(%arg0: i32) -> (i32, i32) {
    %c0_i32 = arith.constant 0 : i32
    %c0_i32_0 = arith.constant 0 : i32
    %c0_i32_1 = arith.constant 0 : i32
    return %c0_i32, %c0_i32_0 : i32, i32
  }
  func.func @transform_6(%arg0: i32) -> (i32, i32) {
    %c0_i32 = arith.constant 0 : i32
    %c0_i32_0 = arith.constant 0 : i32
    %c0_i32_1 = arith.constant 0 : i32
    return %c0_i32, %c0_i32_0 : i32, i32
  }
  func.func @transform_7(%arg0: i32) -> (i32, i32) {
    %c0_i32 = arith.constant 0 : i32
    %c0_i32_0 = arith.constant 0 : i32
    %c0_i32_1 = arith.constant 0 : i32
    return %c0_i32, %c0_i32_0 : i32, i32
  }
  func.func @transform_8(%arg0: i32) -> (i32, i32) {
    %c0_i32 = arith.constant 0 : i32
    %c0_i32_0 = arith.constant 0 : i32
    %c0_i32_1 = arith.constant 0 : i32
    return %c0_i32, %c0_i32_0 : i32, i32
  }
  func.func @transform_9(%arg0: i32) -> (i32, i32) {
    %c0_i32 = arith.constant 0 : i32
    %c0_i32_0 = arith.constant 0 : i32
    %c0_i32_1 = arith.constant 0 : i32
    return %c0_i32, %c0_i32_0 : i32, i32
  }
  func.func @transform_10(%arg0: i32) -> (i32, i32) {
    %c0_i32 = arith.constant 0 : i32
    %c0_i32_0 = arith.constant 0 : i32
    %c0_i32_1 = arith.constant 0 : i32
    return %c0_i32, %c0_i32_0 : i32, i32
  }
  func.func @transform_11(%arg0: i32) -> (i32, i32) {
    %c0_i32 = arith.constant 0 : i32
    %c0_i32_0 = arith.constant 0 : i32
    %c0_i32_1 = arith.constant 0 : i32
    return %c0_i32, %c0_i32_0 : i32, i32
  }
  func.func @transform_12(%arg0: i32) -> (i32, i32) {
    %c0_i32 = arith.constant 0 : i32
    %c0_i32_0 = arith.constant 0 : i32
    %c0_i32_1 = arith.constant 0 : i32
    return %c0_i32, %c0_i32_0 : i32, i32
  }
  func.func @transform_13(%arg0: i32) -> (i32, i32) {
    %c0_i32 = arith.constant 0 : i32
    %c0_i32_0 = arith.constant 0 : i32
    %c0_i32_1 = arith.constant 0 : i32
    return %c0_i32, %c0_i32_0 : i32, i32
  }
  func.func @transform_14(%arg0: i32) -> (i32, i32) {
    %c0_i32 = arith.constant 0 : i32
    %c0_i32_0 = arith.constant 0 : i32
    %c0_i32_1 = arith.constant 0 : i32
    return %c0_i32, %c0_i32_0 : i32, i32
  }
  func.func @transform_15(%arg0: i32) -> (i32, i32) {
    %c0_i32 = arith.constant 0 : i32
    %c0_i32_0 = arith.constant 0 : i32
    %c0_i32_1 = arith.constant 0 : i32
    return %c0_i32, %c0_i32_0 : i32, i32
  }
  func.func @transform_16(%arg0: i32) -> (i32, i32) {
    %c0_i32 = arith.constant 0 : i32
    %c0_i32_0 = arith.constant 0 : i32
    %c0_i32_1 = arith.constant 0 : i32
    return %c0_i32, %c0_i32_0 : i32, i32
  }
  func.func @transform_17(%arg0: i32) -> (i32, i32) {
    %c0_i32 = arith.constant 0 : i32
    %c0_i32_0 = arith.constant 0 : i32
    %c0_i32_1 = arith.constant 0 : i32
    return %c0_i32, %c0_i32_0 : i32, i32
  }
  func.func @transform_18(%arg0: i32) -> (i32, i32) {
    %c0_i32 = arith.constant 0 : i32
    %c0_i32_0 = arith.constant 0 : i32
    %c0_i32_1 = arith.constant 0 : i32
    return %c0_i32, %c0_i32_0 : i32, i32
  }
  func.func @transform_19(%arg0: i32) -> (i32, i32) {
    %c0_i32 = arith.constant 0 : i32
    %c0_i32_0 = arith.constant 0 : i32
    %c0_i32_1 = arith.constant 0 : i32
    return %c0_i32, %c0_i32_0 : i32, i32
  }
  func.func @transform_20(%arg0: i32) -> (i32, i32) {
    %c0_i32 = arith.constant 0 : i32
    %c0_i32_0 = arith.constant 0 : i32
    %c0_i32_1 = arith.constant 0 : i32
    return %c0_i32, %c0_i32_0 : i32, i32
  }
  func.func @transform_21(%arg0: i32) -> (i32, i32) {
    %c0_i32 = arith.constant 0 : i32
    %c0_i32_0 = arith.constant 0 : i32
    %c0_i32_1 = arith.constant 0 : i32
    return %c0_i32, %c0_i32_0 : i32, i32
  }
  func.func @transform_22(%arg0: i32) -> (i32, i32) {
    %c0_i32 = arith.constant 0 : i32
    %c0_i32_0 = arith.constant 0 : i32
    %c0_i32_1 = arith.constant 0 : i32
    return %c0_i32, %c0_i32_0 : i32, i32
  }
  func.func @transform_23(%arg0: i32) -> (i32, i32, i32) {
    %c0_i32 = arith.constant 0 : i32
    %c0_i32_0 = arith.constant 0 : i32
    %c0_i32_1 = arith.constant 0 : i32
    %c0_i32_2 = arith.constant 0 : i32
    return %c0_i32, %c0_i32_0, %c0_i32_1 : i32, i32, i32
  }
  func.func @transform_24(%arg0: i32) -> (i32, i32) {
    %c0_i32 = arith.constant 0 : i32
    %c0_i32_0 = arith.constant 0 : i32
    %c0_i32_1 = arith.constant 0 : i32
    return %c0_i32, %c0_i32_0 : i32, i32
  }
  func.func @transform_25(%arg0: i32) -> (i32, i32) {
    %c0_i32 = arith.constant 0 : i32
    %c0_i32_0 = arith.constant 0 : i32
    %c0_i32_1 = arith.constant 0 : i32
    return %c0_i32, %c0_i32_0 : i32, i32
  }
  func.func @transform_26(%arg0: i32) -> (i32, i32) {
    %c0_i32 = arith.constant 0 : i32
    %c0_i32_0 = arith.constant 0 : i32
    %c0_i32_1 = arith.constant 0 : i32
    return %c0_i32, %c0_i32_0 : i32, i32
  }
  func.func @transform_27(%arg0: i32) -> (i32, i32, i32) {
    %c0_i32 = arith.constant 0 : i32
    %c0_i32_0 = arith.constant 0 : i32
    %c0_i32_1 = arith.constant 0 : i32
    %c0_i32_2 = arith.constant 0 : i32
    return %c0_i32, %c0_i32_0, %c0_i32_1 : i32, i32, i32
  }
  func.func @transform_28(%arg0: i32) -> (i32, i32) {
    %c0_i32 = arith.constant 0 : i32
    %c0_i32_0 = arith.constant 0 : i32
    %c0_i32_1 = arith.constant 0 : i32
    return %c0_i32, %c0_i32_0 : i32, i32
  }
  func.func @transform_29(%arg0: i32) -> (i32, i32) {
    %c0_i32 = arith.constant 0 : i32
    %c0_i32_0 = arith.constant 0 : i32
    %c0_i32_1 = arith.constant 0 : i32
    return %c0_i32, %c0_i32_0 : i32, i32
  }
  func.func @transform_30(%arg0: i32) -> (i32, i32) {
    %c0_i32 = arith.constant 0 : i32
    %c0_i32_0 = arith.constant 0 : i32
    %c0_i32_1 = arith.constant 0 : i32
    return %c0_i32, %c0_i32_0 : i32, i32
  }
  func.func @transform_31(%arg0: i32) -> (i32, i32, i32) {
    %c0_i32 = arith.constant 0 : i32
    %c0_i32_0 = arith.constant 0 : i32
    %c0_i32_1 = arith.constant 0 : i32
    %c0_i32_2 = arith.constant 0 : i32
    return %c0_i32, %c0_i32_0, %c0_i32_1 : i32, i32, i32
  }
  func.func @transform_32(%arg0: i32) -> (i32, i32) {
    %c0_i32 = arith.constant 0 : i32
    %c0_i32_0 = arith.constant 0 : i32
    %c0_i32_1 = arith.constant 0 : i32
    return %c0_i32, %c0_i32_0 : i32, i32
  }
  func.func @transform_33(%arg0: i32) -> (i32, i32) {
    %c0_i32 = arith.constant 0 : i32
    %c0_i32_0 = arith.constant 0 : i32
    %c0_i32_1 = arith.constant 0 : i32
    return %c0_i32, %c0_i32_0 : i32, i32
  }
  func.func @transform_34(%arg0: i32) -> (i32, i32) {
    %c0_i32 = arith.constant 0 : i32
    %c0_i32_0 = arith.constant 0 : i32
    %c0_i32_1 = arith.constant 0 : i32
    return %c0_i32, %c0_i32_0 : i32, i32
  }
  func.func @transform_35(%arg0: i32) -> (i32, i32) {
    %c0_i32 = arith.constant 0 : i32
    %c0_i32_0 = arith.constant 0 : i32
    %c0_i32_1 = arith.constant 0 : i32
    return %c0_i32, %c0_i32_0 : i32, i32
  }
  func.func @transform_36(%arg0: i32) -> (i32, i32) {
    %c0_i32 = arith.constant 0 : i32
    %c0_i32_0 = arith.constant 0 : i32
    %c0_i32_1 = arith.constant 0 : i32
    return %c0_i32, %c0_i32_0 : i32, i32
  }
  func.func @transform_37(%arg0: i32) -> (i32, i32) {
    %c0_i32 = arith.constant 0 : i32
    %c0_i32_0 = arith.constant 0 : i32
    %c0_i32_1 = arith.constant 0 : i32
    return %c0_i32, %c0_i32_0 : i32, i32
  }
  func.func @transform_38(%arg0: i32) -> (i32, i32, i32) {
    %c0_i32 = arith.constant 0 : i32
    %c0_i32_0 = arith.constant 0 : i32
    %c0_i32_1 = arith.constant 0 : i32
    %c0_i32_2 = arith.constant 0 : i32
    return %c0_i32, %c0_i32_0, %c0_i32_1 : i32, i32, i32
  }
  func.func @transform_39(%arg0: i32) -> (i32, i32, i32) {
    %c0_i32 = arith.constant 0 : i32
    %c0_i32_0 = arith.constant 0 : i32
    %c0_i32_1 = arith.constant 0 : i32
    return %arg0, %c0_i32, %c0_i32_0 : i32, i32, i32
  }
}

</mosaic_0001>

<llo_original>
// kernel: tpu_custom_call.1
$region0: #{tpu_custom_call.1}
  #allocation0 [shape = 'u32[]', space=smem, size = 0x4, offset = 0x4, fixed_abs, tag = 'smem constant byte address 0x4 - core index']
  #allocation1 [shape = 'u32[72,128]{1,0:T(1,128)}', space=vmem, size = 0x9000, scoped, tag = 'internal scratch']
  %s0 = inlined_call_operand.smem [shape: u32[40], index: -1, kind: input, shape index: {}]
  %s1 = sld [smem:[%s0]]
  %s2 = scalar_lea.smem %s0, 1
  %s3 = sld [smem:[%s2]]
  %s4 = scalar_lea.smem %s0, 2
  %s5 = sld [smem:[%s4]]
  %s6 = scalar_lea.smem %s0, 3
  %s7 = sld [smem:[%s6]]
  %s8 = scalar_lea.smem %s0, 4
  %s9 = sld [smem:[%s8]]
  %s10 = scalar_lea.smem %s0, 5
  %s11 = sld [smem:[%s10]]
  %s12 = scalar_lea.smem %s0, 6
  %s13 = sld [smem:[%s12]]
  %s14 = scalar_lea.smem %s0, 7
  %s15 = sld [smem:[%s14]]
  %s16 = scalar_lea.smem %s0, 8
  %s17 = sld [smem:[%s16]]
  %s18 = scalar_lea.smem %s0, 9
  %s19 = sld [smem:[%s18]]
  %s20 = scalar_lea.smem %s0, 10
  %s21 = sld [smem:[%s20]]
  %s22 = scalar_lea.smem %s0, 11
  %s23 = sld [smem:[%s22]]
  %s24 = scalar_lea.smem %s0, 12
  %s25 = sld [smem:[%s24]]
  %s26 = scalar_lea.smem %s0, 13
  %s27 = sld [smem:[%s26]]
  %s28 = scalar_lea.smem %s0, 14
  %s29 = sld [smem:[%s28]]
  %s30 = scalar_lea.smem %s0, 15
  %s31 = sld [smem:[%s30]]
  %s32 = scalar_lea.smem %s0, 16
  %s33 = sld [smem:[%s32]]
  %s34 = scalar_lea.smem %s0, 17
  %s35 = sld [smem:[%s34]]
  %s36 = scalar_lea.smem %s0, 18
  %s37 = sld [smem:[%s36]]
  %s38 = scalar_lea.smem %s0, 19
  %s39 = sld [smem:[%s38]]
  %s40 = scalar_lea.smem %s0, 20
  %s41 = sld [smem:[%s40]]
  %s42 = scalar_lea.smem %s0, 21
  %s43 = sld [smem:[%s42]]
  %s44 = scalar_lea.smem %s0, 22
  %s45 = sld [smem:[%s44]]
  %s46 = scalar_lea.smem %s0, 23
  %s47 = sld [smem:[%s46]]
  %s48 = scalar_lea.smem %s0, 24
  %s49 = sld [smem:[%s48]]
  %s50 = scalar_lea.smem %s0, 25
  %s51 = sld [smem:[%s50]]
  %s52 = scalar_lea.smem %s0, 26
  %s53 = sld [smem:[%s52]]
  %s54 = scalar_lea.smem %s0, 27
  %s55 = sld [smem:[%s54]]
  %s56 = scalar_lea.smem %s0, 28
  %s57 = sld [smem:[%s56]]
  %s58 = scalar_lea.smem %s0, 29
  %s59 = sld [smem:[%s58]]
  %s60 = scalar_lea.smem %s0, 30
  %s61 = sld [smem:[%s60]]
  %s62 = scalar_lea.smem %s0, 31
  %s63 = sld [smem:[%s62]]
  %s64 = scalar_lea.smem %s0, 32
  %s65 = sld [smem:[%s64]]
  %s66 = scalar_lea.smem %s0, 33
  %s67 = sld [smem:[%s66]]
  %s68 = scalar_lea.smem %s0, 34
  %s69 = sld [smem:[%s68]]
  %s70 = scalar_lea.smem %s0, 35
  %s71 = sld [smem:[%s70]]
  %s72 = scalar_lea.smem %s0, 36
  %s73 = sld [smem:[%s72]]
  %s74 = scalar_lea.smem %s0, 37
  %s75 = sld [smem:[%s74]]
  %s76 = scalar_lea.smem %s0, 38
  %s77 = sld [smem:[%s76]]
  %s78 = scalar_lea.smem %s0, 39
  %s79 = sld [smem:[%s78]]
  %s80 = sld [smem:[#allocation0]]
  $region189: #{tpu_custom_call.1} parent=0
    _
  %s82 = ssub.s32 1, %s80
  %s83 = scalar_select 0, %s82, %s80
  $region1: #{tpu_custom_call.1} parent=0
    #allocation2 [shape = 'u8[1024]{0}', space=vmem, size = 0x400, scoped, tag = 'output window, operand 0']
    #allocation3 [shape = 's32[2]{0}', space=sflag, size = 0x8, scoped, tag = 'scoped memory for tpu_custom_call.1']
    %84 = vsyncpa [#allocation3], 0
    %s85 = scalar_lea.sflag [#allocation3], 1
    %86 = vsyncpa %s85, 0
    loop: start=0, step=1, limit=4
    $region2: #{tpu_custom_call.1} parent=1 // loop_pre_header
      _
    $region3: #{tpu_custom_call.1} parent=1 // loop_header
      %s88 = sphi 0, %s92
      %p89 = scmp.ge.s32.totalorder %s88, 4
      %s98 = sphi 0, %s100
      %s101 = sphi 0, %s98
      %s102 = sphi 0, %s101
      %s118 = sphi 0, %s102
      %s122 = sphi 0, %s122
      %s124 = sphi 0, %s122
      %s125 = sphi 0, %s124
      %s139 = sphi 0, %s125
      %s143 = sphi 0, %s143
      %s145 = sphi 0, %s143
      %s146 = sphi 0, %s145
      %s160 = sphi 0, %s146
      %s164 = sphi 0, %s164
      %s166 = sphi 0, %s164
      %s167 = sphi 0, %s166
      %s181 = sphi 0, %s167
      %s185 = sphi 0, %s185
      %s187 = sphi 0, %s185
      %s188 = sphi 0, %s187
      %s202 = sphi 0, %s188
      %s206 = sphi 0, %s206
      %s208 = sphi 0, %s206
      %s209 = sphi 0, %s208
      %s223 = sphi 0, %s209
      %s227 = sphi 0, %s227
      %s229 = sphi 0, %s227
      %s230 = sphi 0, %s229
      %s244 = sphi 0, %s230
      %s248 = sphi 0, %s248
      %s250 = sphi 0, %s248
      %s251 = sphi 0, %s250
      %s265 = sphi 0, %s251
      %s269 = sphi 0, %s269
      %s271 = sphi 0, %s269
      %s272 = sphi 0, %s271
      %s286 = sphi 0, %s272
      %s290 = sphi 0, %s290
      %s292 = sphi 0, %s290
      %s293 = sphi 0, %s292
      %s307 = sphi 0, %s293
      %s311 = sphi 0, %s311
      %s313 = sphi 0, %s311
      %s314 = sphi 0, %s313
      %s328 = sphi 0, %s314
      %s332 = sphi 0, %s332
      %s334 = sphi 0, %s332
      %s335 = sphi 0, %s334
      %s349 = sphi 0, %s335
      %s353 = sphi 0, %s353
      %s355 = sphi 0, %s353
      %s356 = sphi 0, %s355
      %s370 = sphi 0, %s356
      %s374 = sphi 0, %s374
      %s376 = sphi 0, %s374
      %s377 = sphi 0, %s376
      %s391 = sphi 0, %s377
      %s395 = sphi 0, %s395
      %s397 = sphi 0, %s395
      %s398 = sphi 0, %s397
      %s412 = sphi 0, %s398
      %s416 = sphi 0, %s416
      %s418 = sphi 0, %s416
      %s419 = sphi 0, %s418
      %s433 = sphi 0, %s419
      %s437 = sphi 0, %s437
      %s439 = sphi 0, %s437
      %s440 = sphi 0, %s439
      %s454 = sphi 0, %s440
      %s458 = sphi 0, %s458
      %s460 = sphi 0, %s458
      %s461 = sphi 0, %s460
      %s475 = sphi 0, %s461
      %s479 = sphi 0, %s479
      %s481 = sphi 0, %s479
      %s482 = sphi 0, %s481
      %s496 = sphi 0, %s482
      %s500 = sphi 0, %s500
      %s502 = sphi 0, %s500
      %s503 = sphi 0, %s502
      %s517 = sphi 0, %s503
      %s521 = sphi 0, %s521
      %s523 = sphi 0, %s521
      %s524 = sphi 0, %s523
      %s538 = sphi 0, %s524
      %s542 = sphi 0, %s542
      %s544 = sphi 0, %s542
      %s545 = sphi 0, %s544
      %s559 = sphi 0, %s545
      %s563 = sphi 0, %s563
      %s565 = sphi 0, %s563
      %s566 = sphi 0, %s565
      %s580 = sphi 0, %s566
      %s584 = sphi 0, %s584
      %s586 = sphi 0, %s584
      %s587 = sphi 0, %s586
      %s601 = sphi 0, %s587
      %s605 = sphi 0, %s605
      %s607 = sphi 0, %s605
      %s608 = sphi 0, %s607
      %s622 = sphi 0, %s608
      %s626 = sphi 0, %s626
      %s628 = sphi 0, %s626
      %s629 = sphi 0, %s628
      %s643 = sphi 0, %s629
      %s647 = sphi 0, %s647
      %s649 = sphi 0, %s647
      %s650 = sphi 0, %s649
      %s664 = sphi 0, %s650
      %s668 = sphi 0, %s668
      %s670 = sphi 0, %s668
      %s671 = sphi 0, %s670
      %s685 = sphi 0, %s671
      %s689 = sphi 0, %s689
      %s691 = sphi 0, %s689
      %s692 = sphi 0, %s691
      %s706 = sphi 0, %s692
      %s710 = sphi 0, %s710
      %s712 = sphi 0, %s710
      %s713 = sphi 0, %s712
      %s727 = sphi 0, %s713
      %s731 = sphi 0, %s731
      %s733 = sphi 0, %s731
      %s734 = sphi 0, %s733
      %s748 = sphi 0, %s734
      %s752 = sphi 0, %s752
      %s754 = sphi 0, %s752
      %s755 = sphi 0, %s754
      %s769 = sphi 0, %s755
      %s773 = sphi 0, %s773
      %s775 = sphi 0, %s773
      %s776 = sphi 0, %s775
      %s790 = sphi 0, %s776
      %s794 = sphi 0, %s794
      %s796 = sphi 0, %s794
      %s797 = sphi 0, %s796
      %s811 = sphi 0, %s797
      %s815 = sphi 0, %s815
      %s817 = sphi 0, %s815
      %s818 = sphi 0, %s817
      %s832 = sphi 0, %s818
      %s836 = sphi 0, %s836
      %s838 = sphi 0, %s836
      %s839 = sphi 0, %s838
      %s853 = sphi 0, %s839
      %s857 = sphi 0, %s857
      %s859 = sphi 0, %s857
      %s860 = sphi 0, %s859
      %s874 = sphi 0, %s860
      %s878 = sphi 0, %s878
      %s880 = sphi 0, %s878
      %s881 = sphi 0, %s880
      %s895 = sphi 0, %s881
      %s899 = sphi 0, %s899
      %s901 = sphi 0, %s899
      %s902 = sphi 0, %s901
      %s916 = sphi 0, %s902
      %s922 = sphi 0, %s924
      %s925 = sphi 0, %s922
      %s926 = sphi 0, %s925
      %s942 = sphi 0, %s926
    $region4: #{tpu_custom_call.1} parent=1 // loop_header_branch
      %91 = sbr.rel (%p89) target = $region8
    $region5: #{tpu_custom_call.1} parent=1 // loop_body
      %s93 = ssub.s32 %s88, 1
      %s94 = ssub.s32 %s88, 2
      %s95 = sadd.s32 %s88, 1
      %s96 = ssub.s32 %s88, %s95
      %p97 = scmp.eq.s32.totalorder %s96, 0
      %s99 = sadd.s32 %s98, 1
      %s100 = scalar_select %p97, %s98, %s99
      %p103 = pneg %p97
      %p104 = scmp.eq.s32.totalorder %s88, 1
      %p105 = por %p103, %p104
      %p106 = scmp.ne.s32.totalorder %s98, %s101
      %p107 = scmp.eq.s32.totalorder %s88, 0
      %p108 = por %p106, %p107
      %p109 = scmp.ne.s32.totalorder %s98, %s101
      %p110 = scmp.eq.s32.totalorder %s93, 1
      %p111 = por %p109, %p110
      %p112 = scmp.ne.s32.totalorder %s101, %s102
      %p113 = scmp.eq.s32.totalorder %s93, 0
      %p114 = por %p112, %p113
      %p115 = scmp.ne.s32.totalorder %s101, %s102
      %p116 = scmp.eq.s32.totalorder %s94, 1
      %p117 = por %p115, %p116
      %p119 = scmp.ne.s32.totalorder %s102, %s118
      %p120 = scmp.eq.s32.totalorder %s94, 0
      %p121 = por %p119, %p120
      %s123 = sadd.s32 %s122, 1
      %p126 = scmp.eq.s32.totalorder %s88, 1
      %p127 = scmp.ne.s32.totalorder %s122, %s124
      %p128 = scmp.eq.s32.totalorder %s88, 0
      %p129 = por %p127, %p128
      %p130 = scmp.ne.s32.totalorder %s122, %s124
      %p131 = scmp.eq.s32.totalorder %s93, 1
      %p132 = por %p130, %p131
      %p133 = scmp.ne.s32.totalorder %s124, %s125
      %p134 = scmp.eq.s32.totalorder %s93, 0
      %p135 = por %p133, %p134
      %p136 = scmp.ne.s32.totalorder %s124, %s125
      %p137 = scmp.eq.s32.totalorder %s94, 1
      %p138 = por %p136, %p137
      %p140 = scmp.ne.s32.totalorder %s125, %s139
      %p141 = scmp.eq.s32.totalorder %s94, 0
      %p142 = por %p140, %p141
      %s144 = sadd.s32 %s143, 1
      %p147 = scmp.eq.s32.totalorder %s88, 1
      %p148 = scmp.ne.s32.totalorder %s143, %s145
      %p149 = scmp.eq.s32.totalorder %s88, 0
      %p150 = por %p148, %p149
      %p151 = scmp.ne.s32.totalorder %s143, %s145
      %p152 = scmp.eq.s32.totalorder %s93, 1
      %p153 = por %p151, %p152
      %p154 = scmp.ne.s32.totalorder %s145, %s146
      %p155 = scmp.eq.s32.totalorder %s93, 0
      %p156 = por %p154, %p155
      %p157 = scmp.ne.s32.totalorder %s145, %s146
      %p158 = scmp.eq.s32.totalorder %s94, 1
      %p159 = por %p157, %p158
      %p161 = scmp.ne.s32.totalorder %s146, %s160
      %p162 = scmp.eq.s32.totalorder %s94, 0
      %p163 = por %p161, %p162
      %s165 = sadd.s32 %s164, 1
      %p168 = scmp.eq.s32.totalorder %s88, 1
      %p169 = scmp.ne.s32.totalorder %s164, %s166
      %p170 = scmp.eq.s32.totalorder %s88, 0
      %p171 = por %p169, %p170
      %p172 = scmp.ne.s32.totalorder %s164, %s166
      %p173 = scmp.eq.s32.totalorder %s93, 1
      %p174 = por %p172, %p173
      %p175 = scmp.ne.s32.totalorder %s166, %s167
      %p176 = scmp.eq.s32.totalorder %s93, 0
      %p177 = por %p175, %p176
      %p178 = scmp.ne.s32.totalorder %s166, %s167
      %p179 = scmp.eq.s32.totalorder %s94, 1
      %p180 = por %p178, %p179
      %p182 = scmp.ne.s32.totalorder %s167, %s181
      %p183 = scmp.eq.s32.totalorder %s94, 0
      %p184 = por %p182, %p183
      %s186 = sadd.s32 %s185, 1
      %p189 = scmp.eq.s32.totalorder %s88, 1
      %p190 = scmp.ne.s32.totalorder %s185, %s187
      %p191 = scmp.eq.s32.totalorder %s88, 0
      %p192 = por %p190, %p191
      %p193 = scmp.ne.s32.totalorder %s185, %s187
      %p194 = scmp.eq.s32.totalorder %s93, 1
      %p195 = por %p193, %p194
      %p196 = scmp.ne.s32.totalorder %s187, %s188
      %p197 = scmp.eq.s32.totalorder %s93, 0
      %p198 = por %p196, %p197
      %p199 = scmp.ne.s32.totalorder %s187, %s188
      %p200 = scmp.eq.s32.totalorder %s94, 1
      %p201 = por %p199, %p200
      %p203 = scmp.ne.s32.totalorder %s188, %s202
      %p204 = scmp.eq.s32.totalorder %s94, 0
      %p205 = por %p203, %p204
      %s207 = sadd.s32 %s206, 1
      %p210 = scmp.eq.s32.totalorder %s88, 1
      %p211 = scmp.ne.s32.totalorder %s206, %s208
      %p212 = scmp.eq.s32.totalorder %s88, 0
      %p213 = por %p211, %p212
      %p214 = scmp.ne.s32.totalorder %s206, %s208
      %p215 = scmp.eq.s32.totalorder %s93, 1
      %p216 = por %p214, %p215
      %p217 = scmp.ne.s32.totalorder %s208, %s209
      %p218 = scmp.eq.s32.totalorder %s93, 0
      %p219 = por %p217, %p218
      %p220 = scmp.ne.s32.totalorder %s208, %s209
      %p221 = scmp.eq.s32.totalorder %s94, 1
      %p222 = por %p220, %p221
      %p224 = scmp.ne.s32.totalorder %s209, %s223
      %p225 = scmp.eq.s32.totalorder %s94, 0
      %p226 = por %p224, %p225
      %s228 = sadd.s32 %s227, 1
      %p231 = scmp.eq.s32.totalorder %s88, 1
      %p232 = scmp.ne.s32.totalorder %s227, %s229
      %p233 = scmp.eq.s32.totalorder %s88, 0
      %p234 = por %p232, %p233
      %p235 = scmp.ne.s32.totalorder %s227, %s229
      %p236 = scmp.eq.s32.totalorder %s93, 1
      %p237 = por %p235, %p236
      %p238 = scmp.ne.s32.totalorder %s229, %s230
      %p239 = scmp.eq.s32.totalorder %s93, 0
      %p240 = por %p238, %p239
      %p241 = scmp.ne.s32.totalorder %s229, %s230
      %p242 = scmp.eq.s32.totalorder %s94, 1
      %p243 = por %p241, %p242
      %p245 = scmp.ne.s32.totalorder %s230, %s244
      %p246 = scmp.eq.s32.totalorder %s94, 0
      %p247 = por %p245, %p246
      %s249 = sadd.s32 %s248, 1
      %p252 = scmp.eq.s32.totalorder %s88, 1
      %p253 = scmp.ne.s32.totalorder %s248, %s250
      %p254 = scmp.eq.s32.totalorder %s88, 0
      %p255 = por %p253, %p254
      %p256 = scmp.ne.s32.totalorder %s248, %s250
      %p257 = scmp.eq.s32.totalorder %s93, 1
      %p258 = por %p256, %p257
      %p259 = scmp.ne.s32.totalorder %s250, %s251
      %p260 = scmp.eq.s32.totalorder %s93, 0
      %p261 = por %p259, %p260
      %p262 = scmp.ne.s32.totalorder %s250, %s251
      %p263 = scmp.eq.s32.totalorder %s94, 1
      %p264 = por %p262, %p263
      %p266 = scmp.ne.s32.totalorder %s251, %s265
      %p267 = scmp.eq.s32.totalorder %s94, 0
      %p268 = por %p266, %p267
      %s270 = sadd.s32 %s269, 1
      %p273 = scmp.eq.s32.totalorder %s88, 1
      %p274 = scmp.ne.s32.totalorder %s269, %s271
      %p275 = scmp.eq.s32.totalorder %s88, 0
      %p276 = por %p274, %p275
      %p277 = scmp.ne.s32.totalorder %s269, %s271
      %p278 = scmp.eq.s32.totalorder %s93, 1
      %p279 = por %p277, %p278
      %p280 = scmp.ne.s32.totalorder %s271, %s272
      %p281 = scmp.eq.s32.totalorder %s93, 0
      %p282 = por %p280, %p281
      %p283 = scmp.ne.s32.totalorder %s271, %s272
      %p284 = scmp.eq.s32.totalorder %s94, 1
      %p285 = por %p283, %p284
      %p287 = scmp.ne.s32.totalorder %s272, %s286
      %p288 = scmp.eq.s32.totalorder %s94, 0
      %p289 = por %p287, %p288
      %s291 = sadd.s32 %s290, 1
      %p294 = scmp.eq.s32.totalorder %s88, 1
      %p295 = scmp.ne.s32.totalorder %s290, %s292
      %p296 = scmp.eq.s32.totalorder %s88, 0
      %p297 = por %p295, %p296
      %p298 = scmp.ne.s32.totalorder %s290, %s292
      %p299 = scmp.eq.s32.totalorder %s93, 1
      %p300 = por %p298, %p299
      %p301 = scmp.ne.s32.totalorder %s292, %s293
      %p302 = scmp.eq.s32.totalorder %s93, 0
      %p303 = por %p301, %p302
      %p304 = scmp.ne.s32.totalorder %s292, %s293
      %p305 = scmp.eq.s32.totalorder %s94, 1
      %p306 = por %p304, %p305
      %p308 = scmp.ne.s32.totalorder %s293, %s307
      %p309 = scmp.eq.s32.totalorder %s94, 0
      %p310 = por %p308, %p309
      %s312 = sadd.s32 %s311, 1
      %p315 = scmp.eq.s32.totalorder %s88, 1
      %p316 = scmp.ne.s32.totalorder %s311, %s313
      %p317 = scmp.eq.s32.totalorder %s88, 0
      %p318 = por %p316, %p317
      %p319 = scmp.ne.s32.totalorder %s311, %s313
      %p320 = scmp.eq.s32.totalorder %s93, 1
      %p321 = por %p319, %p320
      %p322 = scmp.ne.s32.totalorder %s313, %s314
      %p323 = scmp.eq.s32.totalorder %s93, 0
      %p324 = por %p322, %p323
      %p325 = scmp.ne.s32.totalorder %s313, %s314
      %p326 = scmp.eq.s32.totalorder %s94, 1
      %p327 = por %p325, %p326
      %p329 = scmp.ne.s32.totalorder %s314, %s328
      %p330 = scmp.eq.s32.totalorder %s94, 0
      %p331 = por %p329, %p330
      %s333 = sadd.s32 %s332, 1
      %p336 = scmp.eq.s32.totalorder %s88, 1
      %p337 = scmp.ne.s32.totalorder %s332, %s334
      %p338 = scmp.eq.s32.totalorder %s88, 0
      %p339 = por %p337, %p338
      %p340 = scmp.ne.s32.totalorder %s332, %s334
      %p341 = scmp.eq.s32.totalorder %s93, 1
      %p342 = por %p340, %p341
      %p343 = scmp.ne.s32.totalorder %s334, %s335
      %p344 = scmp.eq.s32.totalorder %s93, 0
      %p345 = por %p343, %p344
      %p346 = scmp.ne.s32.totalorder %s334, %s335
      %p347 = scmp.eq.s32.totalorder %s94, 1
      %p348 = por %p346, %p347
      %p350 = scmp.ne.s32.totalorder %s335, %s349
      %p351 = scmp.eq.s32.totalorder %s94, 0
      %p352 = por %p350, %p351
      %s354 = sadd.s32 %s353, 1
      %p357 = scmp.eq.s32.totalorder %s88, 1
      %p358 = scmp.ne.s32.totalorder %s353, %s355
      %p359 = scmp.eq.s32.totalorder %s88, 0
      %p360 = por %p358, %p359
      %p361 = scmp.ne.s32.totalorder %s353, %s355
      %p362 = scmp.eq.s32.totalorder %s93, 1
      %p363 = por %p361, %p362
      %p364 = scmp.ne.s32.totalorder %s355, %s356
      %p365 = scmp.eq.s32.totalorder %s93, 0
      %p366 = por %p364, %p365
      %p367 = scmp.ne.s32.totalorder %s355, %s356
      %p368 = scmp.eq.s32.totalorder %s94, 1
      %p369 = por %p367, %p368
      %p371 = scmp.ne.s32.totalorder %s356, %s370
      %p372 = scmp.eq.s32.totalorder %s94, 0
      %p373 = por %p371, %p372
      %s375 = sadd.s32 %s374, 1
      %p378 = scmp.eq.s32.totalorder %s88, 1
      %p379 = scmp.ne.s32.totalorder %s374, %s376
      %p380 = scmp.eq.s32.totalorder %s88, 0
      %p381 = por %p379, %p380
      %p382 = scmp.ne.s32.totalorder %s374, %s376
      %p383 = scmp.eq.s32.totalorder %s93, 1
      %p384 = por %p382, %p383
      %p385 = scmp.ne.s32.totalorder %s376, %s377
      %p386 = scmp.eq.s32.totalorder %s93, 0
      %p387 = por %p385, %p386
      %p388 = scmp.ne.s32.totalorder %s376, %s377
      %p389 = scmp.eq.s32.totalorder %s94, 1
      %p390 = por %p388, %p389
      %p392 = scmp.ne.s32.totalorder %s377, %s391
      %p393 = scmp.eq.s32.totalorder %s94, 0
      %p394 = por %p392, %p393
      %s396 = sadd.s32 %s395, 1
      %p399 = scmp.eq.s32.totalorder %s88, 1
      %p400 = scmp.ne.s32.totalorder %s395, %s397
      %p401 = scmp.eq.s32.totalorder %s88, 0
      %p402 = por %p400, %p401
      %p403 = scmp.ne.s32.totalorder %s395, %s397
      %p404 = scmp.eq.s32.totalorder %s93, 1
      %p405 = por %p403, %p404
      %p406 = scmp.ne.s32.totalorder %s397, %s398
      %p407 = scmp.eq.s32.totalorder %s93, 0
      %p408 = por %p406, %p407
      %p409 = scmp.ne.s32.totalorder %s397, %s398
      %p410 = scmp.eq.s32.totalorder %s94, 1
      %p411 = por %p409, %p410
      %p413 = scmp.ne.s32.totalorder %s398, %s412
      %p414 = scmp.eq.s32.totalorder %s94, 0
      %p415 = por %p413, %p414
      %s417 = sadd.s32 %s416, 1
      %p420 = scmp.eq.s32.totalorder %s88, 1
      %p421 = scmp.ne.s32.totalorder %s416, %s418
      %p422 = scmp.eq.s32.totalorder %s88, 0
      %p423 = por %p421, %p422
      %p424 = scmp.ne.s32.totalorder %s416, %s418
      %p425 = scmp.eq.s32.totalorder %s93, 1
      %p426 = por %p424, %p425
      %p427 = scmp.ne.s32.totalorder %s418, %s419
      %p428 = scmp.eq.s32.totalorder %s93, 0
      %p429 = por %p427, %p428
      %p430 = scmp.ne.s32.totalorder %s418, %s419
      %p431 = scmp.eq.s32.totalorder %s94, 1
      %p432 = por %p430, %p431
      %p434 = scmp.ne.s32.totalorder %s419, %s433
      %p435 = scmp.eq.s32.totalorder %s94, 0
      %p436 = por %p434, %p435
      %s438 = sadd.s32 %s437, 1
      %p441 = scmp.eq.s32.totalorder %s88, 1
      %p442 = scmp.ne.s32.totalorder %s437, %s439
      %p443 = scmp.eq.s32.totalorder %s88, 0
      %p444 = por %p442, %p443
      %p445 = scmp.ne.s32.totalorder %s437, %s439
      %p446 = scmp.eq.s32.totalorder %s93, 1
      %p447 = por %p445, %p446
      %p448 = scmp.ne.s32.totalorder %s439, %s440
      %p449 = scmp.eq.s32.totalorder %s93, 0
      %p450 = por %p448, %p449
      %p451 = scmp.ne.s32.totalorder %s439, %s440
      %p452 = scmp.eq.s32.totalorder %s94, 1
      %p453 = por %p451, %p452
      %p455 = scmp.ne.s32.totalorder %s440, %s454
      %p456 = scmp.eq.s32.totalorder %s94, 0
      %p457 = por %p455, %p456
      %s459 = sadd.s32 %s458, 1
      %p462 = scmp.eq.s32.totalorder %s88, 1
      %p463 = scmp.ne.s32.totalorder %s458, %s460
      %p464 = scmp.eq.s32.totalorder %s88, 0
      %p465 = por %p463, %p464
      %p466 = scmp.ne.s32.totalorder %s458, %s460
      %p467 = scmp.eq.s32.totalorder %s93, 1
      %p468 = por %p466, %p467
      %p469 = scmp.ne.s32.totalorder %s460, %s461
      %p470 = scmp.eq.s32.totalorder %s93, 0
      %p471 = por %p469, %p470
      %p472 = scmp.ne.s32.totalorder %s460, %s461
      %p473 = scmp.eq.s32.totalorder %s94, 1
      %p474 = por %p472, %p473
      %p476 = scmp.ne.s32.totalorder %s461, %s475
      %p477 = scmp.eq.s32.totalorder %s94, 0
      %p478 = por %p476, %p477
      %s480 = sadd.s32 %s479, 1
      %p483 = scmp.eq.s32.totalorder %s88, 1
      %p484 = scmp.ne.s32.totalorder %s479, %s481
      %p485 = scmp.eq.s32.totalorder %s88, 0
      %p486 = por %p484, %p485
      %p487 = scmp.ne.s32.totalorder %s479, %s481
      %p488 = scmp.eq.s32.totalorder %s93, 1
      %p489 = por %p487, %p488
      %p490 = scmp.ne.s32.totalorder %s481, %s482
      %p491 = scmp.eq.s32.totalorder %s93, 0
      %p492 = por %p490, %p491
      %p493 = scmp.ne.s32.totalorder %s481, %s482
      %p494 = scmp.eq.s32.totalorder %s94, 1
      %p495 = por %p493, %p494
      %p497 = scmp.ne.s32.totalorder %s482, %s496
      %p498 = scmp.eq.s32.totalorder %s94, 0
      %p499 = por %p497, %p498
      %s501 = sadd.s32 %s500, 1
      %p504 = scmp.eq.s32.totalorder %s88, 1
      %p505 = scmp.ne.s32.totalorder %s500, %s502
      %p506 = scmp.eq.s32.totalorder %s88, 0
      %p507 = por %p505, %p506
      %p508 = scmp.ne.s32.totalorder %s500, %s502
      %p509 = scmp.eq.s32.totalorder %s93, 1
      %p510 = por %p508, %p509
      %p511 = scmp.ne.s32.totalorder %s502, %s503
      %p512 = scmp.eq.s32.totalorder %s93, 0
      %p513 = por %p511, %p512
      %p514 = scmp.ne.s32.totalorder %s502, %s503
      %p515 = scmp.eq.s32.totalorder %s94, 1
      %p516 = por %p514, %p515
      %p518 = scmp.ne.s32.totalorder %s503, %s517
      %p519 = scmp.eq.s32.totalorder %s94, 0
      %p520 = por %p518, %p519
      %s522 = sadd.s32 %s521, 1
      %p525 = scmp.eq.s32.totalorder %s88, 1
      %p526 = scmp.ne.s32.totalorder %s521, %s523
      %p527 = scmp.eq.s32.totalorder %s88, 0
      %p528 = por %p526, %p527
      %p529 = scmp.ne.s32.totalorder %s521, %s523
      %p530 = scmp.eq.s32.totalorder %s93, 1
      %p531 = por %p529, %p530
      %p532 = scmp.ne.s32.totalorder %s523, %s524
      %p533 = scmp.eq.s32.totalorder %s93, 0
      %p534 = por %p532, %p533
      %p535 = scmp.ne.s32.totalorder %s523, %s524
      %p536 = scmp.eq.s32.totalorder %s94, 1
      %p537 = por %p535, %p536
      %p539 = scmp.ne.s32.totalorder %s524, %s538
      %p540 = scmp.eq.s32.totalorder %s94, 0
      %p541 = por %p539, %p540
      %s543 = sadd.s32 %s542, 1
      %p546 = scmp.eq.s32.totalorder %s88, 1
      %p547 = scmp.ne.s32.totalorder %s542, %s544
      %p548 = scmp.eq.s32.totalorder %s88, 0
      %p549 = por %p547, %p548
      %p550 = scmp.ne.s32.totalorder %s542, %s544
      %p551 = scmp.eq.s32.totalorder %s93, 1
      %p552 = por %p550, %p551
      %p553 = scmp.ne.s32.totalorder %s544, %s545
      %p554 = scmp.eq.s32.totalorder %s93, 0
      %p555 = por %p553, %p554
      %p556 = scmp.ne.s32.totalorder %s544, %s545
      %p557 = scmp.eq.s32.totalorder %s94, 1
      %p558 = por %p556, %p557
      %p560 = scmp.ne.s32.totalorder %s545, %s559
      %p561 = scmp.eq.s32.totalorder %s94, 0
      %p562 = por %p560, %p561
      %s564 = sadd.s32 %s563, 1
      %p567 = scmp.eq.s32.totalorder %s88, 1
      %p568 = scmp.ne.s32.totalorder %s563, %s565
      %p569 = scmp.eq.s32.totalorder %s88, 0
      %p570 = por %p568, %p569
      %p571 = scmp.ne.s32.totalorder %s563, %s565
      %p572 = scmp.eq.s32.totalorder %s93, 1
      %p573 = por %p571, %p572
      %p574 = scmp.ne.s32.totalorder %s565, %s566
      %p575 = scmp.eq.s32.totalorder %s93, 0
      %p576 = por %p574, %p575
      %p577 = scmp.ne.s32.totalorder %s565, %s566
      %p578 = scmp.eq.s32.totalorder %s94, 1
      %p579 = por %p577, %p578
      %p581 = scmp.ne.s32.totalorder %s566, %s580
      %p582 = scmp.eq.s32.totalorder %s94, 0
      %p583 = por %p581, %p582
      %s585 = sadd.s32 %s584, 1
      %p588 = scmp.eq.s32.totalorder %s88, 1
      %p589 = scmp.ne.s32.totalorder %s584, %s586
      %p590 = scmp.eq.s32.totalorder %s88, 0
      %p591 = por %p589, %p590
      %p592 = scmp.ne.s32.totalorder %s584, %s586
      %p593 = scmp.eq.s32.totalorder %s93, 1
      %p594 = por %p592, %p593
      %p595 = scmp.ne.s32.totalorder %s586, %s587
      %p596 = scmp.eq.s32.totalorder %s93, 0
      %p597 = por %p595, %p596
      %p598 = scmp.ne.s32.totalorder %s586, %s587
      %p599 = scmp.eq.s32.totalorder %s94, 1
      %p600 = por %p598, %p599
      %p602 = scmp.ne.s32.totalorder %s587, %s601
      %p603 = scmp.eq.s32.totalorder %s94, 0
      %p604 = por %p602, %p603
      %s606 = sadd.s32 %s605, 1
      %p609 = scmp.eq.s32.totalorder %s88, 1
      %p610 = scmp.ne.s32.totalorder %s605, %s607
      %p611 = scmp.eq.s32.totalorder %s88, 0
      %p612 = por %p610, %p611
      %p613 = scmp.ne.s32.totalorder %s605, %s607
      %p614 = scmp.eq.s32.totalorder %s93, 1
      %p615 = por %p613, %p614
      %p616 = scmp.ne.s32.totalorder %s607, %s608
      %p617 = scmp.eq.s32.totalorder %s93, 0
      %p618 = por %p616, %p617
      %p619 = scmp.ne.s32.totalorder %s607, %s608
      %p620 = scmp.eq.s32.totalorder %s94, 1
      %p621 = por %p619, %p620
      %p623 = scmp.ne.s32.totalorder %s608, %s622
      %p624 = scmp.eq.s32.totalorder %s94, 0
      %p625 = por %p623, %p624
      %s627 = sadd.s32 %s626, 1
      %p630 = scmp.eq.s32.totalorder %s88, 1
      %p631 = scmp.ne.s32.totalorder %s626, %s628
      %p632 = scmp.eq.s32.totalorder %s88, 0
      %p633 = por %p631, %p632
      %p634 = scmp.ne.s32.totalorder %s626, %s628
      %p635 = scmp.eq.s32.totalorder %s93, 1
      %p636 = por %p634, %p635
      %p637 = scmp.ne.s32.totalorder %s628, %s629
      %p638 = scmp.eq.s32.totalorder %s93, 0
      %p639 = por %p637, %p638
      %p640 = scmp.ne.s32.totalorder %s628, %s629
      %p641 = scmp.eq.s32.totalorder %s94, 1
      %p642 = por %p640, %p641
      %p644 = scmp.ne.s32.totalorder %s629, %s643
      %p645 = scmp.eq.s32.totalorder %s94, 0
      %p646 = por %p644, %p645
      %s648 = sadd.s32 %s647, 1
      %p651 = scmp.eq.s32.totalorder %s88, 1
      %p652 = scmp.ne.s32.totalorder %s647, %s649
      %p653 = scmp.eq.s32.totalorder %s88, 0
      %p654 = por %p652, %p653
      %p655 = scmp.ne.s32.totalorder %s647, %s649
      %p656 = scmp.eq.s32.totalorder %s93, 1
      %p657 = por %p655, %p656
      %p658 = scmp.ne.s32.totalorder %s649, %s650
      %p659 = scmp.eq.s32.totalorder %s93, 0
      %p660 = por %p658, %p659
      %p661 = scmp.ne.s32.totalorder %s649, %s650
      %p662 = scmp.eq.s32.totalorder %s94, 1
      %p663 = por %p661, %p662
      %p665 = scmp.ne.s32.totalorder %s650, %s664
      %p666 = scmp.eq.s32.totalorder %s94, 0
      %p667 = por %p665, %p666
      %s669 = sadd.s32 %s668, 1
      %p672 = scmp.eq.s32.totalorder %s88, 1
      %p673 = scmp.ne.s32.totalorder %s668, %s670
      %p674 = scmp.eq.s32.totalorder %s88, 0
      %p675 = por %p673, %p674
      %p676 = scmp.ne.s32.totalorder %s668, %s670
      %p677 = scmp.eq.s32.totalorder %s93, 1
      %p678 = por %p676, %p677
      %p679 = scmp.ne.s32.totalorder %s670, %s671
      %p680 = scmp.eq.s32.totalorder %s93, 0
      %p681 = por %p679, %p680
      %p682 = scmp.ne.s32.totalorder %s670, %s671
      %p683 = scmp.eq.s32.totalorder %s94, 1
      %p684 = por %p682, %p683
      %p686 = scmp.ne.s32.totalorder %s671, %s685
      %p687 = scmp.eq.s32.totalorder %s94, 0
      %p688 = por %p686, %p687
      %s690 = sadd.s32 %s689, 1
      %p693 = scmp.eq.s32.totalorder %s88, 1
      %p694 = scmp.ne.s32.totalorder %s689, %s691
      %p695 = scmp.eq.s32.totalorder %s88, 0
      %p696 = por %p694, %p695
      %p697 = scmp.ne.s32.totalorder %s689, %s691
      %p698 = scmp.eq.s32.totalorder %s93, 1
      %p699 = por %p697, %p698
      %p700 = scmp.ne.s32.totalorder %s691, %s692
      %p701 = scmp.eq.s32.totalorder %s93, 0
      %p702 = por %p700, %p701
      %p703 = scmp.ne.s32.totalorder %s691, %s692
      %p704 = scmp.eq.s32.totalorder %s94, 1
      %p705 = por %p703, %p704
      %p707 = scmp.ne.s32.totalorder %s692, %s706
      %p708 = scmp.eq.s32.totalorder %s94, 0
      %p709 = por %p707, %p708
      %s711 = sadd.s32 %s710, 1
      %p714 = scmp.eq.s32.totalorder %s88, 1
      %p715 = scmp.ne.s32.totalorder %s710, %s712
      %p716 = scmp.eq.s32.totalorder %s88, 0
      %p717 = por %p715, %p716
      %p718 = scmp.ne.s32.totalorder %s710, %s712
      %p719 = scmp.eq.s32.totalorder %s93, 1
      %p720 = por %p718, %p719
      %p721 = scmp.ne.s32.totalorder %s712, %s713
      %p722 = scmp.eq.s32.totalorder %s93, 0
      %p723 = por %p721, %p722
      %p724 = scmp.ne.s32.totalorder %s712, %s713
      %p725 = scmp.eq.s32.totalorder %s94, 1
      %p726 = por %p724, %p725
      %p728 = scmp.ne.s32.totalorder %s713, %s727
      %p729 = scmp.eq.s32.totalorder %s94, 0
      %p730 = por %p728, %p729
      %s732 = sadd.s32 %s731, 1
      %p735 = scmp.eq.s32.totalorder %s88, 1
      %p736 = scmp.ne.s32.totalorder %s731, %s733
      %p737 = scmp.eq.s32.totalorder %s88, 0
      %p738 = por %p736, %p737
      %p739 = scmp.ne.s32.totalorder %s731, %s733
      %p740 = scmp.eq.s32.totalorder %s93, 1
      %p741 = por %p739, %p740
      %p742 = scmp.ne.s32.totalorder %s733, %s734
      %p743 = scmp.eq.s32.totalorder %s93, 0
      %p744 = por %p742, %p743
      %p745 = scmp.ne.s32.totalorder %s733, %s734
      %p746 = scmp.eq.s32.totalorder %s94, 1
      %p747 = por %p745, %p746
      %p749 = scmp.ne.s32.totalorder %s734, %s748
      %p750 = scmp.eq.s32.totalorder %s94, 0
      %p751 = por %p749, %p750
      %s753 = sadd.s32 %s752, 1
      %p756 = scmp.eq.s32.totalorder %s88, 1
      %p757 = scmp.ne.s32.totalorder %s752, %s754
      %p758 = scmp.eq.s32.totalorder %s88, 0
      %p759 = por %p757, %p758
      %p760 = scmp.ne.s32.totalorder %s752, %s754
      %p761 = scmp.eq.s32.totalorder %s93, 1
      %p762 = por %p760, %p761
      %p763 = scmp.ne.s32.totalorder %s754, %s755
      %p764 = scmp.eq.s32.totalorder %s93, 0
      %p765 = por %p763, %p764
      %p766 = scmp.ne.s32.totalorder %s754, %s755
      %p767 = scmp.eq.s32.totalorder %s94, 1
      %p768 = por %p766, %p767
      %p770 = scmp.ne.s32.totalorder %s755, %s769
      %p771 = scmp.eq.s32.totalorder %s94, 0
      %p772 = por %p770, %p771
      %s774 = sadd.s32 %s773, 1
      %p777 = scmp.eq.s32.totalorder %s88, 1
      %p778 = scmp.ne.s32.totalorder %s773, %s775
      %p779 = scmp.eq.s32.totalorder %s88, 0
      %p780 = por %p778, %p779
      %p781 = scmp.ne.s32.totalorder %s773, %s775
      %p782 = scmp.eq.s32.totalorder %s93, 1
      %p783 = por %p781, %p782
      %p784 = scmp.ne.s32.totalorder %s775, %s776
      %p785 = scmp.eq.s32.totalorder %s93, 0
      %p786 = por %p784, %p785
      %p787 = scmp.ne.s32.totalorder %s775, %s776
      %p788 = scmp.eq.s32.totalorder %s94, 1
      %p789 = por %p787, %p788
      %p791 = scmp.ne.s32.totalorder %s776, %s790
      %p792 = scmp.eq.s32.totalorder %s94, 0
      %p793 = por %p791, %p792
      %s795 = sadd.s32 %s794, 1
      %p798 = scmp.eq.s32.totalorder %s88, 1
      %p799 = scmp.ne.s32.totalorder %s794, %s796
      %p800 = scmp.eq.s32.totalorder %s88, 0
      %p801 = por %p799, %p800
      %p802 = scmp.ne.s32.totalorder %s794, %s796
      %p803 = scmp.eq.s32.totalorder %s93, 1
      %p804 = por %p802, %p803
      %p805 = scmp.ne.s32.totalorder %s796, %s797
      %p806 = scmp.eq.s32.totalorder %s93, 0
      %p807 = por %p805, %p806
      %p808 = scmp.ne.s32.totalorder %s796, %s797
      %p809 = scmp.eq.s32.totalorder %s94, 1
      %p810 = por %p808, %p809
      %p812 = scmp.ne.s32.totalorder %s797, %s811
      %p813 = scmp.eq.s32.totalorder %s94, 0
      %p814 = por %p812, %p813
      %s816 = sadd.s32 %s815, 1
      %p819 = scmp.eq.s32.totalorder %s88, 1
      %p820 = scmp.ne.s32.totalorder %s815, %s817
      %p821 = scmp.eq.s32.totalorder %s88, 0
      %p822 = por %p820, %p821
      %p823 = scmp.ne.s32.totalorder %s815, %s817
      %p824 = scmp.eq.s32.totalorder %s93, 1
      %p825 = por %p823, %p824
      %p826 = scmp.ne.s32.totalorder %s817, %s818
      %p827 = scmp.eq.s32.totalorder %s93, 0
      %p828 = por %p826, %p827
      %p829 = scmp.ne.s32.totalorder %s817, %s818
      %p830 = scmp.eq.s32.totalorder %s94, 1
      %p831 = por %p829, %p830
      %p833 = scmp.ne.s32.totalorder %s818, %s832
      %p834 = scmp.eq.s32.totalorder %s94, 0
      %p835 = por %p833, %p834
      %s837 = sadd.s32 %s836, 1
      %p840 = scmp.eq.s32.totalorder %s88, 1
      %p841 = scmp.ne.s32.totalorder %s836, %s838
      %p842 = scmp.eq.s32.totalorder %s88, 0
      %p843 = por %p841, %p842
      %p844 = scmp.ne.s32.totalorder %s836, %s838
      %p845 = scmp.eq.s32.totalorder %s93, 1
      %p846 = por %p844, %p845
      %p847 = scmp.ne.s32.totalorder %s838, %s839
      %p848 = scmp.eq.s32.totalorder %s93, 0
      %p849 = por %p847, %p848
      %p850 = scmp.ne.s32.totalorder %s838, %s839
      %p851 = scmp.eq.s32.totalorder %s94, 1
      %p852 = por %p850, %p851
      %p854 = scmp.ne.s32.totalorder %s839, %s853
      %p855 = scmp.eq.s32.totalorder %s94, 0
      %p856 = por %p854, %p855
      %s858 = sadd.s32 %s857, 1
      %p861 = scmp.eq.s32.totalorder %s88, 1
      %p862 = scmp.ne.s32.totalorder %s857, %s859
      %p863 = scmp.eq.s32.totalorder %s88, 0
      %p864 = por %p862, %p863
      %p865 = scmp.ne.s32.totalorder %s857, %s859
      %p866 = scmp.eq.s32.totalorder %s93, 1
      %p867 = por %p865, %p866
      %p868 = scmp.ne.s32.totalorder %s859, %s860
      %p869 = scmp.eq.s32.totalorder %s93, 0
      %p870 = por %p868, %p869
      %p871 = scmp.ne.s32.totalorder %s859, %s860
      %p872 = scmp.eq.s32.totalorder %s94, 1
      %p873 = por %p871, %p872
      %p875 = scmp.ne.s32.totalorder %s860, %s874
      %p876 = scmp.eq.s32.totalorder %s94, 0
      %p877 = por %p875, %p876
      %s879 = sadd.s32 %s878, 1
      %p882 = scmp.eq.s32.totalorder %s88, 1
      %p883 = scmp.ne.s32.totalorder %s878, %s880
      %p884 = scmp.eq.s32.totalorder %s88, 0
      %p885 = por %p883, %p884
      %p886 = scmp.ne.s32.totalorder %s878, %s880
      %p887 = scmp.eq.s32.totalorder %s93, 1
      %p888 = por %p886, %p887
      %p889 = scmp.ne.s32.totalorder %s880, %s881
      %p890 = scmp.eq.s32.totalorder %s93, 0
      %p891 = por %p889, %p890
      %p892 = scmp.ne.s32.totalorder %s880, %s881
      %p893 = scmp.eq.s32.totalorder %s94, 1
      %p894 = por %p892, %p893
      %p896 = scmp.ne.s32.totalorder %s881, %s895
      %p897 = scmp.eq.s32.totalorder %s94, 0
      %p898 = por %p896, %p897
      %s900 = sadd.s32 %s899, 1
      %p903 = scmp.eq.s32.totalorder %s88, 1
      %p904 = scmp.ne.s32.totalorder %s899, %s901
      %p905 = scmp.eq.s32.totalorder %s88, 0
      %p906 = por %p904, %p905
      %p907 = scmp.ne.s32.totalorder %s899, %s901
      %p908 = scmp.eq.s32.totalorder %s93, 1
      %p909 = por %p907, %p908
      %p910 = scmp.ne.s32.totalorder %s901, %s902
      %p911 = scmp.eq.s32.totalorder %s93, 0
      %p912 = por %p910, %p911
      %p913 = scmp.ne.s32.totalorder %s901, %s902
      %p914 = scmp.eq.s32.totalorder %s94, 1
      %p915 = por %p913, %p914
      %p917 = scmp.ne.s32.totalorder %s902, %s916
      %p918 = scmp.eq.s32.totalorder %s94, 0
      %p919 = por %p917, %p918
      %s920 = ssub.s32 %s88, %s95
      %p921 = scmp.eq.s32.totalorder %s920, 0
      %s923 = sadd.s32 %s922, 1
      %s924 = scalar_select %p921, %s922, %s923
      %p927 = pneg %p921
      %p928 = scmp.eq.s32.totalorder %s88, 1
      %p929 = por %p927, %p928
      %p930 = scmp.ne.s32.totalorder %s922, %s925
      %p931 = scmp.eq.s32.totalorder %s88, 0
      %p932 = por %p930, %p931
      %p933 = scmp.ne.s32.totalorder %s922, %s925
      %p934 = scmp.eq.s32.totalorder %s93, 1
      %p935 = por %p933, %p934
      %p936 = scmp.ne.s32.totalorder %s925, %s926
      %p937 = scmp.eq.s32.totalorder %s93, 0
      %p938 = por %p936, %p937
      %p939 = scmp.ne.s32.totalorder %s925, %s926
      %p940 = scmp.eq.s32.totalorder %s94, 1
      %p941 = por %p939, %p940
      %p943 = scmp.ne.s32.totalorder %s926, %s942
      %p944 = scmp.eq.s32.totalorder %s94, 0
      %p945 = por %p943, %p944
      %p946 = scmp.le.s32.totalorder 1, %s88
      %p947 = scmp.lt.s32.totalorder %s88, 3
      %p948 = pnand %p946, %p947
      %p949 = pneg %p948
      // Predicated region
      $region9: #{tpu_custom_call.1} parent=5 // pred_check
        _
      $region10: #{tpu_custom_call.1} parent=5 // pred_check_branch
        %951 = sbr.rel (%p948) target = $region12
      $region11: #{tpu_custom_call.1} parent=5 // pred_region
        %s952 = ssub.s32 %s88, 1
        // Predicated region
        $region13: #{tpu_custom_call.1} parent=11 // pred_check
          %p953 = pneg %p135
        $region14: #{tpu_custom_call.1} parent=11 // pred_check_branch
          %955 = sbr.rel (%p953) target = $region16
        $region15: #{tpu_custom_call.1} parent=11 // pred_region
          _
        $region16: #{tpu_custom_call.1} parent=11 // pred_fallthru
          _
        // Predicated region
        $region17: #{tpu_custom_call.1} parent=11 // pred_check
          %p956 = pneg %p156
        $region18: #{tpu_custom_call.1} parent=11 // pred_check_branch
          %958 = sbr.rel (%p956) target = $region20
        $region19: #{tpu_custom_call.1} parent=11 // pred_region
          _
        $region20: #{tpu_custom_call.1} parent=11 // pred_fallthru
          _
        // Predicated region
        $region21: #{tpu_custom_call.1} parent=11 // pred_check
          %p959 = pneg %p177
        $region22: #{tpu_custom_call.1} parent=11 // pred_check_branch
          %961 = sbr.rel (%p959) target = $region24
        $region23: #{tpu_custom_call.1} parent=11 // pred_region
          _
        $region24: #{tpu_custom_call.1} parent=11 // pred_fallthru
          _
        // Predicated region
        $region25: #{tpu_custom_call.1} parent=11 // pred_check
          %p962 = pneg %p198
        $region26: #{tpu_custom_call.1} parent=11 // pred_check_branch
          %964 = sbr.rel (%p962) target = $region28
        $region27: #{tpu_custom_call.1} parent=11 // pred_region
          _
        $region28: #{tpu_custom_call.1} parent=11 // pred_fallthru
          _
        // Predicated region
        $region29: #{tpu_custom_call.1} parent=11 // pred_check
          %p965 = pneg %p219
        $region30: #{tpu_custom_call.1} parent=11 // pred_check_branch
          %967 = sbr.rel (%p965) target = $region32
        $region31: #{tpu_custom_call.1} parent=11 // pred_region
          _
        $region32: #{tpu_custom_call.1} parent=11 // pred_fallthru
          _
        // Predicated region
        $region33: #{tpu_custom_call.1} parent=11 // pred_check
          %p968 = pneg %p240
        $region34: #{tpu_custom_call.1} parent=11 // pred_check_branch
          %970 = sbr.rel (%p968) target = $region36
        $region35: #{tpu_custom_call.1} parent=11 // pred_region
          _
        $region36: #{tpu_custom_call.1} parent=11 // pred_fallthru
          _
        // Predicated region
        $region37: #{tpu_custom_call.1} parent=11 // pred_check
          %p971 = pneg %p261
        $region38: #{tpu_custom_call.1} parent=11 // pred_check_branch
          %973 = sbr.rel (%p971) target = $region40
        $region39: #{tpu_custom_call.1} parent=11 // pred_region
          _
        $region40: #{tpu_custom_call.1} parent=11 // pred_fallthru
          _
        // Predicated region
        $region41: #{tpu_custom_call.1} parent=11 // pred_check
          %p974 = pneg %p282
        $region42: #{tpu_custom_call.1} parent=11 // pred_check_branch
          %976 = sbr.rel (%p974) target = $region44
        $region43: #{tpu_custom_call.1} parent=11 // pred_region
          _
        $region44: #{tpu_custom_call.1} parent=11 // pred_fallthru
          _
        // Predicated region
        $region45: #{tpu_custom_call.1} parent=11 // pred_check
          %p977 = pneg %p303
        $region46: #{tpu_custom_call.1} parent=11 // pred_check_branch
          %979 = sbr.rel (%p977) target = $region48
        $region47: #{tpu_custom_call.1} parent=11 // pred_region
          _
        $region48: #{tpu_custom_call.1} parent=11 // pred_fallthru
          _
        // Predicated region
        $region49: #{tpu_custom_call.1} parent=11 // pred_check
          %p980 = pneg %p324
        $region50: #{tpu_custom_call.1} parent=11 // pred_check_branch
          %982 = sbr.rel (%p980) target = $region52
        $region51: #{tpu_custom_call.1} parent=11 // pred_region
          _
        $region52: #{tpu_custom_call.1} parent=11 // pred_fallthru
          _
        // Predicated region
        $region53: #{tpu_custom_call.1} parent=11 // pred_check
          %p983 = pneg %p345
        $region54: #{tpu_custom_call.1} parent=11 // pred_check_branch
          %985 = sbr.rel (%p983) target = $region56
        $region55: #{tpu_custom_call.1} parent=11 // pred_region
          _
        $region56: #{tpu_custom_call.1} parent=11 // pred_fallthru
          _
        // Predicated region
        $region57: #{tpu_custom_call.1} parent=11 // pred_check
          %p986 = pneg %p366
        $region58: #{tpu_custom_call.1} parent=11 // pred_check_branch
          %988 = sbr.rel (%p986) target = $region60
        $region59: #{tpu_custom_call.1} parent=11 // pred_region
          _
        $region60: #{tpu_custom_call.1} parent=11 // pred_fallthru
          _
        // Predicated region
        $region61: #{tpu_custom_call.1} parent=11 // pred_check
          %p989 = pneg %p387
        $region62: #{tpu_custom_call.1} parent=11 // pred_check_branch
          %991 = sbr.rel (%p989) target = $region64
        $region63: #{tpu_custom_call.1} parent=11 // pred_region
          _
        $region64: #{tpu_custom_call.1} parent=11 // pred_fallthru
          _
        // Predicated region
        $region65: #{tpu_custom_call.1} parent=11 // pred_check
          %p992 = pneg %p408
        $region66: #{tpu_custom_call.1} parent=11 // pred_check_branch
          %994 = sbr.rel (%p992) target = $region68
        $region67: #{tpu_custom_call.1} parent=11 // pred_region
          _
        $region68: #{tpu_custom_call.1} parent=11 // pred_fallthru
          _
        // Predicated region
        $region69: #{tpu_custom_call.1} parent=11 // pred_check
          %p995 = pneg %p429
        $region70: #{tpu_custom_call.1} parent=11 // pred_check_branch
          %997 = sbr.rel (%p995) target = $region72
        $region71: #{tpu_custom_call.1} parent=11 // pred_region
          _
        $region72: #{tpu_custom_call.1} parent=11 // pred_fallthru
          _
        // Predicated region
        $region73: #{tpu_custom_call.1} parent=11 // pred_check
          %p998 = pneg %p450
        $region74: #{tpu_custom_call.1} parent=11 // pred_check_branch
          %1000 = sbr.rel (%p998) target = $region76
        $region75: #{tpu_custom_call.1} parent=11 // pred_region
          _
        $region76: #{tpu_custom_call.1} parent=11 // pred_fallthru
          _
        // Predicated region
        $region77: #{tpu_custom_call.1} parent=11 // pred_check
          %p1001 = pneg %p471
        $region78: #{tpu_custom_call.1} parent=11 // pred_check_branch
          %1003 = sbr.rel (%p1001) target = $region80
        $region79: #{tpu_custom_call.1} parent=11 // pred_region
          _
        $region80: #{tpu_custom_call.1} parent=11 // pred_fallthru
          _
        // Predicated region
        $region81: #{tpu_custom_call.1} parent=11 // pred_check
          %p1004 = pneg %p492
        $region82: #{tpu_custom_call.1} parent=11 // pred_check_branch
          %1006 = sbr.rel (%p1004) target = $region84
        $region83: #{tpu_custom_call.1} parent=11 // pred_region
          _
        $region84: #{tpu_custom_call.1} parent=11 // pred_fallthru
          _
        // Predicated region
        $region85: #{tpu_custom_call.1} parent=11 // pred_check
          %p1007 = pneg %p513
        $region86: #{tpu_custom_call.1} parent=11 // pred_check_branch
          %1009 = sbr.rel (%p1007) target = $region88
        $region87: #{tpu_custom_call.1} parent=11 // pred_region
          _
        $region88: #{tpu_custom_call.1} parent=11 // pred_fallthru
          _
        // Predicated region
        $region89: #{tpu_custom_call.1} parent=11 // pred_check
          %p1010 = pneg %p534
        $region90: #{tpu_custom_call.1} parent=11 // pred_check_branch
          %1012 = sbr.rel (%p1010) target = $region92
        $region91: #{tpu_custom_call.1} parent=11 // pred_region
          _
        $region92: #{tpu_custom_call.1} parent=11 // pred_fallthru
          _
        // Predicated region
        $region93: #{tpu_custom_call.1} parent=11 // pred_check
          %p1013 = pneg %p555
        $region94: #{tpu_custom_call.1} parent=11 // pred_check_branch
          %1015 = sbr.rel (%p1013) target = $region96
        $region95: #{tpu_custom_call.1} parent=11 // pred_region
          _
        $region96: #{tpu_custom_call.1} parent=11 // pred_fallthru
          _
        // Predicated region
        $region97: #{tpu_custom_call.1} parent=11 // pred_check
          %p1016 = pneg %p576
        $region98: #{tpu_custom_call.1} parent=11 // pred_check_branch
          %1018 = sbr.rel (%p1016) target = $region100
        $region99: #{tpu_custom_call.1} parent=11 // pred_region
          _
        $region100: #{tpu_custom_call.1} parent=11 // pred_fallthru
          _
        // Predicated region
        $region101: #{tpu_custom_call.1} parent=11 // pred_check
          %p1019 = pneg %p597
        $region102: #{tpu_custom_call.1} parent=11 // pred_check_branch
          %1021 = sbr.rel (%p1019) target = $region104
        $region103: #{tpu_custom_call.1} parent=11 // pred_region
          _
        $region104: #{tpu_custom_call.1} parent=11 // pred_fallthru
          _
        // Predicated region
        $region105: #{tpu_custom_call.1} parent=11 // pred_check
          %p1022 = pneg %p618
        $region106: #{tpu_custom_call.1} parent=11 // pred_check_branch
          %1024 = sbr.rel (%p1022) target = $region108
        $region107: #{tpu_custom_call.1} parent=11 // pred_region
          _
        $region108: #{tpu_custom_call.1} parent=11 // pred_fallthru
          _
        // Predicated region
        $region109: #{tpu_custom_call.1} parent=11 // pred_check
          %p1025 = pneg %p639
        $region110: #{tpu_custom_call.1} parent=11 // pred_check_branch
          %1027 = sbr.rel (%p1025) target = $region112
        $region111: #{tpu_custom_call.1} parent=11 // pred_region
          _
        $region112: #{tpu_custom_call.1} parent=11 // pred_fallthru
          _
        // Predicated region
        $region113: #{tpu_custom_call.1} parent=11 // pred_check
          %p1028 = pneg %p660
        $region114: #{tpu_custom_call.1} parent=11 // pred_check_branch
          %1030 = sbr.rel (%p1028) target = $region116
        $region115: #{tpu_custom_call.1} parent=11 // pred_region
          _
        $region116: #{tpu_custom_call.1} parent=11 // pred_fallthru
          _
        // Predicated region
        $region117: #{tpu_custom_call.1} parent=11 // pred_check
          %p1031 = pneg %p681
        $region118: #{tpu_custom_call.1} parent=11 // pred_check_branch
          %1033 = sbr.rel (%p1031) target = $region120
        $region119: #{tpu_custom_call.1} parent=11 // pred_region
          _
        $region120: #{tpu_custom_call.1} parent=11 // pred_fallthru
          _
        // Predicated region
        $region121: #{tpu_custom_call.1} parent=11 // pred_check
          %p1034 = pneg %p702
        $region122: #{tpu_custom_call.1} parent=11 // pred_check_branch
          %1036 = sbr.rel (%p1034) target = $region124
        $region123: #{tpu_custom_call.1} parent=11 // pred_region
          _
        $region124: #{tpu_custom_call.1} parent=11 // pred_fallthru
          _
        // Predicated region
        $region125: #{tpu_custom_call.1} parent=11 // pred_check
          %p1037 = pneg %p723
        $region126: #{tpu_custom_call.1} parent=11 // pred_check_branch
          %1039 = sbr.rel (%p1037) target = $region128
        $region127: #{tpu_custom_call.1} parent=11 // pred_region
          _
        $region128: #{tpu_custom_call.1} parent=11 // pred_fallthru
          _
        // Predicated region
        $region129: #{tpu_custom_call.1} parent=11 // pred_check
          %p1040 = pneg %p744
        $region130: #{tpu_custom_call.1} parent=11 // pred_check_branch
          %1042 = sbr.rel (%p1040) target = $region132
        $region131: #{tpu_custom_call.1} parent=11 // pred_region
          _
        $region132: #{tpu_custom_call.1} parent=11 // pred_fallthru
          _
        // Predicated region
        $region133: #{tpu_custom_call.1} parent=11 // pred_check
          %p1043 = pneg %p765
        $region134: #{tpu_custom_call.1} parent=11 // pred_check_branch
          %1045 = sbr.rel (%p1043) target = $region136
        $region135: #{tpu_custom_call.1} parent=11 // pred_region
          _
        $region136: #{tpu_custom_call.1} parent=11 // pred_fallthru
          _
        // Predicated region
        $region137: #{tpu_custom_call.1} parent=11 // pred_check
          %p1046 = pneg %p786
        $region138: #{tpu_custom_call.1} parent=11 // pred_check_branch
          %1048 = sbr.rel (%p1046) target = $region140
        $region139: #{tpu_custom_call.1} parent=11 // pred_region
          _
        $region140: #{tpu_custom_call.1} parent=11 // pred_fallthru
          _
        // Predicated region
        $region141: #{tpu_custom_call.1} parent=11 // pred_check
          %p1049 = pneg %p807
        $region142: #{tpu_custom_call.1} parent=11 // pred_check_branch
          %1051 = sbr.rel (%p1049) target = $region144
        $region143: #{tpu_custom_call.1} parent=11 // pred_region
          _
        $region144: #{tpu_custom_call.1} parent=11 // pred_fallthru
          _
        // Predicated region
        $region145: #{tpu_custom_call.1} parent=11 // pred_check
          %p1052 = pneg %p828
        $region146: #{tpu_custom_call.1} parent=11 // pred_check_branch
          %1054 = sbr.rel (%p1052) target = $region148
        $region147: #{tpu_custom_call.1} parent=11 // pred_region
          _
        $region148: #{tpu_custom_call.1} parent=11 // pred_fallthru
          _
        // Predicated region
        $region149: #{tpu_custom_call.1} parent=11 // pred_check
          %p1055 = pneg %p849
        $region150: #{tpu_custom_call.1} parent=11 // pred_check_branch
          %1057 = sbr.rel (%p1055) target = $region152
        $region151: #{tpu_custom_call.1} parent=11 // pred_region
          _
        $region152: #{tpu_custom_call.1} parent=11 // pred_fallthru
          _
        // Predicated region
        $region153: #{tpu_custom_call.1} parent=11 // pred_check
          %p1058 = pneg %p870
        $region154: #{tpu_custom_call.1} parent=11 // pred_check_branch
          %1060 = sbr.rel (%p1058) target = $region156
        $region155: #{tpu_custom_call.1} parent=11 // pred_region
          _
        $region156: #{tpu_custom_call.1} parent=11 // pred_fallthru
          _
        // Predicated region
        $region157: #{tpu_custom_call.1} parent=11 // pred_check
          %p1061 = pneg %p891
        $region158: #{tpu_custom_call.1} parent=11 // pred_check_branch
          %1063 = sbr.rel (%p1061) target = $region160
        $region159: #{tpu_custom_call.1} parent=11 // pred_region
          _
        $region160: #{tpu_custom_call.1} parent=11 // pred_fallthru
          _
        // Predicated region
        $region161: #{tpu_custom_call.1} parent=11 // pred_check
          %p1064 = pneg %p912
        $region162: #{tpu_custom_call.1} parent=11 // pred_check_branch
          %1066 = sbr.rel (%p1064) target = $region164
        $region163: #{tpu_custom_call.1} parent=11 // pred_region
          _
        $region164: #{tpu_custom_call.1} parent=11 // pred_fallthru
          _
      $region12: #{tpu_custom_call.1} parent=5 // pred_fallthru
        _
      %p1067 = scmp.lt.s32.totalorder %s88, 2
      // Predicated region
      $region165: #{tpu_custom_call.1} parent=5 // pred_check
        %p1068 = pneg %p1067
      $region166: #{tpu_custom_call.1} parent=5 // pred_check_branch
        %1070 = sbr.rel (%p1068) target = $region168
      $region167: #{tpu_custom_call.1} parent=5 // pred_region
        // Predicated region
        $region169: #{tpu_custom_call.1} parent=167 // pred_check
          %p1071 = pneg %p108
        $region170: #{tpu_custom_call.1} parent=167 // pred_check_branch
          %1073 = sbr.rel (%p1071) target = $region172
        $region171: #{tpu_custom_call.1} parent=167 // pred_region
          %p1074 = scmp.lt.s32.totalorder %s88, 1
          %s1075 = scalar_select %p1074, %s88, 1
          %s1076 = smul.addr %s1075, 8
          %s1077 = smul.addr %s1076, 8
          %s1078 = scalar_lea.vmem %s1, %s1077
        $region172: #{tpu_custom_call.1} parent=167 // pred_fallthru
          _
      $region168: #{tpu_custom_call.1} parent=5 // pred_fallthru
        _
      %p1079 = scmp.le.s32.totalorder 1, %s88
      %p1080 = scmp.lt.s32.totalorder %s88, 3
      %p1081 = pnand %p1079, %p1080
      %p1082 = pneg %p1081
      // Predicated region
      $region173: #{tpu_custom_call.1} parent=5 // pred_check
        _
      $region174: #{tpu_custom_call.1} parent=5 // pred_check_branch
        %1084 = sbr.rel (%p1081) target = $region176
      $region175: #{tpu_custom_call.1} parent=5 // pred_region
        %s1085 = ssub.s32 %s88, 1
        %p1086 = scmp.lt.s32.totalorder %s93, 1
        %s1087 = scalar_select %p1086, %s93, 1
        %s1088 = smul.addr %s1087, 8
        %s1089 = smul.addr %s1088, 8
        %s1090 = scalar_lea.vmem %s1, %s1089
        %p1091 = pneg %p114
        %p1092 = pneg %p111
        %p1093 = pneg %p135
        %p1094 = pneg %p132
        %p1095 = pneg %p156
        %p1096 = pneg %p153
        %p1097 = pneg %p177
        %p1098 = pneg %p174
        %p1099 = pneg %p198
        %p1100 = pneg %p195
        %p1101 = pneg %p219
        %p1102 = pneg %p216
        %p1103 = pneg %p240
        %p1104 = pneg %p237
        %p1105 = pneg %p261
        %p1106 = pneg %p258
        %p1107 = pneg %p282
        %p1108 = pneg %p279
        %p1109 = pneg %p303
        %p1110 = pneg %p300
        %p1111 = pneg %p324
        %p1112 = pneg %p321
        %p1113 = pneg %p345
        %p1114 = pneg %p342
        %p1115 = pneg %p366
        %p1116 = pneg %p363
        %p1117 = pneg %p387
        %p1118 = pneg %p384
        %p1119 = pneg %p408
        %p1120 = pneg %p405
        %p1121 = pneg %p429
        %p1122 = pneg %p426
        %p1123 = pneg %p450
        %p1124 = pneg %p447
        %p1125 = pneg %p471
        %p1126 = pneg %p468
        %p1127 = pneg %p492
        %p1128 = pneg %p489
        %p1129 = pneg %p513
        %p1130 = pneg %p510
        %p1131 = pneg %p534
        %p1132 = pneg %p531
        %p1133 = pneg %p555
        %p1134 = pneg %p552
        %p1135 = pneg %p576
        %p1136 = pneg %p573
        %p1137 = pneg %p597
        %p1138 = pneg %p594
        %p1139 = pneg %p618
        %p1140 = pneg %p615
        %p1141 = pneg %p639
        %p1142 = pneg %p636
        %p1143 = pneg %p660
        %p1144 = pneg %p657
        %p1145 = pneg %p681
        %p1146 = pneg %p678
        %p1147 = pneg %p702
        %p1148 = pneg %p699
        %p1149 = pneg %p723
        %p1150 = pneg %p720
        %p1151 = pneg %p744
        %p1152 = pneg %p741
        %p1153 = pneg %p765
        %p1154 = pneg %p762
        %p1155 = pneg %p786
        %p1156 = pneg %p783
        %p1157 = pneg %p807
        %p1158 = pneg %p804
        %p1159 = pneg %p828
        %p1160 = pneg %p825
        %p1161 = pneg %p849
        %p1162 = pneg %p846
        %p1163 = pneg %p870
        %p1164 = pneg %p867
        %p1165 = pneg %p891
        %p1166 = pneg %p888
        %p1167 = pneg %p912
        %p1168 = pneg %p909
        %p1169 = pneg %p938
        %p1170 = pneg %p935
        %s1171 = sand.u32 %s925, 1
        %s1172 = scalar_lea.sflag [#allocation3], %s1171
        %s1173 = sand.u32 %s925, 1
        %s1174 = scalar_lea.vmem [#allocation2], %s1173
        %p1175 = scmp.lt.s32.totalorder %s93, 1
        %s1176 = scalar_select %p1175, %s93, 1
        %s1177 = smul.addr %s1176, 8
        %s1178 = smul.addr %s1177, 8
        %s1179 = scalar_lea.vmem %s1, %s1178
        %v1180 = vld [vmem:[%s1179] sm:$0xff]
        %v1181 = vld [vmem:[%s1179 + $0x8] sm:$0xff]
        %v1182 = vld [vmem:[%s1179 + $0x10] sm:$0xff]
        %v1183 = vld [vmem:[%s1179 + $0x18] sm:$0xff]
        %v1184 = vld [vmem:[%s1179 + $0x20] sm:$0xff]
        %v1185 = vld [vmem:[%s1179 + $0x28] sm:$0xff]
        %v1186 = vld [vmem:[%s1179 + $0x30] sm:$0xff]
        %v1187 = vld [vmem:[%s1179 + $0x38] sm:$0xff]
        %v1188 = vld [vmem:[%s77] sm:$0xff]
        %v1189 = vld [vmem:[%s77 + $0x8] sm:$0xff]
        %v1190 = vld [vmem:[%s77 + $0x10] sm:$0xff]
        %v1191 = vld [vmem:[%s77 + $0x18] sm:$0xff]
        %v1192 = vld [vmem:[%s77 + $0x20] sm:$0xff]
        %v1193 = vld [vmem:[%s77 + $0x28] sm:$0xff]
        %v1194 = vld [vmem:[%s77 + $0x30] sm:$0xff]
        %v1195 = vld [vmem:[%s77 + $0x38] sm:$0xff]
        %v1196 = vld [vmem:[%s77 + $0x40] sm:$0xff]
        %v1197 = vld [vmem:[%s77 + $0x48] sm:$0xff]
        %v1198 = vld [vmem:[%s77 + $0x50] sm:$0xff]
        %v1199 = vld [vmem:[%s77 + $0x58] sm:$0xff]
        %v1200 = vld [vmem:[%s77 + $0x60] sm:$0xff]
        %v1201 = vld [vmem:[%s77 + $0x68] sm:$0xff]
        %v1202 = vld [vmem:[%s77 + $0x70] sm:$0xff]
        %v1203 = vld [vmem:[%s77 + $0x78] sm:$0xff]
        %v1204 = vld [vmem:[%s77 + $0x80] sm:$0xff]
        %v1205 = vld [vmem:[%s77 + $0x88] sm:$0xff]
        %v1206 = vld [vmem:[%s77 + $0x90] sm:$0xff]
        %v1207 = vld [vmem:[%s77 + $0x98] sm:$0xff]
        %v1208 = vld [vmem:[%s77 + $0xa0] sm:$0xff]
        %v1209 = vld [vmem:[%s77 + $0xa8] sm:$0xff]
        %v1210 = vld [vmem:[%s77 + $0xb0] sm:$0xff]
        %v1211 = vld [vmem:[%s77 + $0xb8] sm:$0xff]
        %v1212 = vld [vmem:[%s77 + $0xc0] sm:$0xff]
        %v1213 = vld [vmem:[%s77 + $0xc8] sm:$0xff]
        %v1214 = vld [vmem:[%s77 + $0xd0] sm:$0xff]
        %v1215 = vld [vmem:[%s77 + $0xd8] sm:$0xff]
        %v1216 = vld [vmem:[%s77 + $0xe0] sm:$0xff]
        %v1217 = vld [vmem:[%s77 + $0xe8] sm:$0xff]
        %v1218 = vld [vmem:[%s77 + $0xf0] sm:$0xff]
        %v1219 = vld [vmem:[%s77 + $0xf8] sm:$0xff]
        %v1220 = vld [vmem:[%s77 + $0x100] sm:$0xff]
        %v1221 = vld [vmem:[%s77 + $0x108] sm:$0xff]
        %v1222 = vld [vmem:[%s77 + $0x110] sm:$0xff]
        %v1223 = vld [vmem:[%s77 + $0x118] sm:$0xff]
        %v1224 = vld [vmem:[%s77 + $0x120] sm:$0xff]
        %v1225 = vld [vmem:[%s77 + $0x128] sm:$0xff]
        %v1226 = vld [vmem:[%s77 + $0x130] sm:$0xff]
        %v1227 = vld [vmem:[%s77 + $0x138] sm:$0xff]
        %v1228 = vld [vmem:[%s77 + $0x140] sm:$0xff]
        %v1229 = vld [vmem:[%s77 + $0x148] sm:$0xff]
        %v1230 = vld [vmem:[%s77 + $0x150] sm:$0xff]
        %v1231 = vld [vmem:[%s77 + $0x158] sm:$0xff]
        %v1232 = vld [vmem:[%s77 + $0x160] sm:$0xff]
        %v1233 = vld [vmem:[%s77 + $0x168] sm:$0xff]
        %v1234 = vld [vmem:[%s77 + $0x170] sm:$0xff]
        %v1235 = vld [vmem:[%s77 + $0x178] sm:$0xff]
        %v1236 = vld [vmem:[%s77 + $0x180] sm:$0xff]
        %v1237 = vld [vmem:[%s77 + $0x188] sm:$0xff]
        %v1238 = vld [vmem:[%s77 + $0x190] sm:$0xff]
        %v1239 = vld [vmem:[%s77 + $0x198] sm:$0xff]
        %v1240 = vld [vmem:[%s77 + $0x1a0] sm:$0xff]
        %v1241 = vld [vmem:[%s77 + $0x1a8] sm:$0xff]
        %v1242 = vld [vmem:[%s77 + $0x1b0] sm:$0xff]
        %v1243 = vld [vmem:[%s77 + $0x1b8] sm:$0xff]
        %v1244 = vld [vmem:[%s77 + $0x1c0] sm:$0xff]
        %v1245 = vld [vmem:[%s77 + $0x1c8] sm:$0xff]
        %v1246 = vld [vmem:[%s77 + $0x1d0] sm:$0xff]
        %v1247 = vld [vmem:[%s77 + $0x1d8] sm:$0xff]
        %v1248 = vld [vmem:[%s77 + $0x1e0] sm:$0xff]
        %v1249 = vld [vmem:[%s77 + $0x1e8] sm:$0xff]
        %v1250 = vld [vmem:[%s77 + $0x1f0] sm:$0xff]
        %v1251 = vld [vmem:[%s77 + $0x1f8] sm:$0xff]
        %v1252 = vld [vmem:[%s77 + $0x200] sm:$0xff]
        %v1253 = vld [vmem:[%s77 + $0x208] sm:$0xff]
        %v1254 = vld [vmem:[%s77 + $0x210] sm:$0xff]
        %v1255 = vld [vmem:[%s77 + $0x218] sm:$0xff]
        %v1256 = vld [vmem:[%s77 + $0x220] sm:$0xff]
        %v1257 = vld [vmem:[%s77 + $0x228] sm:$0xff]
        %v1258 = vld [vmem:[%s77 + $0x230] sm:$0xff]
        %v1259 = vld [vmem:[%s77 + $0x238] sm:$0xff]
        %v1260 = vld [vmem:[%s3] sm:$0xf]
        %v1261 = vld [vmem:[%s5] sm:$0x1]
        %v1263 = vperm.slane %v1261, 0
        %vm1265 = vcmask 31744
        %v1267 = vsel %vm1265, %v1180, 0
        %v1270 = vsel %vm1265, %v1181, 0
        %v1273 = vsel %vm1265, %v1182, 0
        %v1276 = vsel %vm1265, %v1183, 0
        %v1279 = vsel %vm1265, %v1184, 0
        %v1282 = vsel %vm1265, %v1185, 0
        %v1285 = vsel %vm1265, %v1186, 0
        %v1288 = vsel %vm1265, %v1187, 0
        %vm1290 = vcmask 1043456
        %v1292 = vsel %vm1290, %v1260, 0
        %1294 = vmatpush.msra.mxu0 0.0
        %1295 = vmatpush.msra.mxu0 0.0
        %1296 = vmatpush.msra.mxu0 0.0
        %1297 = vmatpush.msra.mxu0 0.0
        %1298 = vmatpush.msra.mxu0 0.0
        %1299 = vmatpush.msra.mxu0 0.0
        %1300 = vmatpush.msra.mxu0 0.0
        %1301 = vmatpush.msra.mxu0 0.0
        %1302 = vmatpush.msra.mxu0 0.0
        %1303 = vmatpush.msra.mxu0 0.0
        %1304 = vmatpush.msra.mxu0 0.0
        %1305 = vmatpush.msra.mxu0 0.0
        %1306 = vmatpush.msra.mxu0 0.0
        %1307 = vmatpush.msra.mxu0 0.0
        %1308 = vmatpush.msra.mxu0 0.0
        %1309 = vmatpush.msra.mxu0 %v1292
        %1310 = vmatmul.f32.gmra.mxu0 %v1267
        %v1311 = vpop.f32.mrf.mxu0
        %v1312 = vadd.f32 %v1263, %v1311
        %1313 = vmatmul.f32.gmra.mxu0 %v1270
        %v1314 = vpop.f32.mrf.mxu0
        %v1315 = vadd.f32 %v1263, %v1314
        %1316 = vmatmul.f32.gmra.mxu0 %v1273
        %v1317 = vpop.f32.mrf.mxu0
        %v1318 = vadd.f32 %v1263, %v1317
        %1319 = vmatmul.f32.gmra.mxu0 %v1276
        %v1320 = vpop.f32.mrf.mxu0
        %v1321 = vadd.f32 %v1263, %v1320
        %1322 = vmatmul.f32.gmra.mxu0 %v1279
        %v1323 = vpop.f32.mrf.mxu0
        %v1324 = vadd.f32 %v1263, %v1323
        %1325 = vmatmul.f32.gmra.mxu0 %v1282
        %v1326 = vpop.f32.mrf.mxu0
        %v1327 = vadd.f32 %v1263, %v1326
        %1328 = vmatmul.f32.gmra.mxu0 %v1285
        %v1329 = vpop.f32.mrf.mxu0
        %v1330 = vadd.f32 %v1263, %v1329
        %1331 = vmatmul.f32.gmra.mxu0 %v1288
        %v1332 = vpop.f32.mrf.mxu0
        %v1333 = vadd.f32 %v1263, %v1332
        %1334 = vdwg.mxu0
        %v1335 = vld [vmem:[%s7] sm:$0x1]
        %v1337 = vperm.slane %v1335, 0
        %v1339 = vmul.f32 %v1312, %v1337
        %v1340 = vmul.f32 %v1315, %v1337
        %v1341 = vmul.f32 %v1318, %v1337
        %v1342 = vmul.f32 %v1321, %v1337
        %v1343 = vmul.f32 %v1324, %v1337
        %v1344 = vmul.f32 %v1327, %v1337
        %v1345 = vmul.f32 %v1330, %v1337
        %v1346 = vmul.f32 %v1333, %v1337
        %v1347 = vld [vmem:[%s9] sm:$0x1]
        %v1349 = vperm.slane %v1347, 0
        %v1351 = vadd.f32 %v1339, %v1349
        %v1352 = vadd.f32 %v1340, %v1349
        %v1353 = vadd.f32 %v1341, %v1349
        %v1354 = vadd.f32 %v1342, %v1349
        %v1355 = vadd.f32 %v1343, %v1349
        %v1356 = vadd.f32 %v1344, %v1349
        %v1357 = vadd.f32 %v1345, %v1349
        %v1358 = vadd.f32 %v1346, %v1349
        %v1359 = vmax.f32 %v1351, 0.0
        %v1360 = vmax.f32 %v1352, 0.0
        %v1361 = vmax.f32 %v1353, 0.0
        %v1362 = vmax.f32 %v1354, 0.0
        %v1363 = vmax.f32 %v1355, 0.0
        %v1364 = vmax.f32 %v1356, 0.0
        %v1365 = vmax.f32 %v1357, 0.0
        %v1366 = vmax.f32 %v1358, 0.0
        %v1367 = vld [vmem:[%s11] sm:$0xff]
        %v1368 = vld [vmem:[%s11 + $0x8] sm:$0xff]
        %v1369 = vld [vmem:[%s11 + $0x10] sm:$0xff]
        %v1370 = vld [vmem:[%s13] sm:$0x1]
        %v1372 = vperm.slane %v1370, 0
        %vm1374 = vcmask 195584
        %v1376 = vsel %vm1374, %v1359, 0
        %v1379 = vsel %vm1374, %v1360, 0
        %v1382 = vsel %vm1374, %v1361, 0
        %v1385 = vsel %vm1374, %v1362, 0
        %v1388 = vsel %vm1374, %v1363, 0
        %v1391 = vsel %vm1374, %v1364, 0
        %v1394 = vsel %vm1374, %v1365, 0
        %v1397 = vsel %vm1374, %v1366, 0
        %1399 = vmatpush.msra.mxu0 0.0
        %1400 = vmatpush.msra.mxu0 0.0
        %1401 = vmatpush.msra.mxu0 0.0
        %1402 = vmatpush.msra.mxu0 0.0
        %1403 = vmatpush.msra.mxu0 0.0
        %1404 = vmatpush.msra.mxu0 0.0
        %1405 = vmatpush.msra.mxu0 0.0
        %1406 = vmatpush.msra.mxu0 0.0
        %1407 = vmatpush.msra.mxu0 0.0
        %1408 = vmatpush.msra.mxu0 0.0
        %1409 = vmatpush.msra.mxu0 0.0
        %1410 = vmatpush.msra.mxu0 0.0
        %1411 = vmatpush.msra.mxu0 0.0
        %1412 = vmatpush.msra.mxu0 %v1369
        %1413 = vmatpush.msra.mxu0 %v1368
        %1414 = vmatpush.msra.mxu0 %v1367
        %1415 = vmatmul.f32.gmra.mxu0 %v1376
        %v1416 = vpop.f32.mrf.mxu0
        %v1417 = vadd.f32 %v1372, %v1416
        %1418 = vmatmul.f32.gmra.mxu0 %v1379
        %v1419 = vpop.f32.mrf.mxu0
        %v1420 = vadd.f32 %v1372, %v1419
        %1421 = vmatmul.f32.gmra.mxu0 %v1382
        %v1422 = vpop.f32.mrf.mxu0
        %v1423 = vadd.f32 %v1372, %v1422
        %1424 = vmatmul.f32.gmra.mxu0 %v1385
        %v1425 = vpop.f32.mrf.mxu0
        %v1426 = vadd.f32 %v1372, %v1425
        %1427 = vmatmul.f32.gmra.mxu0 %v1388
        %v1428 = vpop.f32.mrf.mxu0
        %v1429 = vadd.f32 %v1372, %v1428
        %1430 = vmatmul.f32.gmra.mxu0 %v1391
        %v1431 = vpop.f32.mrf.mxu0
        %v1432 = vadd.f32 %v1372, %v1431
        %1433 = vmatmul.f32.gmra.mxu0 %v1394
        %v1434 = vpop.f32.mrf.mxu0
        %v1435 = vadd.f32 %v1372, %v1434
        %1436 = vmatmul.f32.gmra.mxu0 %v1397
        %v1437 = vpop.f32.mrf.mxu0
        %v1438 = vadd.f32 %v1372, %v1437
        %1439 = vdwg.mxu0
        %1448 = vrot.lane.b32.xlu0 %v1417, 24
        %v1449 = vpop.permute.xlu0 %1448
        %1450 = vrot.lane.b32.xlu0 %v1420, 24
        %v1451 = vpop.permute.xlu0 %1450
        %1452 = vrot.lane.b32.xlu0 %v1423, 24
        %v1453 = vpop.permute.xlu0 %1452
        %1454 = vrot.lane.b32.xlu0 %v1426, 24
        %v1455 = vpop.permute.xlu0 %1454
        %1456 = vrot.lane.b32.xlu0 %v1429, 24
        %v1457 = vpop.permute.xlu0 %1456
        %1458 = vrot.lane.b32.xlu0 %v1432, 24
        %v1459 = vpop.permute.xlu0 %1458
        %1460 = vrot.lane.b32.xlu0 %v1435, 24
        %v1461 = vpop.permute.xlu0 %1460
        %1462 = vrot.lane.b32.xlu0 %v1438, 24
        %v1463 = vpop.permute.xlu0 %1462
        %v1472 = vsel %vm1374, %v1312, %v1449
        %v1473 = vsel %vm1374, %v1315, %v1451
        %v1474 = vsel %vm1374, %v1318, %v1453
        %v1475 = vsel %vm1374, %v1321, %v1455
        %v1476 = vsel %vm1374, %v1324, %v1457
        %v1477 = vsel %vm1374, %v1327, %v1459
        %v1478 = vsel %vm1374, %v1330, %v1461
        %v1479 = vsel %vm1374, %v1333, %v1463
        %v1480 = vld [vmem:[%s15] sm:$0x1]
        %v1482 = vperm.slane %v1480, 0
        %v1484 = vmul.f32 %v1472, %v1482
        %v1485 = vmul.f32 %v1473, %v1482
        %v1486 = vmul.f32 %v1474, %v1482
        %v1487 = vmul.f32 %v1475, %v1482
        %v1488 = vmul.f32 %v1476, %v1482
        %v1489 = vmul.f32 %v1477, %v1482
        %v1490 = vmul.f32 %v1478, %v1482
        %v1491 = vmul.f32 %v1479, %v1482
        %v1492 = vld [vmem:[%s17] sm:$0x1]
        %v1494 = vperm.slane %v1492, 0
        %v1496 = vadd.f32 %v1484, %v1494
        %v1497 = vadd.f32 %v1485, %v1494
        %v1498 = vadd.f32 %v1486, %v1494
        %v1499 = vadd.f32 %v1487, %v1494
        %v1500 = vadd.f32 %v1488, %v1494
        %v1501 = vadd.f32 %v1489, %v1494
        %v1502 = vadd.f32 %v1490, %v1494
        %v1503 = vadd.f32 %v1491, %v1494
        %v1504 = vmax.f32 %v1496, 0.0
        %v1505 = vmax.f32 %v1497, 0.0
        %v1506 = vmax.f32 %v1498, 0.0
        %v1507 = vmax.f32 %v1499, 0.0
        %v1508 = vmax.f32 %v1500, 0.0
        %v1509 = vmax.f32 %v1501, 0.0
        %v1510 = vmax.f32 %v1502, 0.0
        %v1511 = vmax.f32 %v1503, 0.0
        %v1512 = vld [vmem:[%s19] sm:$0xff]
        %v1513 = vld [vmem:[%s19 + $0x8] sm:$0xff]
        %v1514 = vld [vmem:[%s19 + $0x10] sm:$0xff]
        %v1515 = vld [vmem:[%s19 + $0x18] sm:$0xff]
        %v1516 = vld [vmem:[%s19 + $0x20] sm:$0xff]
        %v1517 = vld [vmem:[%s19 + $0x28] sm:$0xff]
        %v1518 = vld [vmem:[%s21] sm:$0x1]
        %v1520 = vperm.slane %v1518, 0
        %vm1522 = vcmask 392192
        %v1524 = vsel %vm1522, %v1504, 0
        %v1527 = vsel %vm1522, %v1505, 0
        %v1530 = vsel %vm1522, %v1506, 0
        %v1533 = vsel %vm1522, %v1507, 0
        %v1536 = vsel %vm1522, %v1508, 0
        %v1539 = vsel %vm1522, %v1509, 0
        %v1542 = vsel %vm1522, %v1510, 0
        %v1545 = vsel %vm1522, %v1511, 0
        %1547 = vmatpush.msra.mxu0 0.0
        %1548 = vmatpush.msra.mxu0 0.0
        %1549 = vmatpush.msra.mxu0 0.0
        %1550 = vmatpush.msra.mxu0 0.0
        %1551 = vmatpush.msra.mxu0 0.0
        %1552 = vmatpush.msra.mxu0 0.0
        %1553 = vmatpush.msra.mxu0 0.0
        %1554 = vmatpush.msra.mxu0 0.0
        %1555 = vmatpush.msra.mxu0 0.0
        %1556 = vmatpush.msra.mxu0 0.0
        %1557 = vmatpush.msra.mxu0 %v1517
        %1558 = vmatpush.msra.mxu0 %v1516
        %1559 = vmatpush.msra.mxu0 %v1515
        %1560 = vmatpush.msra.mxu0 %v1514
        %1561 = vmatpush.msra.mxu0 %v1513
        %1562 = vmatpush.msra.mxu0 %v1512
        %1563 = vmatmul.f32.gmra.mxu0 %v1524
        %v1564 = vpop.f32.mrf.mxu0
        %v1565 = vadd.f32 %v1520, %v1564
        %1566 = vmatmul.f32.gmra.mxu0 %v1527
        %v1567 = vpop.f32.mrf.mxu0
        %v1568 = vadd.f32 %v1520, %v1567
        %1569 = vmatmul.f32.gmra.mxu0 %v1530
        %v1570 = vpop.f32.mrf.mxu0
        %v1571 = vadd.f32 %v1520, %v1570
        %1572 = vmatmul.f32.gmra.mxu0 %v1533
        %v1573 = vpop.f32.mrf.mxu0
        %v1574 = vadd.f32 %v1520, %v1573
        %1575 = vmatmul.f32.gmra.mxu0 %v1536
        %v1576 = vpop.f32.mrf.mxu0
        %v1577 = vadd.f32 %v1520, %v1576
        %1578 = vmatmul.f32.gmra.mxu0 %v1539
        %v1579 = vpop.f32.mrf.mxu0
        %v1580 = vadd.f32 %v1520, %v1579
        %1581 = vmatmul.f32.gmra.mxu0 %v1542
        %v1582 = vpop.f32.mrf.mxu0
        %v1583 = vadd.f32 %v1520, %v1582
        %1584 = vmatmul.f32.gmra.mxu0 %v1545
        %v1585 = vpop.f32.mrf.mxu0
        %v1586 = vadd.f32 %v1520, %v1585
        %1587 = vdwg.mxu0
        %1596 = vrot.lane.b32.xlu0 %v1565, 48
        %v1597 = vpop.permute.xlu0 %1596
        %1598 = vrot.lane.b32.xlu0 %v1568, 48
        %v1599 = vpop.permute.xlu0 %1598
        %1600 = vrot.lane.b32.xlu0 %v1571, 48
        %v1601 = vpop.permute.xlu0 %1600
        %1602 = vrot.lane.b32.xlu0 %v1574, 48
        %v1603 = vpop.permute.xlu0 %1602
        %1604 = vrot.lane.b32.xlu0 %v1577, 48
        %v1605 = vpop.permute.xlu0 %1604
        %1606 = vrot.lane.b32.xlu0 %v1580, 48
        %v1607 = vpop.permute.xlu0 %1606
        %1608 = vrot.lane.b32.xlu0 %v1583, 48
        %v1609 = vpop.permute.xlu0 %1608
        %1610 = vrot.lane.b32.xlu0 %v1586, 48
        %v1611 = vpop.permute.xlu0 %1610
        %v1620 = vsel %vm1522, %v1472, %v1597
        %v1621 = vsel %vm1522, %v1473, %v1599
        %v1622 = vsel %vm1522, %v1474, %v1601
        %v1623 = vsel %vm1522, %v1475, %v1603
        %v1624 = vsel %vm1522, %v1476, %v1605
        %v1625 = vsel %vm1522, %v1477, %v1607
        %v1626 = vsel %vm1522, %v1478, %v1609
        %v1627 = vsel %vm1522, %v1479, %v1611
        %v1628 = vld [vmem:[%s23] sm:$0x1]
        %v1630 = vperm.slane %v1628, 0
        %v1632 = vmul.f32 %v1620, %v1630
        %v1633 = vmul.f32 %v1621, %v1630
        %v1634 = vmul.f32 %v1622, %v1630
        %v1635 = vmul.f32 %v1623, %v1630
        %v1636 = vmul.f32 %v1624, %v1630
        %v1637 = vmul.f32 %v1625, %v1630
        %v1638 = vmul.f32 %v1626, %v1630
        %v1639 = vmul.f32 %v1627, %v1630
        %v1640 = vld [vmem:[%s25] sm:$0x1]
        %v1642 = vperm.slane %v1640, 0
        %v1644 = vadd.f32 %v1632, %v1642
        %v1645 = vadd.f32 %v1633, %v1642
        %v1646 = vadd.f32 %v1634, %v1642
        %v1647 = vadd.f32 %v1635, %v1642
        %v1648 = vadd.f32 %v1636, %v1642
        %v1649 = vadd.f32 %v1637, %v1642
        %v1650 = vadd.f32 %v1638, %v1642
        %v1651 = vadd.f32 %v1639, %v1642
        %v1652 = vmax.f32 %v1644, 0.0
        %v1653 = vmax.f32 %v1645, 0.0
        %v1654 = vmax.f32 %v1646, 0.0
        %v1655 = vmax.f32 %v1647, 0.0
        %v1656 = vmax.f32 %v1648, 0.0
        %v1657 = vmax.f32 %v1649, 0.0
        %v1658 = vmax.f32 %v1650, 0.0
        %v1659 = vmax.f32 %v1651, 0.0
        %v1660 = vld [vmem:[%s27] sm:$0xff]
        %v1661 = vld [vmem:[%s27 + $0x8] sm:$0xff]
        %v1662 = vld [vmem:[%s27 + $0x10] sm:$0xff]
        %v1663 = vld [vmem:[%s27 + $0x18] sm:$0xff]
        %v1664 = vld [vmem:[%s27 + $0x20] sm:$0xff]
        %v1665 = vld [vmem:[%s27 + $0x28] sm:$0xff]
        %v1666 = vld [vmem:[%s27 + $0x30] sm:$0xff]
        %v1667 = vld [vmem:[%s27 + $0x38] sm:$0xff]
        %v1668 = vld [vmem:[%s27 + $0x40] sm:$0xff]
        %v1669 = vld [vmem:[%s29] sm:$0x1]
        %v1671 = vperm.slane %v1669, 0
        %vm1673 = vcmask 588800
        %v1675 = vsel %vm1673, %v1652, 0
        %v1678 = vsel %vm1673, %v1653, 0
        %v1681 = vsel %vm1673, %v1654, 0
        %v1684 = vsel %vm1673, %v1655, 0
        %v1687 = vsel %vm1673, %v1656, 0
        %v1690 = vsel %vm1673, %v1657, 0
        %v1693 = vsel %vm1673, %v1658, 0
        %v1696 = vsel %vm1673, %v1659, 0
        %1698 = vmatpush.msra.mxu0 0.0
        %1699 = vmatpush.msra.mxu0 0.0
        %1700 = vmatpush.msra.mxu0 0.0
        %1701 = vmatpush.msra.mxu0 0.0
        %1702 = vmatpush.msra.mxu0 0.0
        %1703 = vmatpush.msra.mxu0 0.0
        %1704 = vmatpush.msra.mxu0 0.0
        %1705 = vmatpush.msra.mxu0 %v1668
        %1706 = vmatpush.msra.mxu0 %v1667
        %1707 = vmatpush.msra.mxu0 %v1666
        %1708 = vmatpush.msra.mxu0 %v1665
        %1709 = vmatpush.msra.mxu0 %v1664
        %1710 = vmatpush.msra.mxu0 %v1663
        %1711 = vmatpush.msra.mxu0 %v1662
        %1712 = vmatpush.msra.mxu0 %v1661
        %1713 = vmatpush.msra.mxu0 %v1660
        %1714 = vmatmul.f32.gmra.mxu0 %v1675
        %v1715 = vpop.f32.mrf.mxu0
        %v1716 = vadd.f32 %v1671, %v1715
        %1717 = vmatmul.f32.gmra.mxu0 %v1678
        %v1718 = vpop.f32.mrf.mxu0
        %v1719 = vadd.f32 %v1671, %v1718
        %1720 = vmatmul.f32.gmra.mxu0 %v1681
        %v1721 = vpop.f32.mrf.mxu0
        %v1722 = vadd.f32 %v1671, %v1721
        %1723 = vmatmul.f32.gmra.mxu0 %v1684
        %v1724 = vpop.f32.mrf.mxu0
        %v1725 = vadd.f32 %v1671, %v1724
        %1726 = vmatmul.f32.gmra.mxu0 %v1687
        %v1727 = vpop.f32.mrf.mxu0
        %v1728 = vadd.f32 %v1671, %v1727
        %1729 = vmatmul.f32.gmra.mxu0 %v1690
        %v1730 = vpop.f32.mrf.mxu0
        %v1731 = vadd.f32 %v1671, %v1730
        %1732 = vmatmul.f32.gmra.mxu0 %v1693
        %v1733 = vpop.f32.mrf.mxu0
        %v1734 = vadd.f32 %v1671, %v1733
        %1735 = vmatmul.f32.gmra.mxu0 %v1696
        %v1736 = vpop.f32.mrf.mxu0
        %v1737 = vadd.f32 %v1671, %v1736
        %1738 = vdwg.mxu0
        %1747 = vrot.lane.b32.xlu0 %v1716, 72
        %v1748 = vpop.permute.xlu0 %1747
        %1749 = vrot.lane.b32.xlu0 %v1719, 72
        %v1750 = vpop.permute.xlu0 %1749
        %1751 = vrot.lane.b32.xlu0 %v1722, 72
        %v1752 = vpop.permute.xlu0 %1751
        %1753 = vrot.lane.b32.xlu0 %v1725, 72
        %v1754 = vpop.permute.xlu0 %1753
        %1755 = vrot.lane.b32.xlu0 %v1728, 72
        %v1756 = vpop.permute.xlu0 %1755
        %1757 = vrot.lane.b32.xlu0 %v1731, 72
        %v1758 = vpop.permute.xlu0 %1757
        %1759 = vrot.lane.b32.xlu0 %v1734, 72
        %v1760 = vpop.permute.xlu0 %1759
        %1761 = vrot.lane.b32.xlu0 %v1737, 72
        %v1762 = vpop.permute.xlu0 %1761
        %v1771 = vsel %vm1673, %v1620, %v1748
        %v1772 = vsel %vm1673, %v1621, %v1750
        %v1773 = vsel %vm1673, %v1622, %v1752
        %v1774 = vsel %vm1673, %v1623, %v1754
        %v1775 = vsel %vm1673, %v1624, %v1756
        %v1776 = vsel %vm1673, %v1625, %v1758
        %v1777 = vsel %vm1673, %v1626, %v1760
        %v1778 = vsel %vm1673, %v1627, %v1762
        %v1779 = vld [vmem:[%s31] sm:$0x1]
        %v1781 = vperm.slane %v1779, 0
        %v1783 = vmul.f32 %v1771, %v1781
        %v1784 = vmul.f32 %v1772, %v1781
        %v1785 = vmul.f32 %v1773, %v1781
        %v1786 = vmul.f32 %v1774, %v1781
        %v1787 = vmul.f32 %v1775, %v1781
        %v1788 = vmul.f32 %v1776, %v1781
        %v1789 = vmul.f32 %v1777, %v1781
        %v1790 = vmul.f32 %v1778, %v1781
        %v1791 = vld [vmem:[%s33] sm:$0x1]
        %v1793 = vperm.slane %v1791, 0
        %v1795 = vadd.f32 %v1783, %v1793
        %v1796 = vadd.f32 %v1784, %v1793
        %v1797 = vadd.f32 %v1785, %v1793
        %v1798 = vadd.f32 %v1786, %v1793
        %v1799 = vadd.f32 %v1787, %v1793
        %v1800 = vadd.f32 %v1788, %v1793
        %v1801 = vadd.f32 %v1789, %v1793
        %v1802 = vadd.f32 %v1790, %v1793
        %v1803 = vmax.f32 %v1795, 0.0
        %v1804 = vmax.f32 %v1796, 0.0
        %v1805 = vmax.f32 %v1797, 0.0
        %v1806 = vmax.f32 %v1798, 0.0
        %v1807 = vmax.f32 %v1799, 0.0
        %v1808 = vmax.f32 %v1800, 0.0
        %v1809 = vmax.f32 %v1801, 0.0
        %v1810 = vmax.f32 %v1802, 0.0
        %v1811 = vld [vmem:[%s35] sm:$0xff]
        %v1812 = vld [vmem:[%s35 + $0x8] sm:$0xff]
        %v1813 = vld [vmem:[%s35 + $0x10] sm:$0xff]
        %v1814 = vld [vmem:[%s35 + $0x18] sm:$0xff]
        %v1815 = vld [vmem:[%s35 + $0x20] sm:$0xff]
        %v1816 = vld [vmem:[%s35 + $0x28] sm:$0xff]
        %v1817 = vld [vmem:[%s35 + $0x30] sm:$0xff]
        %v1818 = vld [vmem:[%s35 + $0x38] sm:$0xff]
        %v1819 = vld [vmem:[%s35 + $0x40] sm:$0xff]
        %v1820 = vld [vmem:[%s35 + $0x48] sm:$0xff]
        %v1821 = vld [vmem:[%s35 + $0x50] sm:$0xff]
        %v1822 = vld [vmem:[%s35 + $0x58] sm:$0xff]
        %v1823 = vld [vmem:[%s37] sm:$0x1]
        %v1825 = vperm.slane %v1823, 0
        %vm1827 = vcmask 785408
        %v1829 = vsel %vm1827, %v1803, 0
        %v1832 = vsel %vm1827, %v1804, 0
        %v1835 = vsel %vm1827, %v1805, 0
        %v1838 = vsel %vm1827, %v1806, 0
        %v1841 = vsel %vm1827, %v1807, 0
        %v1844 = vsel %vm1827, %v1808, 0
        %v1847 = vsel %vm1827, %v1809, 0
        %v1850 = vsel %vm1827, %v1810, 0
        %1852 = vmatpush.msra.mxu0 0.0
        %1853 = vmatpush.msra.mxu0 0.0
        %1854 = vmatpush.msra.mxu0 0.0
        %1855 = vmatpush.msra.mxu0 0.0
        %1856 = vmatpush.msra.mxu0 %v1822
        %1857 = vmatpush.msra.mxu0 %v1821
        %1858 = vmatpush.msra.mxu0 %v1820
        %1859 = vmatpush.msra.mxu0 %v1819
        %1860 = vmatpush.msra.mxu0 %v1818
        %1861 = vmatpush.msra.mxu0 %v1817
        %1862 = vmatpush.msra.mxu0 %v1816
        %1863 = vmatpush.msra.mxu0 %v1815
        %1864 = vmatpush.msra.mxu0 %v1814
        %1865 = vmatpush.msra.mxu0 %v1813
        %1866 = vmatpush.msra.mxu0 %v1812
        %1867 = vmatpush.msra.mxu0 %v1811
        %1868 = vmatmul.f32.gmra.mxu0 %v1829
        %v1869 = vpop.f32.mrf.mxu0
        %v1870 = vadd.f32 %v1825, %v1869
        %1871 = vmatmul.f32.gmra.mxu0 %v1832
        %v1872 = vpop.f32.mrf.mxu0
        %v1873 = vadd.f32 %v1825, %v1872
        %1874 = vmatmul.f32.gmra.mxu0 %v1835
        %v1875 = vpop.f32.mrf.mxu0
        %v1876 = vadd.f32 %v1825, %v1875
        %1877 = vmatmul.f32.gmra.mxu0 %v1838
        %v1878 = vpop.f32.mrf.mxu0
        %v1879 = vadd.f32 %v1825, %v1878
        %1880 = vmatmul.f32.gmra.mxu0 %v1841
        %v1881 = vpop.f32.mrf.mxu0
        %v1882 = vadd.f32 %v1825, %v1881
        %1883 = vmatmul.f32.gmra.mxu0 %v1844
        %v1884 = vpop.f32.mrf.mxu0
        %v1885 = vadd.f32 %v1825, %v1884
        %1886 = vmatmul.f32.gmra.mxu0 %v1847
        %v1887 = vpop.f32.mrf.mxu0
        %v1888 = vadd.f32 %v1825, %v1887
        %1889 = vmatmul.f32.gmra.mxu0 %v1850
        %v1890 = vpop.f32.mrf.mxu0
        %v1891 = vadd.f32 %v1825, %v1890
        %1892 = vdwg.mxu0
        %1893 = vxpose.xlu0.b32.start [1/16] %v1870, 128
        %1894 = vxpose.xlu0.b32.cont [2/16] %v1873, 128
        %1895 = vxpose.xlu0.b32.cont [3/16] %v1876, 128
        %1896 = vxpose.xlu0.b32.cont [4/16] %v1879, 128
        %1897 = vxpose.xlu0.b32.cont [5/16] %v1882, 128
        %1898 = vxpose.xlu0.b32.cont [6/16] %v1885, 128
        %1899 = vxpose.xlu0.b32.cont [7/16] %v1888, 128
        %1900 = vxpose.xlu0.b32.cont [8/16] %v1891, 128
        %1901 = vxpose.xlu0.b32.cont [9/16] 0.0, 128
        %1902 = vxpose.xlu0.b32.cont [10/16] 0.0, 128
        %1903 = vxpose.xlu0.b32.cont [11/16] 0.0, 128
        %1904 = vxpose.xlu0.b32.cont [12/16] 0.0, 128
        %1905 = vxpose.xlu0.b32.cont [13/16] 0.0, 128
        %1906 = vxpose.xlu0.b32.cont [14/16] 0.0, 128
        %1907 = vxpose.xlu0.b32.cont [15/16] 0.0, 128
        %1908 = vxpose.xlu0.b32.end [16/16] 0.0, 128
        %v1909 = vpop.trf.xlu0
        %v1910 = vpop.trf.xlu0
        %v1911 = vpop.trf.xlu0
        %v1912 = vpop.trf.xlu0
        %v1913 = vpop.trf.xlu0
        %v1914 = vpop.trf.xlu0
        %v1915 = vpop.trf.xlu0
        %v1916 = vpop.trf.xlu0
        %v1917 = vpop.trf.xlu0
        %v1918 = vpop.trf.xlu0
        %v1919 = vpop.trf.xlu0
        %v1920 = vpop.trf.xlu0
        %v1921 = vpop.trf.xlu0
        %v1922 = vpop.trf.xlu0
        %v1923 = vpop.trf.xlu0
        %v1924 = vpop.trf.xlu0
        %vm1925 = vcmask 523264
        %v1927 = vsel %vm1925, %v1909, 0
        %v1930 = vsel %vm1925, %v1910, 0
        %v1933 = vsel %vm1925, %v1911, 0
        %v1936 = vsel %vm1925, %v1912, 0
        %v1939 = vsel %vm1925, %v1913, 0
        %v1942 = vsel %vm1925, %v1914, 0
        %v1945 = vsel %vm1925, %v1915, 0
        %v1948 = vsel %vm1925, %v1916, 0
        %1950 = vmatpush.msra.mxu0 0.0
        %1951 = vmatpush.msra.mxu0 0.0
        %1952 = vmatpush.msra.mxu0 0.0
        %1953 = vmatpush.msra.mxu0 0.0
        %1954 = vmatpush.msra.mxu0 0.0
        %1955 = vmatpush.msra.mxu0 0.0
        %1956 = vmatpush.msra.mxu0 0.0
        %1957 = vmatpush.msra.mxu0 0.0
        %1958 = vmatpush.msra.mxu0 %v1891
        %1959 = vmatpush.msra.mxu0 %v1888
        %1960 = vmatpush.msra.mxu0 %v1885
        %1961 = vmatpush.msra.mxu0 %v1882
        %1962 = vmatpush.msra.mxu0 %v1879
        %1963 = vmatpush.msra.mxu0 %v1876
        %1964 = vmatpush.msra.mxu0 %v1873
        %1965 = vmatpush.msra.mxu0 %v1870
        %1966 = vmatmul.f32.gmra.mxu0 %v1927
        %v1967 = vpop.f32.mrf.mxu0
        %v1968 = vadd.f32 0.0, %v1967
        %1969 = vmatmul.f32.gmra.mxu0 %v1930
        %v1970 = vpop.f32.mrf.mxu0
        %v1971 = vadd.f32 0.0, %v1970
        %1972 = vmatmul.f32.gmra.mxu0 %v1933
        %v1973 = vpop.f32.mrf.mxu0
        %v1974 = vadd.f32 0.0, %v1973
        %1975 = vmatmul.f32.gmra.mxu0 %v1936
        %v1976 = vpop.f32.mrf.mxu0
        %v1977 = vadd.f32 0.0, %v1976
        %1978 = vmatmul.f32.gmra.mxu0 %v1939
        %v1979 = vpop.f32.mrf.mxu0
        %v1980 = vadd.f32 0.0, %v1979
        %1981 = vmatmul.f32.gmra.mxu0 %v1942
        %v1982 = vpop.f32.mrf.mxu0
        %v1983 = vadd.f32 0.0, %v1982
        %1984 = vmatmul.f32.gmra.mxu0 %v1945
        %v1985 = vpop.f32.mrf.mxu0
        %v1986 = vadd.f32 0.0, %v1985
        %1987 = vmatmul.f32.gmra.mxu0 %v1948
        %v1988 = vpop.f32.mrf.mxu0
        %v1989 = vadd.f32 0.0, %v1988
        %1990 = vdwg.mxu0
        %vm1991 = vcmask 490496
        %v1992 = vsel %vm1991, %v1968, -inf
        %1993 = vmax.xlane.f32.xlu0 %v1992
        %v1994 = vpop.xlane.xlu0 %1993
        %v1995 = vsel %vm1991, %v1971, -inf
        %1996 = vmax.xlane.f32.xlu0 %v1995
        %v1997 = vpop.xlane.xlu0 %1996
        %v1998 = vsel %vm1991, %v1974, -inf
        %1999 = vmax.xlane.f32.xlu0 %v1998
        %v2000 = vpop.xlane.xlu0 %1999
        %v2001 = vsel %vm1991, %v1977, -inf
        %2002 = vmax.xlane.f32.xlu0 %v2001
        %v2003 = vpop.xlane.xlu0 %2002
        %v2004 = vsel %vm1991, %v1980, -inf
        %2005 = vmax.xlane.f32.xlu0 %v2004
        %v2006 = vpop.xlane.xlu0 %2005
        %v2007 = vsel %vm1991, %v1983, -inf
        %2008 = vmax.xlane.f32.xlu0 %v2007
        %v2009 = vpop.xlane.xlu0 %2008
        %v2010 = vsel %vm1991, %v1986, -inf
        %2011 = vmax.xlane.f32.xlu0 %v2010
        %v2012 = vpop.xlane.xlu0 %2011
        %vm2013 = vcmask 486400
        %v2014 = vsel %vm2013, %v1989, -inf
        %2015 = vmax.xlane.f32.xlu0 %v2014
        %v2016 = vpop.xlane.xlu0 %2015
        %v2017 = vsub.f32 %v1994, %v1968
        %v2018 = vsub.f32 %v1997, %v1971
        %v2019 = vsub.f32 %v2000, %v1974
        %v2020 = vsub.f32 %v2003, %v1977
        %v2021 = vsub.f32 %v2006, %v1980
        %v2022 = vsub.f32 %v2009, %v1983
        %v2023 = vsub.f32 %v2012, %v1986
        %v2024 = vsub.f32 %v2016, %v1989
        %v2025 = vsel %vm1991, %v2017, -inf
        %2026 = vmax.xlane.f32.xlu0 %v2025
        %v2027 = vpop.xlane.xlu0 %2026
        %v2028 = vsel %vm1991, %v2018, -inf
        %2029 = vmax.xlane.f32.xlu0 %v2028
        %v2030 = vpop.xlane.xlu0 %2029
        %v2031 = vsel %vm1991, %v2019, -inf
        %2032 = vmax.xlane.f32.xlu0 %v2031
        %v2033 = vpop.xlane.xlu0 %2032
        %v2034 = vsel %vm1991, %v2020, -inf
        %2035 = vmax.xlane.f32.xlu0 %v2034
        %v2036 = vpop.xlane.xlu0 %2035
        %v2037 = vsel %vm1991, %v2021, -inf
        %2038 = vmax.xlane.f32.xlu0 %v2037
        %v2039 = vpop.xlane.xlu0 %2038
        %v2040 = vsel %vm1991, %v2022, -inf
        %2041 = vmax.xlane.f32.xlu0 %v2040
        %v2042 = vpop.xlane.xlu0 %2041
        %v2043 = vsel %vm1991, %v2023, -inf
        %2044 = vmax.xlane.f32.xlu0 %v2043
        %v2045 = vpop.xlane.xlu0 %2044
        %v2046 = vsel %vm2013, %v2024, -inf
        %2047 = vmax.xlane.f32.xlu0 %v2046
        %v2048 = vpop.xlane.xlu0 %2047
        %v2049 = vsub.f32 %v2017, %v2027
        %v2050 = vsub.f32 %v2018, %v2030
        %v2051 = vsub.f32 %v2019, %v2033
        %v2052 = vsub.f32 %v2020, %v2036
        %v2053 = vsub.f32 %v2021, %v2039
        %v2054 = vsub.f32 %v2022, %v2042
        %v2055 = vsub.f32 %v2023, %v2045
        %v2056 = vsub.f32 %v2024, %v2048
        %v2057 = vmul.f32 %v2049, 1.442695
        %v2058 = vpow.pop %v2057
        %v2059 = vmul.f32 %v2050, 1.442695
        %v2060 = vpow.pop %v2059
        %v2061 = vmul.f32 %v2051, 1.442695
        %v2062 = vpow.pop %v2061
        %v2063 = vmul.f32 %v2052, 1.442695
        %v2064 = vpow.pop %v2063
        %v2065 = vmul.f32 %v2053, 1.442695
        %v2066 = vpow.pop %v2065
        %v2067 = vmul.f32 %v2054, 1.442695
        %v2068 = vpow.pop %v2067
        %v2069 = vmul.f32 %v2055, 1.442695
        %v2070 = vpow.pop %v2069
        %v2071 = vmul.f32 %v2056, 1.442695
        %v2072 = vpow.pop %v2071
        %v2073 = vsel %vm1991, %v2058, 0.0
        %2074 = vadd.xlane.f32.xlu0 %v2073
        %v2075 = vpop.xlane.xlu0 %2074
        %v2076 = vsel %vm1991, %v2060, 0.0
        %2077 = vadd.xlane.f32.xlu0 %v2076
        %v2078 = vpop.xlane.xlu0 %2077
        %v2079 = vsel %vm1991, %v2062, 0.0
        %2080 = vadd.xlane.f32.xlu0 %v2079
        %v2081 = vpop.xlane.xlu0 %2080
        %v2082 = vsel %vm1991, %v2064, 0.0
        %2083 = vadd.xlane.f32.xlu0 %v2082
        %v2084 = vpop.xlane.xlu0 %2083
        %v2085 = vsel %vm1991, %v2066, 0.0
        %2086 = vadd.xlane.f32.xlu0 %v2085
        %v2087 = vpop.xlane.xlu0 %2086
        %v2088 = vsel %vm1991, %v2068, 0.0
        %2089 = vadd.xlane.f32.xlu0 %v2088
        %v2090 = vpop.xlane.xlu0 %2089
        %v2091 = vsel %vm1991, %v2070, 0.0
        %2092 = vadd.xlane.f32.xlu0 %v2091
        %v2093 = vpop.xlane.xlu0 %2092
        %v2094 = vsel %vm2013, %v2072, 0.0
        %2095 = vadd.xlane.f32.xlu0 %v2094
        %v2096 = vpop.xlane.xlu0 %2095
        %v2097 = vrcp.pop %v2075
        %v2098 = vrcp.pop %v2078
        %v2099 = vrcp.pop %v2081
        %v2100 = vrcp.pop %v2084
        %v2101 = vrcp.pop %v2087
        %v2102 = vrcp.pop %v2090
        %v2103 = vrcp.pop %v2093
        %v2104 = vrcp.pop %v2096
        %v2105 = vmul.f32 %v2058, %v2097
        %v2106 = vmul.f32 %v2060, %v2098
        %v2107 = vmul.f32 %v2062, %v2099
        %v2108 = vmul.f32 %v2064, %v2100
        %v2109 = vmul.f32 %v2066, %v2101
        %v2110 = vmul.f32 %v2068, %v2102
        %v2111 = vmul.f32 %v2070, %v2103
        %v2112 = vmul.f32 %v2072, %v2104
        %v2114 = vsel %vm1991, %v1870, 0
        %v2117 = vsel %vm1991, %v1873, 0
        %v2120 = vsel %vm1991, %v1876, 0
        %v2123 = vsel %vm1991, %v1879, 0
        %v2126 = vsel %vm1991, %v1882, 0
        %v2129 = vsel %vm1991, %v1885, 0
        %v2132 = vsel %vm1991, %v1888, 0
        %v2135 = vsel %vm1991, %v1891, 0
        %v2138 = vsel %vm1991, %v2105, 0
        %v2141 = vsel %vm1991, %v2106, 0
        %v2144 = vsel %vm1991, %v2107, 0
        %v2147 = vsel %vm1991, %v2108, 0
        %v2150 = vsel %vm1991, %v2109, 0
        %v2153 = vsel %vm1991, %v2110, 0
        %v2156 = vsel %vm1991, %v2111, 0
        %v2159 = vsel %vm1991, %v2112, 0
        %2161 = vmatpush.xpose.msra.mxu0 0.0
        %2162 = vmatpush.xpose.msra.mxu0 0.0
        %2163 = vmatpush.xpose.msra.mxu0 0.0
        %2164 = vmatpush.xpose.msra.mxu0 0.0
        %2165 = vmatpush.xpose.msra.mxu0 0.0
        %2166 = vmatpush.xpose.msra.mxu0 0.0
        %2167 = vmatpush.xpose.msra.mxu0 0.0
        %2168 = vmatpush.xpose.msra.mxu0 0.0
        %2169 = vmatpush.xpose.msra.mxu0 %v2159
        %2170 = vmatpush.xpose.msra.mxu0 %v2156
        %2171 = vmatpush.xpose.msra.mxu0 %v2153
        %2172 = vmatpush.xpose.msra.mxu0 %v2150
        %2173 = vmatpush.xpose.msra.mxu0 %v2147
        %2174 = vmatpush.xpose.msra.mxu0 %v2144
        %2175 = vmatpush.xpose.msra.mxu0 %v2141
        %2176 = vmatpush.xpose.msra.mxu0 %v2138
        %2177 = vmatmul.f32.gmra.mxu0 %v2114
        %v2178 = vpop.f32.mrf.mxu0
        %v2179 = vadd.f32 0.0, %v2178
        %2180 = vmatmul.f32.gmra.mxu0 %v2117
        %v2181 = vpop.f32.mrf.mxu0
        %v2182 = vadd.f32 0.0, %v2181
        %2183 = vmatmul.f32.gmra.mxu0 %v2120
        %v2184 = vpop.f32.mrf.mxu0
        %v2185 = vadd.f32 0.0, %v2184
        %2186 = vmatmul.f32.gmra.mxu0 %v2123
        %v2187 = vpop.f32.mrf.mxu0
        %v2188 = vadd.f32 0.0, %v2187
        %2189 = vmatmul.f32.gmra.mxu0 %v2126
        %v2190 = vpop.f32.mrf.mxu0
        %v2191 = vadd.f32 0.0, %v2190
        %2192 = vmatmul.f32.gmra.mxu0 %v2129
        %v2193 = vpop.f32.mrf.mxu0
        %v2194 = vadd.f32 0.0, %v2193
        %2195 = vmatmul.f32.gmra.mxu0 %v2132
        %v2196 = vpop.f32.mrf.mxu0
        %v2197 = vadd.f32 0.0, %v2196
        %2198 = vmatmul.f32.gmra.mxu0 %v2135
        %v2199 = vpop.f32.mrf.mxu0
        %v2200 = vadd.f32 0.0, %v2199
        %2201 = vdwg.mxu0
        %v2202 = vmul.f32 %v2179, 0.5
        %v2203 = vmul.f32 %v2182, 0.5
        %v2204 = vmul.f32 %v2185, 0.5
        %v2205 = vmul.f32 %v2188, 0.5
        %v2206 = vmul.f32 %v2191, 0.5
        %v2207 = vmul.f32 %v2194, 0.5
        %v2208 = vmul.f32 %v2197, 0.5
        %v2209 = vmul.f32 %v2200, 0.5
        %v2210 = vadd.f32 %v2202, %v1870
        %v2211 = vadd.f32 %v2203, %v1873
        %v2212 = vadd.f32 %v2204, %v1876
        %v2213 = vadd.f32 %v2205, %v1879
        %v2214 = vadd.f32 %v2206, %v1882
        %v2215 = vadd.f32 %v2207, %v1885
        %v2216 = vadd.f32 %v2208, %v1888
        %v2217 = vadd.f32 %v2209, %v1891
        %v2218 = vld [vmem:[%s39] sm:$0xf]
        %v2219 = vld [vmem:[%s41] sm:$0x1]
        %v2221 = vperm.slane %v2219, 0
        %v2224 = vsel %vm1290, %v2218, 0
        %2226 = vmatpush.msra.mxu0 0.0
        %2227 = vmatpush.msra.mxu0 0.0
        %2228 = vmatpush.msra.mxu0 0.0
        %2229 = vmatpush.msra.mxu0 0.0
        %2230 = vmatpush.msra.mxu0 0.0
        %2231 = vmatpush.msra.mxu0 0.0
        %2232 = vmatpush.msra.mxu0 0.0
        %2233 = vmatpush.msra.mxu0 0.0
        %2234 = vmatpush.msra.mxu0 0.0
        %2235 = vmatpush.msra.mxu0 0.0
        %2236 = vmatpush.msra.mxu0 0.0
        %2237 = vmatpush.msra.mxu0 0.0
        %2238 = vmatpush.msra.mxu0 0.0
        %2239 = vmatpush.msra.mxu0 0.0
        %2240 = vmatpush.msra.mxu0 0.0
        %2241 = vmatpush.msra.mxu0 %v2224
        %2242 = vmatmul.f32.gmra.mxu0 %v1267
        %v2243 = vpop.f32.mrf.mxu0
        %v2244 = vadd.f32 %v2221, %v2243
        %2245 = vmatmul.f32.gmra.mxu0 %v1270
        %v2246 = vpop.f32.mrf.mxu0
        %v2247 = vadd.f32 %v2221, %v2246
        %2248 = vmatmul.f32.gmra.mxu0 %v1273
        %v2249 = vpop.f32.mrf.mxu0
        %v2250 = vadd.f32 %v2221, %v2249
        %2251 = vmatmul.f32.gmra.mxu0 %v1276
        %v2252 = vpop.f32.mrf.mxu0
        %v2253 = vadd.f32 %v2221, %v2252
        %2254 = vmatmul.f32.gmra.mxu0 %v1279
        %v2255 = vpop.f32.mrf.mxu0
        %v2256 = vadd.f32 %v2221, %v2255
        %2257 = vmatmul.f32.gmra.mxu0 %v1282
        %v2258 = vpop.f32.mrf.mxu0
        %v2259 = vadd.f32 %v2221, %v2258
        %2260 = vmatmul.f32.gmra.mxu0 %v1285
        %v2261 = vpop.f32.mrf.mxu0
        %v2262 = vadd.f32 %v2221, %v2261
        %2263 = vmatmul.f32.gmra.mxu0 %v1288
        %v2264 = vpop.f32.mrf.mxu0
        %v2265 = vadd.f32 %v2221, %v2264
        %2266 = vdwg.mxu0
        %v2267 = vld [vmem:[%s43] sm:$0x1]
        %v2269 = vperm.slane %v2267, 0
        %v2271 = vmul.f32 %v2244, %v2269
        %v2272 = vmul.f32 %v2247, %v2269
        %v2273 = vmul.f32 %v2250, %v2269
        %v2274 = vmul.f32 %v2253, %v2269
        %v2275 = vmul.f32 %v2256, %v2269
        %v2276 = vmul.f32 %v2259, %v2269
        %v2277 = vmul.f32 %v2262, %v2269
        %v2278 = vmul.f32 %v2265, %v2269
        %v2279 = vld [vmem:[%s45] sm:$0x1]
        %v2281 = vperm.slane %v2279, 0
        %v2283 = vadd.f32 %v2271, %v2281
        %v2284 = vadd.f32 %v2272, %v2281
        %v2285 = vadd.f32 %v2273, %v2281
        %v2286 = vadd.f32 %v2274, %v2281
        %v2287 = vadd.f32 %v2275, %v2281
        %v2288 = vadd.f32 %v2276, %v2281
        %v2289 = vadd.f32 %v2277, %v2281
        %v2290 = vadd.f32 %v2278, %v2281
        %v2291 = vmax.f32 %v2283, 0.0
        %v2292 = vmax.f32 %v2284, 0.0
        %v2293 = vmax.f32 %v2285, 0.0
        %v2294 = vmax.f32 %v2286, 0.0
        %v2295 = vmax.f32 %v2287, 0.0
        %v2296 = vmax.f32 %v2288, 0.0
        %v2297 = vmax.f32 %v2289, 0.0
        %v2298 = vmax.f32 %v2290, 0.0
        %v2299 = vld [vmem:[%s47] sm:$0xff]
        %v2300 = vld [vmem:[%s47 + $0x8] sm:$0xff]
        %v2301 = vld [vmem:[%s47 + $0x10] sm:$0xff]
        %v2302 = vld [vmem:[%s47 + $0x18] sm:$0xff]
        %v2303 = vld [vmem:[%s47 + $0x20] sm:$0xff]
        %v2304 = vld [vmem:[%s47 + $0x28] sm:$0xff]
        %v2305 = vld [vmem:[%s47 + $0x30] sm:$0xff]
        %v2306 = vld [vmem:[%s47 + $0x38] sm:$0xff]
        %v2307 = vld [vmem:[%s47 + $0x40] sm:$0xff]
        %v2308 = vld [vmem:[%s47 + $0x48] sm:$0xff]
        %v2309 = vld [vmem:[%s47 + $0x50] sm:$0xff]
        %v2310 = vld [vmem:[%s47 + $0x58] sm:$0xff]
        %v2311 = vld [vmem:[%s47 + $0x60] sm:$0xff]
        %v2312 = vld [vmem:[%s47 + $0x68] sm:$0xff]
        %v2313 = vld [vmem:[%s47 + $0x70] sm:$0xff]
        %v2314 = vld [vmem:[%s47 + $0x78] sm:$0xff]
        %v2315 = vld [vmem:[%s47 + $0x80] sm:$0xff]
        %v2316 = vld [vmem:[%s47 + $0x88] sm:$0xff]
        %v2317 = vld [vmem:[%s47 + $0x90] sm:$0xff]
        %v2318 = vld [vmem:[%s47 + $0x98] sm:$0xff]
        %v2319 = vld [vmem:[%s47 + $0xa0] sm:$0xff]
        %v2320 = vld [vmem:[%s47 + $0xa8] sm:$0xff]
        %v2321 = vld [vmem:[%s47 + $0xb0] sm:$0xff]
        %v2322 = vld [vmem:[%s47 + $0xb8] sm:$0xff]
        %v2323 = vld [vmem:[%s47 + $0xc0] sm:$0xff]
        %v2324 = vld [vmem:[%s47 + $0xc8] sm:$0xff]
        %v2325 = vld [vmem:[%s47 + $0xd0] sm:$0xff]
        %v2326 = vld [vmem:[%s49] sm:$0x1]
        %v2328 = vperm.slane %v2326, 0
        %v2330 = vadd.f32 %v2328, 0.0
        %v2331 = vrot.slane %v2291, 7
        %v2332 = vrot.slane %v2292, 7
        %v2333 = vrot.slane %v2293, 7
        %v2334 = vrot.slane %v2294, 7
        %v2335 = vrot.slane %v2295, 7
        %v2336 = vrot.slane %v2296, 7
        %v2337 = vrot.slane %v2297, 7
        %v2338 = vrot.slane %v2298, 7
        %v2339 = vlaneseq
        %v2340 = vshrl.u32 %v2339, 7
        %vm2341 = vcmp.lt.s32.totalorder %v2340, 1
        %v2342 = vsel %vm2341, %v2337, %v2338
        %v2343 = vsel %vm2341, %v2336, %v2337
        %v2344 = vsel %vm2341, %v2335, %v2336
        %v2345 = vsel %vm2341, %v2334, %v2335
        %v2346 = vsel %vm2341, %v2333, %v2334
        %v2347 = vsel %vm2341, %v2332, %v2333
        %v2348 = vsel %vm2341, %v2331, %v2332
        %v2349 = vsel %vm2341, %v2338, %v2331
        %2351 = vset.pattern.permute.xlu0 0
        %2352 = vperm.xlu0 %2351, %v1188
        %v2353 = vpop.permute.xlu0 %2352
        %2356 = vset.pattern.permute.xlu0 0
        %2357 = vperm.xlu0 %2356, %v1189
        %v2358 = vpop.permute.xlu0 %2357
        %2361 = vset.pattern.permute.xlu0 0
        %2362 = vperm.xlu0 %2361, %v1190
        %v2363 = vpop.permute.xlu0 %2362
        %2366 = vset.pattern.permute.xlu0 0
        %2367 = vperm.xlu0 %2366, %v1191
        %v2368 = vpop.permute.xlu0 %2367
        %2371 = vset.pattern.permute.xlu0 0
        %2372 = vperm.xlu0 %2371, %v1192
        %v2373 = vpop.permute.xlu0 %2372
        %2376 = vset.pattern.permute.xlu0 0
        %2377 = vperm.xlu0 %2376, %v1193
        %v2378 = vpop.permute.xlu0 %2377
        %2381 = vset.pattern.permute.xlu0 0
        %2382 = vperm.xlu0 %2381, %v1194
        %v2383 = vpop.permute.xlu0 %2382
        %2386 = vset.pattern.permute.xlu0 0
        %2387 = vperm.xlu0 %2386, %v1195
        %v2388 = vpop.permute.xlu0 %2387
        %v2390 = vmul.f32 %v2342, %v2353
        %v2391 = vmul.f32 %v2349, %v2358
        %v2392 = vmul.f32 %v2348, %v2363
        %v2393 = vmul.f32 %v2347, %v2368
        %v2394 = vmul.f32 %v2346, %v2373
        %v2395 = vmul.f32 %v2345, %v2378
        %v2396 = vmul.f32 %v2344, %v2383
        %v2397 = vmul.f32 %v2343, %v2388
        %v2399 = vsel %vm1374, %v2390, 0
        %v2402 = vsel %vm1374, %v2391, 0
        %v2405 = vsel %vm1374, %v2392, 0
        %v2408 = vsel %vm1374, %v2393, 0
        %v2411 = vsel %vm1374, %v2394, 0
        %v2414 = vsel %vm1374, %v2395, 0
        %v2417 = vsel %vm1374, %v2396, 0
        %v2420 = vsel %vm1374, %v2397, 0
        %2422 = vmatpush.msra.mxu0 0.0
        %2423 = vmatpush.msra.mxu0 0.0
        %2424 = vmatpush.msra.mxu0 0.0
        %2425 = vmatpush.msra.mxu0 0.0
        %2426 = vmatpush.msra.mxu0 0.0
        %2427 = vmatpush.msra.mxu0 0.0
        %2428 = vmatpush.msra.mxu0 0.0
        %2429 = vmatpush.msra.mxu0 0.0
        %2430 = vmatpush.msra.mxu0 0.0
        %2431 = vmatpush.msra.mxu0 0.0
        %2432 = vmatpush.msra.mxu0 0.0
        %2433 = vmatpush.msra.mxu0 0.0
        %2434 = vmatpush.msra.mxu0 0.0
        %2435 = vmatpush.msra.mxu0 %v2301
        %2436 = vmatpush.msra.mxu0 %v2300
        %2437 = vmatpush.msra.mxu0 %v2299
        %2438 = vmatmul.f32.gmra.mxu0 %v2399
        %v2439 = vpop.f32.mrf.mxu0
        %v2440 = vadd.f32 0.0, %v2439
        %2441 = vmatmul.f32.gmra.mxu0 %v2402
        %v2442 = vpop.f32.mrf.mxu0
        %v2443 = vadd.f32 0.0, %v2442
        %2444 = vmatmul.f32.gmra.mxu0 %v2405
        %v2445 = vpop.f32.mrf.mxu0
        %v2446 = vadd.f32 0.0, %v2445
        %2447 = vmatmul.f32.gmra.mxu0 %v2408
        %v2448 = vpop.f32.mrf.mxu0
        %v2449 = vadd.f32 0.0, %v2448
        %2450 = vmatmul.f32.gmra.mxu0 %v2411
        %v2451 = vpop.f32.mrf.mxu0
        %v2452 = vadd.f32 0.0, %v2451
        %2453 = vmatmul.f32.gmra.mxu0 %v2414
        %v2454 = vpop.f32.mrf.mxu0
        %v2455 = vadd.f32 0.0, %v2454
        %2456 = vmatmul.f32.gmra.mxu0 %v2417
        %v2457 = vpop.f32.mrf.mxu0
        %v2458 = vadd.f32 0.0, %v2457
        %2459 = vmatmul.f32.gmra.mxu0 %v2420
        %v2460 = vpop.f32.mrf.mxu0
        %v2461 = vadd.f32 0.0, %v2460
        %2462 = vdwg.mxu0
        %v2463 = vadd.f32 %v2330, %v2440
        %v2464 = vadd.f32 %v2330, %v2443
        %v2465 = vadd.f32 %v2330, %v2446
        %v2466 = vadd.f32 %v2330, %v2449
        %v2467 = vadd.f32 %v2330, %v2452
        %v2468 = vadd.f32 %v2330, %v2455
        %v2469 = vadd.f32 %v2330, %v2458
        %v2470 = vadd.f32 %v2330, %v2461
        %2472 = vset.pattern.permute.xlu0 0
        %2473 = vperm.xlu0 %2472, %v1196
        %v2474 = vpop.permute.xlu0 %2473
        %2477 = vset.pattern.permute.xlu0 0
        %2478 = vperm.xlu0 %2477, %v1197
        %v2479 = vpop.permute.xlu0 %2478
        %2482 = vset.pattern.permute.xlu0 0
        %2483 = vperm.xlu0 %2482, %v1198
        %v2484 = vpop.permute.xlu0 %2483
        %2487 = vset.pattern.permute.xlu0 0
        %2488 = vperm.xlu0 %2487, %v1199
        %v2489 = vpop.permute.xlu0 %2488
        %2492 = vset.pattern.permute.xlu0 0
        %2493 = vperm.xlu0 %2492, %v1200
        %v2494 = vpop.permute.xlu0 %2493
        %2497 = vset.pattern.permute.xlu0 0
        %2498 = vperm.xlu0 %2497, %v1201
        %v2499 = vpop.permute.xlu0 %2498
        %2502 = vset.pattern.permute.xlu0 0
        %2503 = vperm.xlu0 %2502, %v1202
        %v2504 = vpop.permute.xlu0 %2503
        %2507 = vset.pattern.permute.xlu0 0
        %2508 = vperm.xlu0 %2507, %v1203
        %v2509 = vpop.permute.xlu0 %2508
        %v2511 = vmul.f32 %v2298, %v2474
        %v2512 = vmul.f32 %v2291, %v2479
        %v2513 = vmul.f32 %v2292, %v2484
        %v2514 = vmul.f32 %v2293, %v2489
        %v2515 = vmul.f32 %v2294, %v2494
        %v2516 = vmul.f32 %v2295, %v2499
        %v2517 = vmul.f32 %v2296, %v2504
        %v2518 = vmul.f32 %v2297, %v2509
        %v2520 = vsel %vm1374, %v2511, 0
        %v2523 = vsel %vm1374, %v2512, 0
        %v2526 = vsel %vm1374, %v2513, 0
        %v2529 = vsel %vm1374, %v2514, 0
        %v2532 = vsel %vm1374, %v2515, 0
        %v2535 = vsel %vm1374, %v2516, 0
        %v2538 = vsel %vm1374, %v2517, 0
        %v2541 = vsel %vm1374, %v2518, 0
        %2543 = vmatpush.msra.mxu0 0.0
        %2544 = vmatpush.msra.mxu0 0.0
        %2545 = vmatpush.msra.mxu0 0.0
        %2546 = vmatpush.msra.mxu0 0.0
        %2547 = vmatpush.msra.mxu0 0.0
        %2548 = vmatpush.msra.mxu0 0.0
        %2549 = vmatpush.msra.mxu0 0.0
        %2550 = vmatpush.msra.mxu0 0.0
        %2551 = vmatpush.msra.mxu0 0.0
        %2552 = vmatpush.msra.mxu0 0.0
        %2553 = vmatpush.msra.mxu0 0.0
        %2554 = vmatpush.msra.mxu0 0.0
        %2555 = vmatpush.msra.mxu0 0.0
        %2556 = vmatpush.msra.mxu0 %v2304
        %2557 = vmatpush.msra.mxu0 %v2303
        %2558 = vmatpush.msra.mxu0 %v2302
        %2559 = vmatmul.f32.gmra.mxu0 %v2520
        %v2560 = vpop.f32.mrf.mxu0
        %v2561 = vadd.f32 0.0, %v2560
        %2562 = vmatmul.f32.gmra.mxu0 %v2523
        %v2563 = vpop.f32.mrf.mxu0
        %v2564 = vadd.f32 0.0, %v2563
        %2565 = vmatmul.f32.gmra.mxu0 %v2526
        %v2566 = vpop.f32.mrf.mxu0
        %v2567 = vadd.f32 0.0, %v2566
        %2568 = vmatmul.f32.gmra.mxu0 %v2529
        %v2569 = vpop.f32.mrf.mxu0
        %v2570 = vadd.f32 0.0, %v2569
        %2571 = vmatmul.f32.gmra.mxu0 %v2532
        %v2572 = vpop.f32.mrf.mxu0
        %v2573 = vadd.f32 0.0, %v2572
        %2574 = vmatmul.f32.gmra.mxu0 %v2535
        %v2575 = vpop.f32.mrf.mxu0
        %v2576 = vadd.f32 0.0, %v2575
        %2577 = vmatmul.f32.gmra.mxu0 %v2538
        %v2578 = vpop.f32.mrf.mxu0
        %v2579 = vadd.f32 0.0, %v2578
        %2580 = vmatmul.f32.gmra.mxu0 %v2541
        %v2581 = vpop.f32.mrf.mxu0
        %v2582 = vadd.f32 0.0, %v2581
        %2583 = vdwg.mxu0
        %v2584 = vadd.f32 %v2463, %v2561
        %v2585 = vadd.f32 %v2464, %v2564
        %v2586 = vadd.f32 %v2465, %v2567
        %v2587 = vadd.f32 %v2466, %v2570
        %v2588 = vadd.f32 %v2467, %v2573
        %v2589 = vadd.f32 %v2468, %v2576
        %v2590 = vadd.f32 %v2469, %v2579
        %v2591 = vadd.f32 %v2470, %v2582
        %v2592 = vrot.slane %v2291, 1
        %v2593 = vrot.slane %v2292, 1
        %v2594 = vrot.slane %v2293, 1
        %v2595 = vrot.slane %v2294, 1
        %v2596 = vrot.slane %v2295, 1
        %v2597 = vrot.slane %v2296, 1
        %v2598 = vrot.slane %v2297, 1
        %v2599 = vrot.slane %v2298, 1
        %vm2600 = vcmp.lt.s32.totalorder %v2340, 7
        %v2601 = vsel %vm2600, %v2598, %v2599
        %v2602 = vsel %vm2600, %v2597, %v2598
        %v2603 = vsel %vm2600, %v2596, %v2597
        %v2604 = vsel %vm2600, %v2595, %v2596
        %v2605 = vsel %vm2600, %v2594, %v2595
        %v2606 = vsel %vm2600, %v2593, %v2594
        %v2607 = vsel %vm2600, %v2592, %v2593
        %v2608 = vsel %vm2600, %v2599, %v2592
        %2610 = vset.pattern.permute.xlu0 0
        %2611 = vperm.xlu0 %2610, %v1204
        %v2612 = vpop.permute.xlu0 %2611
        %2615 = vset.pattern.permute.xlu0 0
        %2616 = vperm.xlu0 %2615, %v1205
        %v2617 = vpop.permute.xlu0 %2616
        %2620 = vset.pattern.permute.xlu0 0
        %2621 = vperm.xlu0 %2620, %v1206
        %v2622 = vpop.permute.xlu0 %2621
        %2625 = vset.pattern.permute.xlu0 0
        %2626 = vperm.xlu0 %2625, %v1207
        %v2627 = vpop.permute.xlu0 %2626
        %2630 = vset.pattern.permute.xlu0 0
        %2631 = vperm.xlu0 %2630, %v1208
        %v2632 = vpop.permute.xlu0 %2631
        %2635 = vset.pattern.permute.xlu0 0
        %2636 = vperm.xlu0 %2635, %v1209
        %v2637 = vpop.permute.xlu0 %2636
        %2640 = vset.pattern.permute.xlu0 0
        %2641 = vperm.xlu0 %2640, %v1210
        %v2642 = vpop.permute.xlu0 %2641
        %2645 = vset.pattern.permute.xlu0 0
        %2646 = vperm.xlu0 %2645, %v1211
        %v2647 = vpop.permute.xlu0 %2646
        %v2649 = vmul.f32 %v2608, %v2612
        %v2650 = vmul.f32 %v2607, %v2617
        %v2651 = vmul.f32 %v2606, %v2622
        %v2652 = vmul.f32 %v2605, %v2627
        %v2653 = vmul.f32 %v2604, %v2632
        %v2654 = vmul.f32 %v2603, %v2637
        %v2655 = vmul.f32 %v2602, %v2642
        %v2656 = vmul.f32 %v2601, %v2647
        %v2658 = vsel %vm1374, %v2649, 0
        %v2661 = vsel %vm1374, %v2650, 0
        %v2664 = vsel %vm1374, %v2651, 0
        %v2667 = vsel %vm1374, %v2652, 0
        %v2670 = vsel %vm1374, %v2653, 0
        %v2673 = vsel %vm1374, %v2654, 0
        %v2676 = vsel %vm1374, %v2655, 0
        %v2679 = vsel %vm1374, %v2656, 0
        %2681 = vmatpush.msra.mxu0 0.0
        %2682 = vmatpush.msra.mxu0 0.0
        %2683 = vmatpush.msra.mxu0 0.0
        %2684 = vmatpush.msra.mxu0 0.0
        %2685 = vmatpush.msra.mxu0 0.0
        %2686 = vmatpush.msra.mxu0 0.0
        %2687 = vmatpush.msra.mxu0 0.0
        %2688 = vmatpush.msra.mxu0 0.0
        %2689 = vmatpush.msra.mxu0 0.0
        %2690 = vmatpush.msra.mxu0 0.0
        %2691 = vmatpush.msra.mxu0 0.0
        %2692 = vmatpush.msra.mxu0 0.0
        %2693 = vmatpush.msra.mxu0 0.0
        %2694 = vmatpush.msra.mxu0 %v2307
        %2695 = vmatpush.msra.mxu0 %v2306
        %2696 = vmatpush.msra.mxu0 %v2305
        %2697 = vmatmul.f32.gmra.mxu0 %v2658
        %v2698 = vpop.f32.mrf.mxu0
        %v2699 = vadd.f32 0.0, %v2698
        %2700 = vmatmul.f32.gmra.mxu0 %v2661
        %v2701 = vpop.f32.mrf.mxu0
        %v2702 = vadd.f32 0.0, %v2701
        %2703 = vmatmul.f32.gmra.mxu0 %v2664
        %v2704 = vpop.f32.mrf.mxu0
        %v2705 = vadd.f32 0.0, %v2704
        %2706 = vmatmul.f32.gmra.mxu0 %v2667
        %v2707 = vpop.f32.mrf.mxu0
        %v2708 = vadd.f32 0.0, %v2707
        %2709 = vmatmul.f32.gmra.mxu0 %v2670
        %v2710 = vpop.f32.mrf.mxu0
        %v2711 = vadd.f32 0.0, %v2710
        %2712 = vmatmul.f32.gmra.mxu0 %v2673
        %v2713 = vpop.f32.mrf.mxu0
        %v2714 = vadd.f32 0.0, %v2713
        %2715 = vmatmul.f32.gmra.mxu0 %v2676
        %v2716 = vpop.f32.mrf.mxu0
        %v2717 = vadd.f32 0.0, %v2716
        %2718 = vmatmul.f32.gmra.mxu0 %v2679
        %v2719 = vpop.f32.mrf.mxu0
        %v2720 = vadd.f32 0.0, %v2719
        %2721 = vdwg.mxu0
        %v2722 = vadd.f32 %v2584, %v2699
        %v2723 = vadd.f32 %v2585, %v2702
        %v2724 = vadd.f32 %v2586, %v2705
        %v2725 = vadd.f32 %v2587, %v2708
        %v2726 = vadd.f32 %v2588, %v2711
        %v2727 = vadd.f32 %v2589, %v2714
        %v2728 = vadd.f32 %v2590, %v2717
        %v2729 = vadd.f32 %v2591, %v2720
        %2731 = vset.pattern.permute.xlu0 0
        %2732 = vperm.xlu0 %2731, %v1212
        %v2733 = vpop.permute.xlu0 %2732
        %2736 = vset.pattern.permute.xlu0 0
        %2737 = vperm.xlu0 %2736, %v1213
        %v2738 = vpop.permute.xlu0 %2737
        %2741 = vset.pattern.permute.xlu0 0
        %2742 = vperm.xlu0 %2741, %v1214
        %v2743 = vpop.permute.xlu0 %2742
        %2746 = vset.pattern.permute.xlu0 0
        %2747 = vperm.xlu0 %2746, %v1215
        %v2748 = vpop.permute.xlu0 %2747
        %2751 = vset.pattern.permute.xlu0 0
        %2752 = vperm.xlu0 %2751, %v1216
        %v2753 = vpop.permute.xlu0 %2752
        %2756 = vset.pattern.permute.xlu0 0
        %2757 = vperm.xlu0 %2756, %v1217
        %v2758 = vpop.permute.xlu0 %2757
        %2761 = vset.pattern.permute.xlu0 0
        %2762 = vperm.xlu0 %2761, %v1218
        %v2763 = vpop.permute.xlu0 %2762
        %2766 = vset.pattern.permute.xlu0 0
        %2767 = vperm.xlu0 %2766, %v1219
        %v2768 = vpop.permute.xlu0 %2767
        %v2770 = vmul.f32 %v2349, %v2733
        %v2771 = vmul.f32 %v2348, %v2738
        %v2772 = vmul.f32 %v2347, %v2743
        %v2773 = vmul.f32 %v2346, %v2748
        %v2774 = vmul.f32 %v2345, %v2753
        %v2775 = vmul.f32 %v2344, %v2758
        %v2776 = vmul.f32 %v2343, %v2763
        %v2777 = vmul.f32 %v2342, %v2768
        %v2779 = vsel %vm1374, %v2770, 0
        %v2782 = vsel %vm1374, %v2771, 0
        %v2785 = vsel %vm1374, %v2772, 0
        %v2788 = vsel %vm1374, %v2773, 0
        %v2791 = vsel %vm1374, %v2774, 0
        %v2794 = vsel %vm1374, %v2775, 0
        %v2797 = vsel %vm1374, %v2776, 0
        %v2800 = vsel %vm1374, %v2777, 0
        %2802 = vmatpush.msra.mxu0 0.0
        %2803 = vmatpush.msra.mxu0 0.0
        %2804 = vmatpush.msra.mxu0 0.0
        %2805 = vmatpush.msra.mxu0 0.0
        %2806 = vmatpush.msra.mxu0 0.0
        %2807 = vmatpush.msra.mxu0 0.0
        %2808 = vmatpush.msra.mxu0 0.0
        %2809 = vmatpush.msra.mxu0 0.0
        %2810 = vmatpush.msra.mxu0 0.0
        %2811 = vmatpush.msra.mxu0 0.0
        %2812 = vmatpush.msra.mxu0 0.0
        %2813 = vmatpush.msra.mxu0 0.0
        %2814 = vmatpush.msra.mxu0 0.0
        %2815 = vmatpush.msra.mxu0 %v2310
        %2816 = vmatpush.msra.mxu0 %v2309
        %2817 = vmatpush.msra.mxu0 %v2308
        %2818 = vmatmul.f32.gmra.mxu0 %v2779
        %v2819 = vpop.f32.mrf.mxu0
        %v2820 = vadd.f32 0.0, %v2819
        %2821 = vmatmul.f32.gmra.mxu0 %v2782
        %v2822 = vpop.f32.mrf.mxu0
        %v2823 = vadd.f32 0.0, %v2822
        %2824 = vmatmul.f32.gmra.mxu0 %v2785
        %v2825 = vpop.f32.mrf.mxu0
        %v2826 = vadd.f32 0.0, %v2825
        %2827 = vmatmul.f32.gmra.mxu0 %v2788
        %v2828 = vpop.f32.mrf.mxu0
        %v2829 = vadd.f32 0.0, %v2828
        %2830 = vmatmul.f32.gmra.mxu0 %v2791
        %v2831 = vpop.f32.mrf.mxu0
        %v2832 = vadd.f32 0.0, %v2831
        %2833 = vmatmul.f32.gmra.mxu0 %v2794
        %v2834 = vpop.f32.mrf.mxu0
        %v2835 = vadd.f32 0.0, %v2834
        %2836 = vmatmul.f32.gmra.mxu0 %v2797
        %v2837 = vpop.f32.mrf.mxu0
        %v2838 = vadd.f32 0.0, %v2837
        %2839 = vmatmul.f32.gmra.mxu0 %v2800
        %v2840 = vpop.f32.mrf.mxu0
        %v2841 = vadd.f32 0.0, %v2840
        %2842 = vdwg.mxu0
        %v2843 = vadd.f32 %v2722, %v2820
        %v2844 = vadd.f32 %v2723, %v2823
        %v2845 = vadd.f32 %v2724, %v2826
        %v2846 = vadd.f32 %v2725, %v2829
        %v2847 = vadd.f32 %v2726, %v2832
        %v2848 = vadd.f32 %v2727, %v2835
        %v2849 = vadd.f32 %v2728, %v2838
        %v2850 = vadd.f32 %v2729, %v2841
        %2852 = vset.pattern.permute.xlu0 0
        %2853 = vperm.xlu0 %2852, %v1220
        %v2854 = vpop.permute.xlu0 %2853
        %2857 = vset.pattern.permute.xlu0 0
        %2858 = vperm.xlu0 %2857, %v1221
        %v2859 = vpop.permute.xlu0 %2858
        %2862 = vset.pattern.permute.xlu0 0
        %2863 = vperm.xlu0 %2862, %v1222
        %v2864 = vpop.permute.xlu0 %2863
        %2867 = vset.pattern.permute.xlu0 0
        %2868 = vperm.xlu0 %2867, %v1223
        %v2869 = vpop.permute.xlu0 %2868
        %2872 = vset.pattern.permute.xlu0 0
        %2873 = vperm.xlu0 %2872, %v1224
        %v2874 = vpop.permute.xlu0 %2873
        %2877 = vset.pattern.permute.xlu0 0
        %2878 = vperm.xlu0 %2877, %v1225
        %v2879 = vpop.permute.xlu0 %2878
        %2882 = vset.pattern.permute.xlu0 0
        %2883 = vperm.xlu0 %2882, %v1226
        %v2884 = vpop.permute.xlu0 %2883
        %2887 = vset.pattern.permute.xlu0 0
        %2888 = vperm.xlu0 %2887, %v1227
        %v2889 = vpop.permute.xlu0 %2888
        %v2891 = vmul.f32 %v2291, %v2854
        %v2892 = vmul.f32 %v2292, %v2859
        %v2893 = vmul.f32 %v2293, %v2864
        %v2894 = vmul.f32 %v2294, %v2869
        %v2895 = vmul.f32 %v2295, %v2874
        %v2896 = vmul.f32 %v2296, %v2879
        %v2897 = vmul.f32 %v2297, %v2884
        %v2898 = vmul.f32 %v2298, %v2889
        %v2900 = vsel %vm1374, %v2891, 0
        %v2903 = vsel %vm1374, %v2892, 0
        %v2906 = vsel %vm1374, %v2893, 0
        %v2909 = vsel %vm1374, %v2894, 0
        %v2912 = vsel %vm1374, %v2895, 0
        %v2915 = vsel %vm1374, %v2896, 0
        %v2918 = vsel %vm1374, %v2897, 0
        %v2921 = vsel %vm1374, %v2898, 0
        %2923 = vmatpush.msra.mxu0 0.0
        %2924 = vmatpush.msra.mxu0 0.0
        %2925 = vmatpush.msra.mxu0 0.0
        %2926 = vmatpush.msra.mxu0 0.0
        %2927 = vmatpush.msra.mxu0 0.0
        %2928 = vmatpush.msra.mxu0 0.0
        %2929 = vmatpush.msra.mxu0 0.0
        %2930 = vmatpush.msra.mxu0 0.0
        %2931 = vmatpush.msra.mxu0 0.0
        %2932 = vmatpush.msra.mxu0 0.0
        %2933 = vmatpush.msra.mxu0 0.0
        %2934 = vmatpush.msra.mxu0 0.0
        %2935 = vmatpush.msra.mxu0 0.0
        %2936 = vmatpush.msra.mxu0 %v2313
        %2937 = vmatpush.msra.mxu0 %v2312
        %2938 = vmatpush.msra.mxu0 %v2311
        %2939 = vmatmul.f32.gmra.mxu0 %v2900
        %v2940 = vpop.f32.mrf.mxu0
        %v2941 = vadd.f32 0.0, %v2940
        %2942 = vmatmul.f32.gmra.mxu0 %v2903
        %v2943 = vpop.f32.mrf.mxu0
        %v2944 = vadd.f32 0.0, %v2943
        %2945 = vmatmul.f32.gmra.mxu0 %v2906
        %v2946 = vpop.f32.mrf.mxu0
        %v2947 = vadd.f32 0.0, %v2946
        %2948 = vmatmul.f32.gmra.mxu0 %v2909
        %v2949 = vpop.f32.mrf.mxu0
        %v2950 = vadd.f32 0.0, %v2949
        %2951 = vmatmul.f32.gmra.mxu0 %v2912
        %v2952 = vpop.f32.mrf.mxu0
        %v2953 = vadd.f32 0.0, %v2952
        %2954 = vmatmul.f32.gmra.mxu0 %v2915
        %v2955 = vpop.f32.mrf.mxu0
        %v2956 = vadd.f32 0.0, %v2955
        %2957 = vmatmul.f32.gmra.mxu0 %v2918
        %v2958 = vpop.f32.mrf.mxu0
        %v2959 = vadd.f32 0.0, %v2958
        %2960 = vmatmul.f32.gmra.mxu0 %v2921
        %v2961 = vpop.f32.mrf.mxu0
        %v2962 = vadd.f32 0.0, %v2961
        %2963 = vdwg.mxu0
        %v2964 = vadd.f32 %v2843, %v2941
        %v2965 = vadd.f32 %v2844, %v2944
        %v2966 = vadd.f32 %v2845, %v2947
        %v2967 = vadd.f32 %v2846, %v2950
        %v2968 = vadd.f32 %v2847, %v2953
        %v2969 = vadd.f32 %v2848, %v2956
        %v2970 = vadd.f32 %v2849, %v2959
        %v2971 = vadd.f32 %v2850, %v2962
        %2973 = vset.pattern.permute.xlu0 0
        %2974 = vperm.xlu0 %2973, %v1228
        %v2975 = vpop.permute.xlu0 %2974
        %2978 = vset.pattern.permute.xlu0 0
        %2979 = vperm.xlu0 %2978, %v1229
        %v2980 = vpop.permute.xlu0 %2979
        %2983 = vset.pattern.permute.xlu0 0
        %2984 = vperm.xlu0 %2983, %v1230
        %v2985 = vpop.permute.xlu0 %2984
        %2988 = vset.pattern.permute.xlu0 0
        %2989 = vperm.xlu0 %2988, %v1231
        %v2990 = vpop.permute.xlu0 %2989
        %2993 = vset.pattern.permute.xlu0 0
        %2994 = vperm.xlu0 %2993, %v1232
        %v2995 = vpop.permute.xlu0 %2994
        %2998 = vset.pattern.permute.xlu0 0
        %2999 = vperm.xlu0 %2998, %v1233
        %v3000 = vpop.permute.xlu0 %2999
        %3003 = vset.pattern.permute.xlu0 0
        %3004 = vperm.xlu0 %3003, %v1234
        %v3005 = vpop.permute.xlu0 %3004
        %3008 = vset.pattern.permute.xlu0 0
        %3009 = vperm.xlu0 %3008, %v1235
        %v3010 = vpop.permute.xlu0 %3009
        %v3012 = vmul.f32 %v2607, %v2975
        %v3013 = vmul.f32 %v2606, %v2980
        %v3014 = vmul.f32 %v2605, %v2985
        %v3015 = vmul.f32 %v2604, %v2990
        %v3016 = vmul.f32 %v2603, %v2995
        %v3017 = vmul.f32 %v2602, %v3000
        %v3018 = vmul.f32 %v2601, %v3005
        %v3019 = vmul.f32 %v2608, %v3010
        %v3021 = vsel %vm1374, %v3012, 0
        %v3024 = vsel %vm1374, %v3013, 0
        %v3027 = vsel %vm1374, %v3014, 0
        %v3030 = vsel %vm1374, %v3015, 0
        %v3033 = vsel %vm1374, %v3016, 0
        %v3036 = vsel %vm1374, %v3017, 0
        %v3039 = vsel %vm1374, %v3018, 0
        %v3042 = vsel %vm1374, %v3019, 0
        %3044 = vmatpush.msra.mxu0 0.0
        %3045 = vmatpush.msra.mxu0 0.0
        %3046 = vmatpush.msra.mxu0 0.0
        %3047 = vmatpush.msra.mxu0 0.0
        %3048 = vmatpush.msra.mxu0 0.0
        %3049 = vmatpush.msra.mxu0 0.0
        %3050 = vmatpush.msra.mxu0 0.0
        %3051 = vmatpush.msra.mxu0 0.0
        %3052 = vmatpush.msra.mxu0 0.0
        %3053 = vmatpush.msra.mxu0 0.0
        %3054 = vmatpush.msra.mxu0 0.0
        %3055 = vmatpush.msra.mxu0 0.0
        %3056 = vmatpush.msra.mxu0 0.0
        %3057 = vmatpush.msra.mxu0 %v2316
        %3058 = vmatpush.msra.mxu0 %v2315
        %3059 = vmatpush.msra.mxu0 %v2314
        %3060 = vmatmul.f32.gmra.mxu0 %v3021
        %v3061 = vpop.f32.mrf.mxu0
        %v3062 = vadd.f32 0.0, %v3061
        %3063 = vmatmul.f32.gmra.mxu0 %v3024
        %v3064 = vpop.f32.mrf.mxu0
        %v3065 = vadd.f32 0.0, %v3064
        %3066 = vmatmul.f32.gmra.mxu0 %v3027
        %v3067 = vpop.f32.mrf.mxu0
        %v3068 = vadd.f32 0.0, %v3067
        %3069 = vmatmul.f32.gmra.mxu0 %v3030
        %v3070 = vpop.f32.mrf.mxu0
        %v3071 = vadd.f32 0.0, %v3070
        %3072 = vmatmul.f32.gmra.mxu0 %v3033
        %v3073 = vpop.f32.mrf.mxu0
        %v3074 = vadd.f32 0.0, %v3073
        %3075 = vmatmul.f32.gmra.mxu0 %v3036
        %v3076 = vpop.f32.mrf.mxu0
        %v3077 = vadd.f32 0.0, %v3076
        %3078 = vmatmul.f32.gmra.mxu0 %v3039
        %v3079 = vpop.f32.mrf.mxu0
        %v3080 = vadd.f32 0.0, %v3079
        %3081 = vmatmul.f32.gmra.mxu0 %v3042
        %v3082 = vpop.f32.mrf.mxu0
        %v3083 = vadd.f32 0.0, %v3082
        %3084 = vdwg.mxu0
        %v3085 = vadd.f32 %v2964, %v3062
        %v3086 = vadd.f32 %v2965, %v3065
        %v3087 = vadd.f32 %v2966, %v3068
        %v3088 = vadd.f32 %v2967, %v3071
        %v3089 = vadd.f32 %v2968, %v3074
        %v3090 = vadd.f32 %v2969, %v3077
        %v3091 = vadd.f32 %v2970, %v3080
        %v3092 = vadd.f32 %v2971, %v3083
        %3094 = vset.pattern.permute.xlu0 0
        %3095 = vperm.xlu0 %3094, %v1236
        %v3096 = vpop.permute.xlu0 %3095
        %3099 = vset.pattern.permute.xlu0 0
        %3100 = vperm.xlu0 %3099, %v1237
        %v3101 = vpop.permute.xlu0 %3100
        %3104 = vset.pattern.permute.xlu0 0
        %3105 = vperm.xlu0 %3104, %v1238
        %v3106 = vpop.permute.xlu0 %3105
        %3109 = vset.pattern.permute.xlu0 0
        %3110 = vperm.xlu0 %3109, %v1239
        %v3111 = vpop.permute.xlu0 %3110
        %3114 = vset.pattern.permute.xlu0 0
        %3115 = vperm.xlu0 %3114, %v1240
        %v3116 = vpop.permute.xlu0 %3115
        %3119 = vset.pattern.permute.xlu0 0
        %3120 = vperm.xlu0 %3119, %v1241
        %v3121 = vpop.permute.xlu0 %3120
        %3124 = vset.pattern.permute.xlu0 0
        %3125 = vperm.xlu0 %3124, %v1242
        %v3126 = vpop.permute.xlu0 %3125
        %3129 = vset.pattern.permute.xlu0 0
        %3130 = vperm.xlu0 %3129, %v1243
        %v3131 = vpop.permute.xlu0 %3130
        %v3133 = vmul.f32 %v2348, %v3096
        %v3134 = vmul.f32 %v2347, %v3101
        %v3135 = vmul.f32 %v2346, %v3106
        %v3136 = vmul.f32 %v2345, %v3111
        %v3137 = vmul.f32 %v2344, %v3116
        %v3138 = vmul.f32 %v2343, %v3121
        %v3139 = vmul.f32 %v2342, %v3126
        %v3140 = vmul.f32 %v2349, %v3131
        %v3142 = vsel %vm1374, %v3133, 0
        %v3145 = vsel %vm1374, %v3134, 0
        %v3148 = vsel %vm1374, %v3135, 0
        %v3151 = vsel %vm1374, %v3136, 0
        %v3154 = vsel %vm1374, %v3137, 0
        %v3157 = vsel %vm1374, %v3138, 0
        %v3160 = vsel %vm1374, %v3139, 0
        %v3163 = vsel %vm1374, %v3140, 0
        %3165 = vmatpush.msra.mxu0 0.0
        %3166 = vmatpush.msra.mxu0 0.0
        %3167 = vmatpush.msra.mxu0 0.0
        %3168 = vmatpush.msra.mxu0 0.0
        %3169 = vmatpush.msra.mxu0 0.0
        %3170 = vmatpush.msra.mxu0 0.0
        %3171 = vmatpush.msra.mxu0 0.0
        %3172 = vmatpush.msra.mxu0 0.0
        %3173 = vmatpush.msra.mxu0 0.0
        %3174 = vmatpush.msra.mxu0 0.0
        %3175 = vmatpush.msra.mxu0 0.0
        %3176 = vmatpush.msra.mxu0 0.0
        %3177 = vmatpush.msra.mxu0 0.0
        %3178 = vmatpush.msra.mxu0 %v2319
        %3179 = vmatpush.msra.mxu0 %v2318
        %3180 = vmatpush.msra.mxu0 %v2317
        %3181 = vmatmul.f32.gmra.mxu0 %v3142
        %v3182 = vpop.f32.mrf.mxu0
        %v3183 = vadd.f32 0.0, %v3182
        %3184 = vmatmul.f32.gmra.mxu0 %v3145
        %v3185 = vpop.f32.mrf.mxu0
        %v3186 = vadd.f32 0.0, %v3185
        %3187 = vmatmul.f32.gmra.mxu0 %v3148
        %v3188 = vpop.f32.mrf.mxu0
        %v3189 = vadd.f32 0.0, %v3188
        %3190 = vmatmul.f32.gmra.mxu0 %v3151
        %v3191 = vpop.f32.mrf.mxu0
        %v3192 = vadd.f32 0.0, %v3191
        %3193 = vmatmul.f32.gmra.mxu0 %v3154
        %v3194 = vpop.f32.mrf.mxu0
        %v3195 = vadd.f32 0.0, %v3194
        %3196 = vmatmul.f32.gmra.mxu0 %v3157
        %v3197 = vpop.f32.mrf.mxu0
        %v3198 = vadd.f32 0.0, %v3197
        %3199 = vmatmul.f32.gmra.mxu0 %v3160
        %v3200 = vpop.f32.mrf.mxu0
        %v3201 = vadd.f32 0.0, %v3200
        %3202 = vmatmul.f32.gmra.mxu0 %v3163
        %v3203 = vpop.f32.mrf.mxu0
        %v3204 = vadd.f32 0.0, %v3203
        %3205 = vdwg.mxu0
        %v3206 = vadd.f32 %v3085, %v3183
        %v3207 = vadd.f32 %v3086, %v3186
        %v3208 = vadd.f32 %v3087, %v3189
        %v3209 = vadd.f32 %v3088, %v3192
        %v3210 = vadd.f32 %v3089, %v3195
        %v3211 = vadd.f32 %v3090, %v3198
        %v3212 = vadd.f32 %v3091, %v3201
        %v3213 = vadd.f32 %v3092, %v3204
        %3215 = vset.pattern.permute.xlu0 0
        %3216 = vperm.xlu0 %3215, %v1244
        %v3217 = vpop.permute.xlu0 %3216
        %3220 = vset.pattern.permute.xlu0 0
        %3221 = vperm.xlu0 %3220, %v1245
        %v3222 = vpop.permute.xlu0 %3221
        %3225 = vset.pattern.permute.xlu0 0
        %3226 = vperm.xlu0 %3225, %v1246
        %v3227 = vpop.permute.xlu0 %3226
        %3230 = vset.pattern.permute.xlu0 0
        %3231 = vperm.xlu0 %3230, %v1247
        %v3232 = vpop.permute.xlu0 %3231
        %3235 = vset.pattern.permute.xlu0 0
        %3236 = vperm.xlu0 %3235, %v1248
        %v3237 = vpop.permute.xlu0 %3236
        %3240 = vset.pattern.permute.xlu0 0
        %3241 = vperm.xlu0 %3240, %v1249
        %v3242 = vpop.permute.xlu0 %3241
        %3245 = vset.pattern.permute.xlu0 0
        %3246 = vperm.xlu0 %3245, %v1250
        %v3247 = vpop.permute.xlu0 %3246
        %3250 = vset.pattern.permute.xlu0 0
        %3251 = vperm.xlu0 %3250, %v1251
        %v3252 = vpop.permute.xlu0 %3251
        %v3254 = vmul.f32 %v2292, %v3217
        %v3255 = vmul.f32 %v2293, %v3222
        %v3256 = vmul.f32 %v2294, %v3227
        %v3257 = vmul.f32 %v2295, %v3232
        %v3258 = vmul.f32 %v2296, %v3237
        %v3259 = vmul.f32 %v2297, %v3242
        %v3260 = vmul.f32 %v2298, %v3247
        %v3261 = vmul.f32 %v2291, %v3252
        %v3263 = vsel %vm1374, %v3254, 0
        %v3266 = vsel %vm1374, %v3255, 0
        %v3269 = vsel %vm1374, %v3256, 0
        %v3272 = vsel %vm1374, %v3257, 0
        %v3275 = vsel %vm1374, %v3258, 0
        %v3278 = vsel %vm1374, %v3259, 0
        %v3281 = vsel %vm1374, %v3260, 0
        %v3284 = vsel %vm1374, %v3261, 0
        %3286 = vmatpush.msra.mxu0 0.0
        %3287 = vmatpush.msra.mxu0 0.0
        %3288 = vmatpush.msra.mxu0 0.0
        %3289 = vmatpush.msra.mxu0 0.0
        %3290 = vmatpush.msra.mxu0 0.0
        %3291 = vmatpush.msra.mxu0 0.0
        %3292 = vmatpush.msra.mxu0 0.0
        %3293 = vmatpush.msra.mxu0 0.0
        %3294 = vmatpush.msra.mxu0 0.0
        %3295 = vmatpush.msra.mxu0 0.0
        %3296 = vmatpush.msra.mxu0 0.0
        %3297 = vmatpush.msra.mxu0 0.0
        %3298 = vmatpush.msra.mxu0 0.0
        %3299 = vmatpush.msra.mxu0 %v2322
        %3300 = vmatpush.msra.mxu0 %v2321
        %3301 = vmatpush.msra.mxu0 %v2320
        %3302 = vmatmul.f32.gmra.mxu0 %v3263
        %v3303 = vpop.f32.mrf.mxu0
        %v3304 = vadd.f32 0.0, %v3303
        %3305 = vmatmul.f32.gmra.mxu0 %v3266
        %v3306 = vpop.f32.mrf.mxu0
        %v3307 = vadd.f32 0.0, %v3306
        %3308 = vmatmul.f32.gmra.mxu0 %v3269
        %v3309 = vpop.f32.mrf.mxu0
        %v3310 = vadd.f32 0.0, %v3309
        %3311 = vmatmul.f32.gmra.mxu0 %v3272
        %v3312 = vpop.f32.mrf.mxu0
        %v3313 = vadd.f32 0.0, %v3312
        %3314 = vmatmul.f32.gmra.mxu0 %v3275
        %v3315 = vpop.f32.mrf.mxu0
        %v3316 = vadd.f32 0.0, %v3315
        %3317 = vmatmul.f32.gmra.mxu0 %v3278
        %v3318 = vpop.f32.mrf.mxu0
        %v3319 = vadd.f32 0.0, %v3318
        %3320 = vmatmul.f32.gmra.mxu0 %v3281
        %v3321 = vpop.f32.mrf.mxu0
        %v3322 = vadd.f32 0.0, %v3321
        %3323 = vmatmul.f32.gmra.mxu0 %v3284
        %v3324 = vpop.f32.mrf.mxu0
        %v3325 = vadd.f32 0.0, %v3324
        %3326 = vdwg.mxu0
        %v3327 = vadd.f32 %v3206, %v3304
        %v3328 = vadd.f32 %v3207, %v3307
        %v3329 = vadd.f32 %v3208, %v3310
        %v3330 = vadd.f32 %v3209, %v3313
        %v3331 = vadd.f32 %v3210, %v3316
        %v3332 = vadd.f32 %v3211, %v3319
        %v3333 = vadd.f32 %v3212, %v3322
        %v3334 = vadd.f32 %v3213, %v3325
        %3336 = vset.pattern.permute.xlu0 0
        %3337 = vperm.xlu0 %3336, %v1252
        %v3338 = vpop.permute.xlu0 %3337
        %3341 = vset.pattern.permute.xlu0 0
        %3342 = vperm.xlu0 %3341, %v1253
        %v3343 = vpop.permute.xlu0 %3342
        %3346 = vset.pattern.permute.xlu0 0
        %3347 = vperm.xlu0 %3346, %v1254
        %v3348 = vpop.permute.xlu0 %3347
        %3351 = vset.pattern.permute.xlu0 0
        %3352 = vperm.xlu0 %3351, %v1255
        %v3353 = vpop.permute.xlu0 %3352
        %3356 = vset.pattern.permute.xlu0 0
        %3357 = vperm.xlu0 %3356, %v1256
        %v3358 = vpop.permute.xlu0 %3357
        %3361 = vset.pattern.permute.xlu0 0
        %3362 = vperm.xlu0 %3361, %v1257
        %v3363 = vpop.permute.xlu0 %3362
        %3366 = vset.pattern.permute.xlu0 0
        %3367 = vperm.xlu0 %3366, %v1258
        %v3368 = vpop.permute.xlu0 %3367
        %3371 = vset.pattern.permute.xlu0 0
        %3372 = vperm.xlu0 %3371, %v1259
        %v3373 = vpop.permute.xlu0 %3372
        %v3375 = vmul.f32 %v2606, %v3338
        %v3376 = vmul.f32 %v2605, %v3343
        %v3377 = vmul.f32 %v2604, %v3348
        %v3378 = vmul.f32 %v2603, %v3353
        %v3379 = vmul.f32 %v2602, %v3358
        %v3380 = vmul.f32 %v2601, %v3363
        %v3381 = vmul.f32 %v2608, %v3368
        %v3382 = vmul.f32 %v2607, %v3373
        %v3384 = vsel %vm1374, %v3375, 0
        %v3387 = vsel %vm1374, %v3376, 0
        %v3390 = vsel %vm1374, %v3377, 0
        %v3393 = vsel %vm1374, %v3378, 0
        %v3396 = vsel %vm1374, %v3379, 0
        %v3399 = vsel %vm1374, %v3380, 0
        %v3402 = vsel %vm1374, %v3381, 0
        %v3405 = vsel %vm1374, %v3382, 0
        %3407 = vmatpush.msra.mxu0 0.0
        %3408 = vmatpush.msra.mxu0 0.0
        %3409 = vmatpush.msra.mxu0 0.0
        %3410 = vmatpush.msra.mxu0 0.0
        %3411 = vmatpush.msra.mxu0 0.0
        %3412 = vmatpush.msra.mxu0 0.0
        %3413 = vmatpush.msra.mxu0 0.0
        %3414 = vmatpush.msra.mxu0 0.0
        %3415 = vmatpush.msra.mxu0 0.0
        %3416 = vmatpush.msra.mxu0 0.0
        %3417 = vmatpush.msra.mxu0 0.0
        %3418 = vmatpush.msra.mxu0 0.0
        %3419 = vmatpush.msra.mxu0 0.0
        %3420 = vmatpush.msra.mxu0 %v2325
        %3421 = vmatpush.msra.mxu0 %v2324
        %3422 = vmatpush.msra.mxu0 %v2323
        %3423 = vmatmul.f32.gmra.mxu0 %v3384
        %v3424 = vpop.f32.mrf.mxu0
        %v3425 = vadd.f32 0.0, %v3424
        %3426 = vmatmul.f32.gmra.mxu0 %v3387
        %v3427 = vpop.f32.mrf.mxu0
        %v3428 = vadd.f32 0.0, %v3427
        %3429 = vmatmul.f32.gmra.mxu0 %v3390
        %v3430 = vpop.f32.mrf.mxu0
        %v3431 = vadd.f32 0.0, %v3430
        %3432 = vmatmul.f32.gmra.mxu0 %v3393
        %v3433 = vpop.f32.mrf.mxu0
        %v3434 = vadd.f32 0.0, %v3433
        %3435 = vmatmul.f32.gmra.mxu0 %v3396
        %v3436 = vpop.f32.mrf.mxu0
        %v3437 = vadd.f32 0.0, %v3436
        %3438 = vmatmul.f32.gmra.mxu0 %v3399
        %v3439 = vpop.f32.mrf.mxu0
        %v3440 = vadd.f32 0.0, %v3439
        %3441 = vmatmul.f32.gmra.mxu0 %v3402
        %v3442 = vpop.f32.mrf.mxu0
        %v3443 = vadd.f32 0.0, %v3442
        %3444 = vmatmul.f32.gmra.mxu0 %v3405
        %v3445 = vpop.f32.mrf.mxu0
        %v3446 = vadd.f32 0.0, %v3445
        %3447 = vdwg.mxu0
        %v3448 = vadd.f32 %v3327, %v3425
        %v3449 = vadd.f32 %v3328, %v3428
        %v3450 = vadd.f32 %v3329, %v3431
        %v3451 = vadd.f32 %v3330, %v3434
        %v3452 = vadd.f32 %v3331, %v3437
        %v3453 = vadd.f32 %v3332, %v3440
        %v3454 = vadd.f32 %v3333, %v3443
        %v3455 = vadd.f32 %v3334, %v3446
        %3464 = vrot.lane.b32.xlu0 %v3448, 24
        %v3465 = vpop.permute.xlu0 %3464
        %3466 = vrot.lane.b32.xlu0 %v3449, 24
        %v3467 = vpop.permute.xlu0 %3466
        %3468 = vrot.lane.b32.xlu0 %v3450, 24
        %v3469 = vpop.permute.xlu0 %3468
        %3470 = vrot.lane.b32.xlu0 %v3451, 24
        %v3471 = vpop.permute.xlu0 %3470
        %3472 = vrot.lane.b32.xlu0 %v3452, 24
        %v3473 = vpop.permute.xlu0 %3472
        %3474 = vrot.lane.b32.xlu0 %v3453, 24
        %v3475 = vpop.permute.xlu0 %3474
        %3476 = vrot.lane.b32.xlu0 %v3454, 24
        %v3477 = vpop.permute.xlu0 %3476
        %3478 = vrot.lane.b32.xlu0 %v3455, 24
        %v3479 = vpop.permute.xlu0 %3478
        %v3488 = vsel %vm1374, %v2244, %v3465
        %v3489 = vsel %vm1374, %v2247, %v3467
        %v3490 = vsel %vm1374, %v2250, %v3469
        %v3491 = vsel %vm1374, %v2253, %v3471
        %v3492 = vsel %vm1374, %v2256, %v3473
        %v3493 = vsel %vm1374, %v2259, %v3475
        %v3494 = vsel %vm1374, %v2262, %v3477
        %v3495 = vsel %vm1374, %v2265, %v3479
        %v3496 = vld [vmem:[%s51] sm:$0x1]
        %v3498 = vperm.slane %v3496, 0
        %v3500 = vmul.f32 %v3488, %v3498
        %v3501 = vmul.f32 %v3489, %v3498
        %v3502 = vmul.f32 %v3490, %v3498
        %v3503 = vmul.f32 %v3491, %v3498
        %v3504 = vmul.f32 %v3492, %v3498
        %v3505 = vmul.f32 %v3493, %v3498
        %v3506 = vmul.f32 %v3494, %v3498
        %v3507 = vmul.f32 %v3495, %v3498
        %v3508 = vld [vmem:[%s53] sm:$0x1]
        %v3510 = vperm.slane %v3508, 0
        %v3512 = vadd.f32 %v3500, %v3510
        %v3513 = vadd.f32 %v3501, %v3510
        %v3514 = vadd.f32 %v3502, %v3510
        %v3515 = vadd.f32 %v3503, %v3510
        %v3516 = vadd.f32 %v3504, %v3510
        %v3517 = vadd.f32 %v3505, %v3510
        %v3518 = vadd.f32 %v3506, %v3510
        %v3519 = vadd.f32 %v3507, %v3510
        %v3520 = vmax.f32 %v3512, 0.0
        %v3521 = vmax.f32 %v3513, 0.0
        %v3522 = vmax.f32 %v3514, 0.0
        %v3523 = vmax.f32 %v3515, 0.0
        %v3524 = vmax.f32 %v3516, 0.0
        %v3525 = vmax.f32 %v3517, 0.0
        %v3526 = vmax.f32 %v3518, 0.0
        %v3527 = vmax.f32 %v3519, 0.0
        %v3528 = vld [vmem:[%s55] sm:$0xff]
        %v3529 = vld [vmem:[%s55 + $0x8] sm:$0xff]
        %v3530 = vld [vmem:[%s55 + $0x10] sm:$0xff]
        %v3531 = vld [vmem:[%s55 + $0x18] sm:$0xff]
        %v3532 = vld [vmem:[%s55 + $0x20] sm:$0xf]
        %v3533 = vld [vmem:[%s55 + $0x28] sm:$0xff]
        %v3534 = vld [vmem:[%s55 + $0x30] sm:$0xff]
        %v3535 = vld [vmem:[%s55 + $0x38] sm:$0xff]
        %v3536 = vld [vmem:[%s55 + $0x40] sm:$0xff]
        %v3537 = vld [vmem:[%s55 + $0x48] sm:$0xf]
        %v3538 = vld [vmem:[%s55 + $0x50] sm:$0xff]
        %v3539 = vld [vmem:[%s55 + $0x58] sm:$0xff]
        %v3540 = vld [vmem:[%s55 + $0x60] sm:$0xff]
        %v3541 = vld [vmem:[%s55 + $0x68] sm:$0xff]
        %v3542 = vld [vmem:[%s55 + $0x70] sm:$0xf]
        %v3543 = vld [vmem:[%s55 + $0x78] sm:$0xff]
        %v3544 = vld [vmem:[%s55 + $0x80] sm:$0xff]
        %v3545 = vld [vmem:[%s55 + $0x88] sm:$0xff]
        %v3546 = vld [vmem:[%s55 + $0x90] sm:$0xff]
        %v3547 = vld [vmem:[%s55 + $0x98] sm:$0xf]
        %v3548 = vld [vmem:[%s55 + $0xa0] sm:$0xff]
        %v3549 = vld [vmem:[%s55 + $0xa8] sm:$0xff]
        %v3550 = vld [vmem:[%s55 + $0xb0] sm:$0xff]
        %v3551 = vld [vmem:[%s55 + $0xb8] sm:$0xff]
        %v3552 = vld [vmem:[%s55 + $0xc0] sm:$0xf]
        %v3553 = vld [vmem:[%s55 + $0xc8] sm:$0xff]
        %v3554 = vld [vmem:[%s55 + $0xd0] sm:$0xff]
        %v3555 = vld [vmem:[%s55 + $0xd8] sm:$0xff]
        %v3556 = vld [vmem:[%s55 + $0xe0] sm:$0xff]
        %v3557 = vld [vmem:[%s55 + $0xe8] sm:$0xf]
        %v3558 = vld [vmem:[%s55 + $0xf0] sm:$0xff]
        %v3559 = vld [vmem:[%s55 + $0xf8] sm:$0xff]
        %v3560 = vld [vmem:[%s55 + $0x100] sm:$0xff]
        %v3561 = vld [vmem:[%s55 + $0x108] sm:$0xff]
        %v3562 = vld [vmem:[%s55 + $0x110] sm:$0xf]
        %v3563 = vld [vmem:[%s55 + $0x118] sm:$0xff]
        %v3564 = vld [vmem:[%s55 + $0x120] sm:$0xff]
        %v3565 = vld [vmem:[%s55 + $0x128] sm:$0xff]
        %v3566 = vld [vmem:[%s55 + $0x130] sm:$0xff]
        %v3567 = vld [vmem:[%s55 + $0x138] sm:$0xf]
        %v3568 = vld [vmem:[%s55 + $0x140] sm:$0xff]
        %v3569 = vld [vmem:[%s55 + $0x148] sm:$0xff]
        %v3570 = vld [vmem:[%s55 + $0x150] sm:$0xff]
        %v3571 = vld [vmem:[%s55 + $0x158] sm:$0xff]
        %v3572 = vld [vmem:[%s55 + $0x160] sm:$0xf]
        %v3573 = vld [vmem:[%s57] sm:$0x1]
        %v3575 = vperm.slane %v3573, 0
        %v3577 = vadd.f32 %v3575, 0.0
        %v3578 = vrot.slane %v3520, 7
        %v3579 = vrot.slane %v3521, 7
        %v3580 = vrot.slane %v3522, 7
        %v3581 = vrot.slane %v3523, 7
        %v3582 = vrot.slane %v3524, 7
        %v3583 = vrot.slane %v3525, 7
        %v3584 = vrot.slane %v3526, 7
        %v3585 = vrot.slane %v3527, 7
        %v3586 = vsel %vm2341, %v3584, %v3585
        %v3587 = vsel %vm2341, %v3583, %v3584
        %v3588 = vsel %vm2341, %v3582, %v3583
        %v3589 = vsel %vm2341, %v3581, %v3582
        %v3590 = vsel %vm2341, %v3580, %v3581
        %v3591 = vsel %vm2341, %v3579, %v3580
        %v3592 = vsel %vm2341, %v3578, %v3579
        %v3593 = vsel %vm2341, %v3585, %v3578
        %v3594 = vmul.f32 %v3586, %v2353
        %v3595 = vmul.f32 %v3593, %v2358
        %v3596 = vmul.f32 %v3592, %v2363
        %v3597 = vmul.f32 %v3591, %v2368
        %v3598 = vmul.f32 %v3590, %v2373
        %v3599 = vmul.f32 %v3589, %v2378
        %v3600 = vmul.f32 %v3588, %v2383
        %v3601 = vmul.f32 %v3587, %v2388
        %vm3602 = vcmask 293888
        %v3604 = vsel %vm3602, %v3594, 0
        %v3607 = vsel %vm3602, %v3595, 0
        %v3610 = vsel %vm3602, %v3596, 0
        %v3613 = vsel %vm3602, %v3597, 0
        %v3616 = vsel %vm3602, %v3598, 0
        %v3619 = vsel %vm3602, %v3599, 0
        %v3622 = vsel %vm3602, %v3600, 0
        %v3625 = vsel %vm3602, %v3601, 0
        %v3628 = vsel %vm1290, %v3532, 0
        %3630 = vmatpush.msra.mxu0 0.0
        %3631 = vmatpush.msra.mxu0 0.0
        %3632 = vmatpush.msra.mxu0 0.0
        %3633 = vmatpush.msra.mxu0 0.0
        %3634 = vmatpush.msra.mxu0 0.0
        %3635 = vmatpush.msra.mxu0 0.0
        %3636 = vmatpush.msra.mxu0 0.0
        %3637 = vmatpush.msra.mxu0 0.0
        %3638 = vmatpush.msra.mxu0 0.0
        %3639 = vmatpush.msra.mxu0 0.0
        %3640 = vmatpush.msra.mxu0 0.0
        %3641 = vmatpush.msra.mxu0 %v3628
        %3642 = vmatpush.msra.mxu0 %v3531
        %3643 = vmatpush.msra.mxu0 %v3530
        %3644 = vmatpush.msra.mxu0 %v3529
        %3645 = vmatpush.msra.mxu0 %v3528
        %3646 = vmatmul.f32.gmra.mxu0 %v3604
        %v3647 = vpop.f32.mrf.mxu0
        %v3648 = vadd.f32 0.0, %v3647
        %3649 = vmatmul.f32.gmra.mxu0 %v3607
        %v3650 = vpop.f32.mrf.mxu0
        %v3651 = vadd.f32 0.0, %v3650
        %3652 = vmatmul.f32.gmra.mxu0 %v3610
        %v3653 = vpop.f32.mrf.mxu0
        %v3654 = vadd.f32 0.0, %v3653
        %3655 = vmatmul.f32.gmra.mxu0 %v3613
        %v3656 = vpop.f32.mrf.mxu0
        %v3657 = vadd.f32 0.0, %v3656
        %3658 = vmatmul.f32.gmra.mxu0 %v3616
        %v3659 = vpop.f32.mrf.mxu0
        %v3660 = vadd.f32 0.0, %v3659
        %3661 = vmatmul.f32.gmra.mxu0 %v3619
        %v3662 = vpop.f32.mrf.mxu0
        %v3663 = vadd.f32 0.0, %v3662
        %3664 = vmatmul.f32.gmra.mxu0 %v3622
        %v3665 = vpop.f32.mrf.mxu0
        %v3666 = vadd.f32 0.0, %v3665
        %3667 = vmatmul.f32.gmra.mxu0 %v3625
        %v3668 = vpop.f32.mrf.mxu0
        %v3669 = vadd.f32 0.0, %v3668
        %3670 = vdwg.mxu0
        %v3671 = vadd.f32 %v3577, %v3648
        %v3672 = vadd.f32 %v3577, %v3651
        %v3673 = vadd.f32 %v3577, %v3654
        %v3674 = vadd.f32 %v3577, %v3657
        %v3675 = vadd.f32 %v3577, %v3660
        %v3676 = vadd.f32 %v3577, %v3663
        %v3677 = vadd.f32 %v3577, %v3666
        %v3678 = vadd.f32 %v3577, %v3669
        %v3679 = vmul.f32 %v3527, %v2474
        %v3680 = vmul.f32 %v3520, %v2479
        %v3681 = vmul.f32 %v3521, %v2484
        %v3682 = vmul.f32 %v3522, %v2489
        %v3683 = vmul.f32 %v3523, %v2494
        %v3684 = vmul.f32 %v3524, %v2499
        %v3685 = vmul.f32 %v3525, %v2504
        %v3686 = vmul.f32 %v3526, %v2509
        %v3688 = vsel %vm3602, %v3679, 0
        %v3691 = vsel %vm3602, %v3680, 0
        %v3694 = vsel %vm3602, %v3681, 0
        %v3697 = vsel %vm3602, %v3682, 0
        %v3700 = vsel %vm3602, %v3683, 0
        %v3703 = vsel %vm3602, %v3684, 0
        %v3706 = vsel %vm3602, %v3685, 0
        %v3709 = vsel %vm3602, %v3686, 0
        %v3712 = vsel %vm1290, %v3537, 0
        %3714 = vmatpush.msra.mxu0 0.0
        %3715 = vmatpush.msra.mxu0 0.0
        %3716 = vmatpush.msra.mxu0 0.0
        %3717 = vmatpush.msra.mxu0 0.0
        %3718 = vmatpush.msra.mxu0 0.0
        %3719 = vmatpush.msra.mxu0 0.0
        %3720 = vmatpush.msra.mxu0 0.0
        %3721 = vmatpush.msra.mxu0 0.0
        %3722 = vmatpush.msra.mxu0 0.0
        %3723 = vmatpush.msra.mxu0 0.0
        %3724 = vmatpush.msra.mxu0 0.0
        %3725 = vmatpush.msra.mxu0 %v3712
        %3726 = vmatpush.msra.mxu0 %v3536
        %3727 = vmatpush.msra.mxu0 %v3535
        %3728 = vmatpush.msra.mxu0 %v3534
        %3729 = vmatpush.msra.mxu0 %v3533
        %3730 = vmatmul.f32.gmra.mxu0 %v3688
        %v3731 = vpop.f32.mrf.mxu0
        %v3732 = vadd.f32 0.0, %v3731
        %3733 = vmatmul.f32.gmra.mxu0 %v3691
        %v3734 = vpop.f32.mrf.mxu0
        %v3735 = vadd.f32 0.0, %v3734
        %3736 = vmatmul.f32.gmra.mxu0 %v3694
        %v3737 = vpop.f32.mrf.mxu0
        %v3738 = vadd.f32 0.0, %v3737
        %3739 = vmatmul.f32.gmra.mxu0 %v3697
        %v3740 = vpop.f32.mrf.mxu0
        %v3741 = vadd.f32 0.0, %v3740
        %3742 = vmatmul.f32.gmra.mxu0 %v3700
        %v3743 = vpop.f32.mrf.mxu0
        %v3744 = vadd.f32 0.0, %v3743
        %3745 = vmatmul.f32.gmra.mxu0 %v3703
        %v3746 = vpop.f32.mrf.mxu0
        %v3747 = vadd.f32 0.0, %v3746
        %3748 = vmatmul.f32.gmra.mxu0 %v3706
        %v3749 = vpop.f32.mrf.mxu0
        %v3750 = vadd.f32 0.0, %v3749
        %3751 = vmatmul.f32.gmra.mxu0 %v3709
        %v3752 = vpop.f32.mrf.mxu0
        %v3753 = vadd.f32 0.0, %v3752
        %3754 = vdwg.mxu0
        %v3755 = vadd.f32 %v3671, %v3732
        %v3756 = vadd.f32 %v3672, %v3735
        %v3757 = vadd.f32 %v3673, %v3738
        %v3758 = vadd.f32 %v3674, %v3741
        %v3759 = vadd.f32 %v3675, %v3744
        %v3760 = vadd.f32 %v3676, %v3747
        %v3761 = vadd.f32 %v3677, %v3750
        %v3762 = vadd.f32 %v3678, %v3753
        %v3763 = vrot.slane %v3520, 1
        %v3764 = vrot.slane %v3521, 1
        %v3765 = vrot.slane %v3522, 1
        %v3766 = vrot.slane %v3523, 1
        %v3767 = vrot.slane %v3524, 1
        %v3768 = vrot.slane %v3525, 1
        %v3769 = vrot.slane %v3526, 1
        %v3770 = vrot.slane %v3527, 1
        %v3771 = vsel %vm2600, %v3769, %v3770
        %v3772 = vsel %vm2600, %v3768, %v3769
        %v3773 = vsel %vm2600, %v3767, %v3768
        %v3774 = vsel %vm2600, %v3766, %v3767
        %v3775 = vsel %vm2600, %v3765, %v3766
        %v3776 = vsel %vm2600, %v3764, %v3765
        %v3777 = vsel %vm2600, %v3763, %v3764
        %v3778 = vsel %vm2600, %v3770, %v3763
        %v3779 = vmul.f32 %v3778, %v2612
        %v3780 = vmul.f32 %v3777, %v2617
        %v3781 = vmul.f32 %v3776, %v2622
        %v3782 = vmul.f32 %v3775, %v2627
        %v3783 = vmul.f32 %v3774, %v2632
        %v3784 = vmul.f32 %v3773, %v2637
        %v3785 = vmul.f32 %v3772, %v2642
        %v3786 = vmul.f32 %v3771, %v2647
        %v3788 = vsel %vm3602, %v3779, 0
        %v3791 = vsel %vm3602, %v3780, 0
        %v3794 = vsel %vm3602, %v3781, 0
        %v3797 = vsel %vm3602, %v3782, 0
        %v3800 = vsel %vm3602, %v3783, 0
        %v3803 = vsel %vm3602, %v3784, 0
        %v3806 = vsel %vm3602, %v3785, 0
        %v3809 = vsel %vm3602, %v3786, 0
        %v3812 = vsel %vm1290, %v3542, 0
        %3814 = vmatpush.msra.mxu0 0.0
        %3815 = vmatpush.msra.mxu0 0.0
        %3816 = vmatpush.msra.mxu0 0.0
        %3817 = vmatpush.msra.mxu0 0.0
        %3818 = vmatpush.msra.mxu0 0.0
        %3819 = vmatpush.msra.mxu0 0.0
        %3820 = vmatpush.msra.mxu0 0.0
        %3821 = vmatpush.msra.mxu0 0.0
        %3822 = vmatpush.msra.mxu0 0.0
        %3823 = vmatpush.msra.mxu0 0.0
        %3824 = vmatpush.msra.mxu0 0.0
        %3825 = vmatpush.msra.mxu0 %v3812
        %3826 = vmatpush.msra.mxu0 %v3541
        %3827 = vmatpush.msra.mxu0 %v3540
        %3828 = vmatpush.msra.mxu0 %v3539
        %3829 = vmatpush.msra.mxu0 %v3538
        %3830 = vmatmul.f32.gmra.mxu0 %v3788
        %v3831 = vpop.f32.mrf.mxu0
        %v3832 = vadd.f32 0.0, %v3831
        %3833 = vmatmul.f32.gmra.mxu0 %v3791
        %v3834 = vpop.f32.mrf.mxu0
        %v3835 = vadd.f32 0.0, %v3834
        %3836 = vmatmul.f32.gmra.mxu0 %v3794
        %v3837 = vpop.f32.mrf.mxu0
        %v3838 = vadd.f32 0.0, %v3837
        %3839 = vmatmul.f32.gmra.mxu0 %v3797
        %v3840 = vpop.f32.mrf.mxu0
        %v3841 = vadd.f32 0.0, %v3840
        %3842 = vmatmul.f32.gmra.mxu0 %v3800
        %v3843 = vpop.f32.mrf.mxu0
        %v3844 = vadd.f32 0.0, %v3843
        %3845 = vmatmul.f32.gmra.mxu0 %v3803
        %v3846 = vpop.f32.mrf.mxu0
        %v3847 = vadd.f32 0.0, %v3846
        %3848 = vmatmul.f32.gmra.mxu0 %v3806
        %v3849 = vpop.f32.mrf.mxu0
        %v3850 = vadd.f32 0.0, %v3849
        %3851 = vmatmul.f32.gmra.mxu0 %v3809
        %v3852 = vpop.f32.mrf.mxu0
        %v3853 = vadd.f32 0.0, %v3852
        %3854 = vdwg.mxu0
        %v3855 = vadd.f32 %v3755, %v3832
        %v3856 = vadd.f32 %v3756, %v3835
        %v3857 = vadd.f32 %v3757, %v3838
        %v3858 = vadd.f32 %v3758, %v3841
        %v3859 = vadd.f32 %v3759, %v3844
        %v3860 = vadd.f32 %v3760, %v3847
        %v3861 = vadd.f32 %v3761, %v3850
        %v3862 = vadd.f32 %v3762, %v3853
        %v3863 = vmul.f32 %v3593, %v2733
        %v3864 = vmul.f32 %v3592, %v2738
        %v3865 = vmul.f32 %v3591, %v2743
        %v3866 = vmul.f32 %v3590, %v2748
        %v3867 = vmul.f32 %v3589, %v2753
        %v3868 = vmul.f32 %v3588, %v2758
        %v3869 = vmul.f32 %v3587, %v2763
        %v3870 = vmul.f32 %v3586, %v2768
        %v3872 = vsel %vm3602, %v3863, 0
        %v3875 = vsel %vm3602, %v3864, 0
        %v3878 = vsel %vm3602, %v3865, 0
        %v3881 = vsel %vm3602, %v3866, 0
        %v3884 = vsel %vm3602, %v3867, 0
        %v3887 = vsel %vm3602, %v3868, 0
        %v3890 = vsel %vm3602, %v3869, 0
        %v3893 = vsel %vm3602, %v3870, 0
        %v3896 = vsel %vm1290, %v3547, 0
        %3898 = vmatpush.msra.mxu0 0.0
        %3899 = vmatpush.msra.mxu0 0.0
        %3900 = vmatpush.msra.mxu0 0.0
        %3901 = vmatpush.msra.mxu0 0.0
        %3902 = vmatpush.msra.mxu0 0.0
        %3903 = vmatpush.msra.mxu0 0.0
        %3904 = vmatpush.msra.mxu0 0.0
        %3905 = vmatpush.msra.mxu0 0.0
        %3906 = vmatpush.msra.mxu0 0.0
        %3907 = vmatpush.msra.mxu0 0.0
        %3908 = vmatpush.msra.mxu0 0.0
        %3909 = vmatpush.msra.mxu0 %v3896
        %3910 = vmatpush.msra.mxu0 %v3546
        %3911 = vmatpush.msra.mxu0 %v3545
        %3912 = vmatpush.msra.mxu0 %v3544
        %3913 = vmatpush.msra.mxu0 %v3543
        %3914 = vmatmul.f32.gmra.mxu0 %v3872
        %v3915 = vpop.f32.mrf.mxu0
        %v3916 = vadd.f32 0.0, %v3915
        %3917 = vmatmul.f32.gmra.mxu0 %v3875
        %v3918 = vpop.f32.mrf.mxu0
        %v3919 = vadd.f32 0.0, %v3918
        %3920 = vmatmul.f32.gmra.mxu0 %v3878
        %v3921 = vpop.f32.mrf.mxu0
        %v3922 = vadd.f32 0.0, %v3921
        %3923 = vmatmul.f32.gmra.mxu0 %v3881
        %v3924 = vpop.f32.mrf.mxu0
        %v3925 = vadd.f32 0.0, %v3924
        %3926 = vmatmul.f32.gmra.mxu0 %v3884
        %v3927 = vpop.f32.mrf.mxu0
        %v3928 = vadd.f32 0.0, %v3927
        %3929 = vmatmul.f32.gmra.mxu0 %v3887
        %v3930 = vpop.f32.mrf.mxu0
        %v3931 = vadd.f32 0.0, %v3930
        %3932 = vmatmul.f32.gmra.mxu0 %v3890
        %v3933 = vpop.f32.mrf.mxu0
        %v3934 = vadd.f32 0.0, %v3933
        %3935 = vmatmul.f32.gmra.mxu0 %v3893
        %v3936 = vpop.f32.mrf.mxu0
        %v3937 = vadd.f32 0.0, %v3936
        %3938 = vdwg.mxu0
        %v3939 = vadd.f32 %v3855, %v3916
        %v3940 = vadd.f32 %v3856, %v3919
        %v3941 = vadd.f32 %v3857, %v3922
        %v3942 = vadd.f32 %v3858, %v3925
        %v3943 = vadd.f32 %v3859, %v3928
        %v3944 = vadd.f32 %v3860, %v3931
        %v3945 = vadd.f32 %v3861, %v3934
        %v3946 = vadd.f32 %v3862, %v3937
        %v3947 = vmul.f32 %v3520, %v2854
        %v3948 = vmul.f32 %v3521, %v2859
        %v3949 = vmul.f32 %v3522, %v2864
        %v3950 = vmul.f32 %v3523, %v2869
        %v3951 = vmul.f32 %v3524, %v2874
        %v3952 = vmul.f32 %v3525, %v2879
        %v3953 = vmul.f32 %v3526, %v2884
        %v3954 = vmul.f32 %v3527, %v2889
        %v3956 = vsel %vm3602, %v3947, 0
        %v3959 = vsel %vm3602, %v3948, 0
        %v3962 = vsel %vm3602, %v3949, 0
        %v3965 = vsel %vm3602, %v3950, 0
        %v3968 = vsel %vm3602, %v3951, 0
        %v3971 = vsel %vm3602, %v3952, 0
        %v3974 = vsel %vm3602, %v3953, 0
        %v3977 = vsel %vm3602, %v3954, 0
        %v3980 = vsel %vm1290, %v3552, 0
        %3982 = vmatpush.msra.mxu0 0.0
        %3983 = vmatpush.msra.mxu0 0.0
        %3984 = vmatpush.msra.mxu0 0.0
        %3985 = vmatpush.msra.mxu0 0.0
        %3986 = vmatpush.msra.mxu0 0.0
        %3987 = vmatpush.msra.mxu0 0.0
        %3988 = vmatpush.msra.mxu0 0.0
        %3989 = vmatpush.msra.mxu0 0.0
        %3990 = vmatpush.msra.mxu0 0.0
        %3991 = vmatpush.msra.mxu0 0.0
        %3992 = vmatpush.msra.mxu0 0.0
        %3993 = vmatpush.msra.mxu0 %v3980
        %3994 = vmatpush.msra.mxu0 %v3551
        %3995 = vmatpush.msra.mxu0 %v3550
        %3996 = vmatpush.msra.mxu0 %v3549
        %3997 = vmatpush.msra.mxu0 %v3548
        %3998 = vmatmul.f32.gmra.mxu0 %v3956
        %v3999 = vpop.f32.mrf.mxu0
        %v4000 = vadd.f32 0.0, %v3999
        %4001 = vmatmul.f32.gmra.mxu0 %v3959
        %v4002 = vpop.f32.mrf.mxu0
        %v4003 = vadd.f32 0.0, %v4002
        %4004 = vmatmul.f32.gmra.mxu0 %v3962
        %v4005 = vpop.f32.mrf.mxu0
        %v4006 = vadd.f32 0.0, %v4005
        %4007 = vmatmul.f32.gmra.mxu0 %v3965
        %v4008 = vpop.f32.mrf.mxu0
        %v4009 = vadd.f32 0.0, %v4008
        %4010 = vmatmul.f32.gmra.mxu0 %v3968
        %v4011 = vpop.f32.mrf.mxu0
        %v4012 = vadd.f32 0.0, %v4011
        %4013 = vmatmul.f32.gmra.mxu0 %v3971
        %v4014 = vpop.f32.mrf.mxu0
        %v4015 = vadd.f32 0.0, %v4014
        %4016 = vmatmul.f32.gmra.mxu0 %v3974
        %v4017 = vpop.f32.mrf.mxu0
        %v4018 = vadd.f32 0.0, %v4017
        %4019 = vmatmul.f32.gmra.mxu0 %v3977
        %v4020 = vpop.f32.mrf.mxu0
        %v4021 = vadd.f32 0.0, %v4020
        %4022 = vdwg.mxu0
        %v4023 = vadd.f32 %v3939, %v4000
        %v4024 = vadd.f32 %v3940, %v4003
        %v4025 = vadd.f32 %v3941, %v4006
        %v4026 = vadd.f32 %v3942, %v4009
        %v4027 = vadd.f32 %v3943, %v4012
        %v4028 = vadd.f32 %v3944, %v4015
        %v4029 = vadd.f32 %v3945, %v4018
        %v4030 = vadd.f32 %v3946, %v4021
        %v4031 = vmul.f32 %v3777, %v2975
        %v4032 = vmul.f32 %v3776, %v2980
        %v4033 = vmul.f32 %v3775, %v2985
        %v4034 = vmul.f32 %v3774, %v2990
        %v4035 = vmul.f32 %v3773, %v2995
        %v4036 = vmul.f32 %v3772, %v3000
        %v4037 = vmul.f32 %v3771, %v3005
        %v4038 = vmul.f32 %v3778, %v3010
        %v4040 = vsel %vm3602, %v4031, 0
        %v4043 = vsel %vm3602, %v4032, 0
        %v4046 = vsel %vm3602, %v4033, 0
        %v4049 = vsel %vm3602, %v4034, 0
        %v4052 = vsel %vm3602, %v4035, 0
        %v4055 = vsel %vm3602, %v4036, 0
        %v4058 = vsel %vm3602, %v4037, 0
        %v4061 = vsel %vm3602, %v4038, 0
        %v4064 = vsel %vm1290, %v3557, 0
        %4066 = vmatpush.msra.mxu0 0.0
        %4067 = vmatpush.msra.mxu0 0.0
        %4068 = vmatpush.msra.mxu0 0.0
        %4069 = vmatpush.msra.mxu0 0.0
        %4070 = vmatpush.msra.mxu0 0.0
        %4071 = vmatpush.msra.mxu0 0.0
        %4072 = vmatpush.msra.mxu0 0.0
        %4073 = vmatpush.msra.mxu0 0.0
        %4074 = vmatpush.msra.mxu0 0.0
        %4075 = vmatpush.msra.mxu0 0.0
        %4076 = vmatpush.msra.mxu0 0.0
        %4077 = vmatpush.msra.mxu0 %v4064
        %4078 = vmatpush.msra.mxu0 %v3556
        %4079 = vmatpush.msra.mxu0 %v3555
        %4080 = vmatpush.msra.mxu0 %v3554
        %4081 = vmatpush.msra.mxu0 %v3553
        %4082 = vmatmul.f32.gmra.mxu0 %v4040
        %v4083 = vpop.f32.mrf.mxu0
        %v4084 = vadd.f32 0.0, %v4083
        %4085 = vmatmul.f32.gmra.mxu0 %v4043
        %v4086 = vpop.f32.mrf.mxu0
        %v4087 = vadd.f32 0.0, %v4086
        %4088 = vmatmul.f32.gmra.mxu0 %v4046
        %v4089 = vpop.f32.mrf.mxu0
        %v4090 = vadd.f32 0.0, %v4089
        %4091 = vmatmul.f32.gmra.mxu0 %v4049
        %v4092 = vpop.f32.mrf.mxu0
        %v4093 = vadd.f32 0.0, %v4092
        %4094 = vmatmul.f32.gmra.mxu0 %v4052
        %v4095 = vpop.f32.mrf.mxu0
        %v4096 = vadd.f32 0.0, %v4095
        %4097 = vmatmul.f32.gmra.mxu0 %v4055
        %v4098 = vpop.f32.mrf.mxu0
        %v4099 = vadd.f32 0.0, %v4098
        %4100 = vmatmul.f32.gmra.mxu0 %v4058
        %v4101 = vpop.f32.mrf.mxu0
        %v4102 = vadd.f32 0.0, %v4101
        %4103 = vmatmul.f32.gmra.mxu0 %v4061
        %v4104 = vpop.f32.mrf.mxu0
        %v4105 = vadd.f32 0.0, %v4104
        %4106 = vdwg.mxu0
        %v4107 = vadd.f32 %v4023, %v4084
        %v4108 = vadd.f32 %v4024, %v4087
        %v4109 = vadd.f32 %v4025, %v4090
        %v4110 = vadd.f32 %v4026, %v4093
        %v4111 = vadd.f32 %v4027, %v4096
        %v4112 = vadd.f32 %v4028, %v4099
        %v4113 = vadd.f32 %v4029, %v4102
        %v4114 = vadd.f32 %v4030, %v4105
        %v4115 = vmul.f32 %v3592, %v3096
        %v4116 = vmul.f32 %v3591, %v3101
        %v4117 = vmul.f32 %v3590, %v3106
        %v4118 = vmul.f32 %v3589, %v3111
        %v4119 = vmul.f32 %v3588, %v3116
        %v4120 = vmul.f32 %v3587, %v3121
        %v4121 = vmul.f32 %v3586, %v3126
        %v4122 = vmul.f32 %v3593, %v3131
        %v4124 = vsel %vm3602, %v4115, 0
        %v4127 = vsel %vm3602, %v4116, 0
        %v4130 = vsel %vm3602, %v4117, 0
        %v4133 = vsel %vm3602, %v4118, 0
        %v4136 = vsel %vm3602, %v4119, 0
        %v4139 = vsel %vm3602, %v4120, 0
        %v4142 = vsel %vm3602, %v4121, 0
        %v4145 = vsel %vm3602, %v4122, 0
        %v4148 = vsel %vm1290, %v3562, 0
        %4150 = vmatpush.msra.mxu0 0.0
        %4151 = vmatpush.msra.mxu0 0.0
        %4152 = vmatpush.msra.mxu0 0.0
        %4153 = vmatpush.msra.mxu0 0.0
        %4154 = vmatpush.msra.mxu0 0.0
        %4155 = vmatpush.msra.mxu0 0.0
        %4156 = vmatpush.msra.mxu0 0.0
        %4157 = vmatpush.msra.mxu0 0.0
        %4158 = vmatpush.msra.mxu0 0.0
        %4159 = vmatpush.msra.mxu0 0.0
        %4160 = vmatpush.msra.mxu0 0.0
        %4161 = vmatpush.msra.mxu0 %v4148
        %4162 = vmatpush.msra.mxu0 %v3561
        %4163 = vmatpush.msra.mxu0 %v3560
        %4164 = vmatpush.msra.mxu0 %v3559
        %4165 = vmatpush.msra.mxu0 %v3558
        %4166 = vmatmul.f32.gmra.mxu0 %v4124
        %v4167 = vpop.f32.mrf.mxu0
        %v4168 = vadd.f32 0.0, %v4167
        %4169 = vmatmul.f32.gmra.mxu0 %v4127
        %v4170 = vpop.f32.mrf.mxu0
        %v4171 = vadd.f32 0.0, %v4170
        %4172 = vmatmul.f32.gmra.mxu0 %v4130
        %v4173 = vpop.f32.mrf.mxu0
        %v4174 = vadd.f32 0.0, %v4173
        %4175 = vmatmul.f32.gmra.mxu0 %v4133
        %v4176 = vpop.f32.mrf.mxu0
        %v4177 = vadd.f32 0.0, %v4176
        %4178 = vmatmul.f32.gmra.mxu0 %v4136
        %v4179 = vpop.f32.mrf.mxu0
        %v4180 = vadd.f32 0.0, %v4179
        %4181 = vmatmul.f32.gmra.mxu0 %v4139
        %v4182 = vpop.f32.mrf.mxu0
        %v4183 = vadd.f32 0.0, %v4182
        %4184 = vmatmul.f32.gmra.mxu0 %v4142
        %v4185 = vpop.f32.mrf.mxu0
        %v4186 = vadd.f32 0.0, %v4185
        %4187 = vmatmul.f32.gmra.mxu0 %v4145
        %v4188 = vpop.f32.mrf.mxu0
        %v4189 = vadd.f32 0.0, %v4188
        %4190 = vdwg.mxu0
        %v4191 = vadd.f32 %v4107, %v4168
        %v4192 = vadd.f32 %v4108, %v4171
        %v4193 = vadd.f32 %v4109, %v4174
        %v4194 = vadd.f32 %v4110, %v4177
        %v4195 = vadd.f32 %v4111, %v4180
        %v4196 = vadd.f32 %v4112, %v4183
        %v4197 = vadd.f32 %v4113, %v4186
        %v4198 = vadd.f32 %v4114, %v4189
        %v4199 = vmul.f32 %v3521, %v3217
        %v4200 = vmul.f32 %v3522, %v3222
        %v4201 = vmul.f32 %v3523, %v3227
        %v4202 = vmul.f32 %v3524, %v3232
        %v4203 = vmul.f32 %v3525, %v3237
        %v4204 = vmul.f32 %v3526, %v3242
        %v4205 = vmul.f32 %v3527, %v3247
        %v4206 = vmul.f32 %v3520, %v3252
        %v4208 = vsel %vm3602, %v4199, 0
        %v4211 = vsel %vm3602, %v4200, 0
        %v4214 = vsel %vm3602, %v4201, 0
        %v4217 = vsel %vm3602, %v4202, 0
        %v4220 = vsel %vm3602, %v4203, 0
        %v4223 = vsel %vm3602, %v4204, 0
        %v4226 = vsel %vm3602, %v4205, 0
        %v4229 = vsel %vm3602, %v4206, 0
        %v4232 = vsel %vm1290, %v3567, 0
        %4234 = vmatpush.msra.mxu0 0.0
        %4235 = vmatpush.msra.mxu0 0.0
        %4236 = vmatpush.msra.mxu0 0.0
        %4237 = vmatpush.msra.mxu0 0.0
        %4238 = vmatpush.msra.mxu0 0.0
        %4239 = vmatpush.msra.mxu0 0.0
        %4240 = vmatpush.msra.mxu0 0.0
        %4241 = vmatpush.msra.mxu0 0.0
        %4242 = vmatpush.msra.mxu0 0.0
        %4243 = vmatpush.msra.mxu0 0.0
        %4244 = vmatpush.msra.mxu0 0.0
        %4245 = vmatpush.msra.mxu0 %v4232
        %4246 = vmatpush.msra.mxu0 %v3566
        %4247 = vmatpush.msra.mxu0 %v3565
        %4248 = vmatpush.msra.mxu0 %v3564
        %4249 = vmatpush.msra.mxu0 %v3563
        %4250 = vmatmul.f32.gmra.mxu0 %v4208
        %v4251 = vpop.f32.mrf.mxu0
        %v4252 = vadd.f32 0.0, %v4251
        %4253 = vmatmul.f32.gmra.mxu0 %v4211
        %v4254 = vpop.f32.mrf.mxu0
        %v4255 = vadd.f32 0.0, %v4254
        %4256 = vmatmul.f32.gmra.mxu0 %v4214
        %v4257 = vpop.f32.mrf.mxu0
        %v4258 = vadd.f32 0.0, %v4257
        %4259 = vmatmul.f32.gmra.mxu0 %v4217
        %v4260 = vpop.f32.mrf.mxu0
        %v4261 = vadd.f32 0.0, %v4260
        %4262 = vmatmul.f32.gmra.mxu0 %v4220
        %v4263 = vpop.f32.mrf.mxu0
        %v4264 = vadd.f32 0.0, %v4263
        %4265 = vmatmul.f32.gmra.mxu0 %v4223
        %v4266 = vpop.f32.mrf.mxu0
        %v4267 = vadd.f32 0.0, %v4266
        %4268 = vmatmul.f32.gmra.mxu0 %v4226
        %v4269 = vpop.f32.mrf.mxu0
        %v4270 = vadd.f32 0.0, %v4269
        %4271 = vmatmul.f32.gmra.mxu0 %v4229
        %v4272 = vpop.f32.mrf.mxu0
        %v4273 = vadd.f32 0.0, %v4272
        %4274 = vdwg.mxu0
        %v4275 = vadd.f32 %v4191, %v4252
        %v4276 = vadd.f32 %v4192, %v4255
        %v4277 = vadd.f32 %v4193, %v4258
        %v4278 = vadd.f32 %v4194, %v4261
        %v4279 = vadd.f32 %v4195, %v4264
        %v4280 = vadd.f32 %v4196, %v4267
        %v4281 = vadd.f32 %v4197, %v4270
        %v4282 = vadd.f32 %v4198, %v4273
        %v4283 = vmul.f32 %v3776, %v3338
        %v4284 = vmul.f32 %v3775, %v3343
        %v4285 = vmul.f32 %v3774, %v3348
        %v4286 = vmul.f32 %v3773, %v3353
        %v4287 = vmul.f32 %v3772, %v3358
        %v4288 = vmul.f32 %v3771, %v3363
        %v4289 = vmul.f32 %v3778, %v3368
        %v4290 = vmul.f32 %v3777, %v3373
        %v4292 = vsel %vm3602, %v4283, 0
        %v4295 = vsel %vm3602, %v4284, 0
        %v4298 = vsel %vm3602, %v4285, 0
        %v4301 = vsel %vm3602, %v4286, 0
        %v4304 = vsel %vm3602, %v4287, 0
        %v4307 = vsel %vm3602, %v4288, 0
        %v4310 = vsel %vm3602, %v4289, 0
        %v4313 = vsel %vm3602, %v4290, 0
        %v4316 = vsel %vm1290, %v3572, 0
        %4318 = vmatpush.msra.mxu0 0.0
        %4319 = vmatpush.msra.mxu0 0.0
        %4320 = vmatpush.msra.mxu0 0.0
        %4321 = vmatpush.msra.mxu0 0.0
        %4322 = vmatpush.msra.mxu0 0.0
        %4323 = vmatpush.msra.mxu0 0.0
        %4324 = vmatpush.msra.mxu0 0.0
        %4325 = vmatpush.msra.mxu0 0.0
        %4326 = vmatpush.msra.mxu0 0.0
        %4327 = vmatpush.msra.mxu0 0.0
        %4328 = vmatpush.msra.mxu0 0.0
        %4329 = vmatpush.msra.mxu0 %v4316
        %4330 = vmatpush.msra.mxu0 %v3571
        %4331 = vmatpush.msra.mxu0 %v3570
        %4332 = vmatpush.msra.mxu0 %v3569
        %4333 = vmatpush.msra.mxu0 %v3568
        %4334 = vmatmul.f32.gmra.mxu0 %v4292
        %v4335 = vpop.f32.mrf.mxu0
        %v4336 = vadd.f32 0.0, %v4335
        %4337 = vmatmul.f32.gmra.mxu0 %v4295
        %v4338 = vpop.f32.mrf.mxu0
        %v4339 = vadd.f32 0.0, %v4338
        %4340 = vmatmul.f32.gmra.mxu0 %v4298
        %v4341 = vpop.f32.mrf.mxu0
        %v4342 = vadd.f32 0.0, %v4341
        %4343 = vmatmul.f32.gmra.mxu0 %v4301
        %v4344 = vpop.f32.mrf.mxu0
        %v4345 = vadd.f32 0.0, %v4344
        %4346 = vmatmul.f32.gmra.mxu0 %v4304
        %v4347 = vpop.f32.mrf.mxu0
        %v4348 = vadd.f32 0.0, %v4347
        %4349 = vmatmul.f32.gmra.mxu0 %v4307
        %v4350 = vpop.f32.mrf.mxu0
        %v4351 = vadd.f32 0.0, %v4350
        %4352 = vmatmul.f32.gmra.mxu0 %v4310
        %v4353 = vpop.f32.mrf.mxu0
        %v4354 = vadd.f32 0.0, %v4353
        %4355 = vmatmul.f32.gmra.mxu0 %v4313
        %v4356 = vpop.f32.mrf.mxu0
        %v4357 = vadd.f32 0.0, %v4356
        %4358 = vdwg.mxu0
        %v4359 = vadd.f32 %v4275, %v4336
        %v4360 = vadd.f32 %v4276, %v4339
        %v4361 = vadd.f32 %v4277, %v4342
        %v4362 = vadd.f32 %v4278, %v4345
        %v4363 = vadd.f32 %v4279, %v4348
        %v4364 = vadd.f32 %v4280, %v4351
        %v4365 = vadd.f32 %v4281, %v4354
        %v4366 = vadd.f32 %v4282, %v4357
        %4375 = vrot.lane.b32.xlu0 %v4359, 36
        %v4376 = vpop.permute.xlu0 %4375
        %4377 = vrot.lane.b32.xlu0 %v4360, 36
        %v4378 = vpop.permute.xlu0 %4377
        %4379 = vrot.lane.b32.xlu0 %v4361, 36
        %v4380 = vpop.permute.xlu0 %4379
        %4381 = vrot.lane.b32.xlu0 %v4362, 36
        %v4382 = vpop.permute.xlu0 %4381
        %4383 = vrot.lane.b32.xlu0 %v4363, 36
        %v4384 = vpop.permute.xlu0 %4383
        %4385 = vrot.lane.b32.xlu0 %v4364, 36
        %v4386 = vpop.permute.xlu0 %4385
        %4387 = vrot.lane.b32.xlu0 %v4365, 36
        %v4388 = vpop.permute.xlu0 %4387
        %4389 = vrot.lane.b32.xlu0 %v4366, 36
        %v4390 = vpop.permute.xlu0 %4389
        %v4399 = vsel %vm3602, %v3488, %v4376
        %v4400 = vsel %vm3602, %v3489, %v4378
        %v4401 = vsel %vm3602, %v3490, %v4380
        %v4402 = vsel %vm3602, %v3491, %v4382
        %v4403 = vsel %vm3602, %v3492, %v4384
        %v4404 = vsel %vm3602, %v3493, %v4386
        %v4405 = vsel %vm3602, %v3494, %v4388
        %v4406 = vsel %vm3602, %v3495, %v4390
        %v4407 = vld [vmem:[%s59] sm:$0x1]
        %v4409 = vperm.slane %v4407, 0
        %v4411 = vmul.f32 %v4399, %v4409
        %v4412 = vmul.f32 %v4400, %v4409
        %v4413 = vmul.f32 %v4401, %v4409
        %v4414 = vmul.f32 %v4402, %v4409
        %v4415 = vmul.f32 %v4403, %v4409
        %v4416 = vmul.f32 %v4404, %v4409
        %v4417 = vmul.f32 %v4405, %v4409
        %v4418 = vmul.f32 %v4406, %v4409
        %v4419 = vld [vmem:[%s61] sm:$0x1]
        %v4421 = vperm.slane %v4419, 0
        %v4423 = vadd.f32 %v4411, %v4421
        %v4424 = vadd.f32 %v4412, %v4421
        %v4425 = vadd.f32 %v4413, %v4421
        %v4426 = vadd.f32 %v4414, %v4421
        %v4427 = vadd.f32 %v4415, %v4421
        %v4428 = vadd.f32 %v4416, %v4421
        %v4429 = vadd.f32 %v4417, %v4421
        %v4430 = vadd.f32 %v4418, %v4421
        %v4431 = vmax.f32 %v4423, 0.0
        %v4432 = vmax.f32 %v4424, 0.0
        %v4433 = vmax.f32 %v4425, 0.0
        %v4434 = vmax.f32 %v4426, 0.0
        %v4435 = vmax.f32 %v4427, 0.0
        %v4436 = vmax.f32 %v4428, 0.0
        %v4437 = vmax.f32 %v4429, 0.0
        %v4438 = vmax.f32 %v4430, 0.0
        %v4439 = vld [vmem:[%s63] sm:$0xff]
        %v4440 = vld [vmem:[%s63 + $0x8] sm:$0xff]
        %v4441 = vld [vmem:[%s63 + $0x10] sm:$0xff]
        %v4442 = vld [vmem:[%s63 + $0x18] sm:$0xff]
        %v4443 = vld [vmem:[%s63 + $0x20] sm:$0xff]
        %v4444 = vld [vmem:[%s63 + $0x28] sm:$0xff]
        %v4445 = vld [vmem:[%s63 + $0x30] sm:$0xff]
        %v4446 = vld [vmem:[%s63 + $0x38] sm:$0xff]
        %v4447 = vld [vmem:[%s63 + $0x40] sm:$0xff]
        %v4448 = vld [vmem:[%s63 + $0x48] sm:$0xff]
        %v4449 = vld [vmem:[%s63 + $0x50] sm:$0xff]
        %v4450 = vld [vmem:[%s63 + $0x58] sm:$0xff]
        %v4451 = vld [vmem:[%s63 + $0x60] sm:$0xff]
        %v4452 = vld [vmem:[%s63 + $0x68] sm:$0xff]
        %v4453 = vld [vmem:[%s63 + $0x70] sm:$0xff]
        %v4454 = vld [vmem:[%s63 + $0x78] sm:$0xff]
        %v4455 = vld [vmem:[%s63 + $0x80] sm:$0xff]
        %v4456 = vld [vmem:[%s63 + $0x88] sm:$0xff]
        %v4457 = vld [vmem:[%s63 + $0x90] sm:$0xff]
        %v4458 = vld [vmem:[%s63 + $0x98] sm:$0xff]
        %v4459 = vld [vmem:[%s63 + $0xa0] sm:$0xff]
        %v4460 = vld [vmem:[%s63 + $0xa8] sm:$0xff]
        %v4461 = vld [vmem:[%s63 + $0xb0] sm:$0xff]
        %v4462 = vld [vmem:[%s63 + $0xb8] sm:$0xff]
        %v4463 = vld [vmem:[%s63 + $0xc0] sm:$0xff]
        %v4464 = vld [vmem:[%s63 + $0xc8] sm:$0xff]
        %v4465 = vld [vmem:[%s63 + $0xd0] sm:$0xff]
        %v4466 = vld [vmem:[%s63 + $0xd8] sm:$0xff]
        %v4467 = vld [vmem:[%s63 + $0xe0] sm:$0xff]
        %v4468 = vld [vmem:[%s63 + $0xe8] sm:$0xff]
        %v4469 = vld [vmem:[%s63 + $0xf0] sm:$0xff]
        %v4470 = vld [vmem:[%s63 + $0xf8] sm:$0xff]
        %v4471 = vld [vmem:[%s63 + $0x100] sm:$0xff]
        %v4472 = vld [vmem:[%s63 + $0x108] sm:$0xff]
        %v4473 = vld [vmem:[%s63 + $0x110] sm:$0xff]
        %v4474 = vld [vmem:[%s63 + $0x118] sm:$0xff]
        %v4475 = vld [vmem:[%s63 + $0x120] sm:$0xff]
        %v4476 = vld [vmem:[%s63 + $0x128] sm:$0xff]
        %v4477 = vld [vmem:[%s63 + $0x130] sm:$0xff]
        %v4478 = vld [vmem:[%s63 + $0x138] sm:$0xff]
        %v4479 = vld [vmem:[%s63 + $0x140] sm:$0xff]
        %v4480 = vld [vmem:[%s63 + $0x148] sm:$0xff]
        %v4481 = vld [vmem:[%s63 + $0x150] sm:$0xff]
        %v4482 = vld [vmem:[%s63 + $0x158] sm:$0xff]
        %v4483 = vld [vmem:[%s63 + $0x160] sm:$0xff]
        %v4484 = vld [vmem:[%s63 + $0x168] sm:$0xff]
        %v4485 = vld [vmem:[%s63 + $0x170] sm:$0xff]
        %v4486 = vld [vmem:[%s63 + $0x178] sm:$0xff]
        %v4487 = vld [vmem:[%s63 + $0x180] sm:$0xff]
        %v4488 = vld [vmem:[%s63 + $0x188] sm:$0xff]
        %v4489 = vld [vmem:[%s63 + $0x190] sm:$0xff]
        %v4490 = vld [vmem:[%s63 + $0x198] sm:$0xff]
        %v4491 = vld [vmem:[%s63 + $0x1a0] sm:$0xff]
        %v4492 = vld [vmem:[%s63 + $0x1a8] sm:$0xff]
        %v4493 = vld [vmem:[%s65] sm:$0x1]
        %v4495 = vperm.slane %v4493, 0
        %v4497 = vadd.f32 %v4495, 0.0
        %v4498 = vrot.slane %v4431, 7
        %v4499 = vrot.slane %v4432, 7
        %v4500 = vrot.slane %v4433, 7
        %v4501 = vrot.slane %v4434, 7
        %v4502 = vrot.slane %v4435, 7
        %v4503 = vrot.slane %v4436, 7
        %v4504 = vrot.slane %v4437, 7
        %v4505 = vrot.slane %v4438, 7
        %v4506 = vsel %vm2341, %v4504, %v4505
        %v4507 = vsel %vm2341, %v4503, %v4504
        %v4508 = vsel %vm2341, %v4502, %v4503
        %v4509 = vsel %vm2341, %v4501, %v4502
        %v4510 = vsel %vm2341, %v4500, %v4501
        %v4511 = vsel %vm2341, %v4499, %v4500
        %v4512 = vsel %vm2341, %v4498, %v4499
        %v4513 = vsel %vm2341, %v4505, %v4498
        %v4514 = vmul.f32 %v4506, %v2353
        %v4515 = vmul.f32 %v4513, %v2358
        %v4516 = vmul.f32 %v4512, %v2363
        %v4517 = vmul.f32 %v4511, %v2368
        %v4518 = vmul.f32 %v4510, %v2373
        %v4519 = vmul.f32 %v4509, %v2378
        %v4520 = vmul.f32 %v4508, %v2383
        %v4521 = vmul.f32 %v4507, %v2388
        %v4523 = vsel %vm1522, %v4514, 0
        %v4526 = vsel %vm1522, %v4515, 0
        %v4529 = vsel %vm1522, %v4516, 0
        %v4532 = vsel %vm1522, %v4517, 0
        %v4535 = vsel %vm1522, %v4518, 0
        %v4538 = vsel %vm1522, %v4519, 0
        %v4541 = vsel %vm1522, %v4520, 0
        %v4544 = vsel %vm1522, %v4521, 0
        %4546 = vmatpush.msra.mxu0 0.0
        %4547 = vmatpush.msra.mxu0 0.0
        %4548 = vmatpush.msra.mxu0 0.0
        %4549 = vmatpush.msra.mxu0 0.0
        %4550 = vmatpush.msra.mxu0 0.0
        %4551 = vmatpush.msra.mxu0 0.0
        %4552 = vmatpush.msra.mxu0 0.0
        %4553 = vmatpush.msra.mxu0 0.0
        %4554 = vmatpush.msra.mxu0 0.0
        %4555 = vmatpush.msra.mxu0 0.0
        %4556 = vmatpush.msra.mxu0 %v4444
        %4557 = vmatpush.msra.mxu0 %v4443
        %4558 = vmatpush.msra.mxu0 %v4442
        %4559 = vmatpush.msra.mxu0 %v4441
        %4560 = vmatpush.msra.mxu0 %v4440
        %4561 = vmatpush.msra.mxu0 %v4439
        %4562 = vmatmul.f32.gmra.mxu0 %v4523
        %v4563 = vpop.f32.mrf.mxu0
        %v4564 = vadd.f32 0.0, %v4563
        %4565 = vmatmul.f32.gmra.mxu0 %v4526
        %v4566 = vpop.f32.mrf.mxu0
        %v4567 = vadd.f32 0.0, %v4566
        %4568 = vmatmul.f32.gmra.mxu0 %v4529
        %v4569 = vpop.f32.mrf.mxu0
        %v4570 = vadd.f32 0.0, %v4569
        %4571 = vmatmul.f32.gmra.mxu0 %v4532
        %v4572 = vpop.f32.mrf.mxu0
        %v4573 = vadd.f32 0.0, %v4572
        %4574 = vmatmul.f32.gmra.mxu0 %v4535
        %v4575 = vpop.f32.mrf.mxu0
        %v4576 = vadd.f32 0.0, %v4575
        %4577 = vmatmul.f32.gmra.mxu0 %v4538
        %v4578 = vpop.f32.mrf.mxu0
        %v4579 = vadd.f32 0.0, %v4578
        %4580 = vmatmul.f32.gmra.mxu0 %v4541
        %v4581 = vpop.f32.mrf.mxu0
        %v4582 = vadd.f32 0.0, %v4581
        %4583 = vmatmul.f32.gmra.mxu0 %v4544
        %v4584 = vpop.f32.mrf.mxu0
        %v4585 = vadd.f32 0.0, %v4584
        %4586 = vdwg.mxu0
        %v4587 = vadd.f32 %v4497, %v4564
        %v4588 = vadd.f32 %v4497, %v4567
        %v4589 = vadd.f32 %v4497, %v4570
        %v4590 = vadd.f32 %v4497, %v4573
        %v4591 = vadd.f32 %v4497, %v4576
        %v4592 = vadd.f32 %v4497, %v4579
        %v4593 = vadd.f32 %v4497, %v4582
        %v4594 = vadd.f32 %v4497, %v4585
        %v4595 = vmul.f32 %v4438, %v2474
        %v4596 = vmul.f32 %v4431, %v2479
        %v4597 = vmul.f32 %v4432, %v2484
        %v4598 = vmul.f32 %v4433, %v2489
        %v4599 = vmul.f32 %v4434, %v2494
        %v4600 = vmul.f32 %v4435, %v2499
        %v4601 = vmul.f32 %v4436, %v2504
        %v4602 = vmul.f32 %v4437, %v2509
        %v4604 = vsel %vm1522, %v4595, 0
        %v4607 = vsel %vm1522, %v4596, 0
        %v4610 = vsel %vm1522, %v4597, 0
        %v4613 = vsel %vm1522, %v4598, 0
        %v4616 = vsel %vm1522, %v4599, 0
        %v4619 = vsel %vm1522, %v4600, 0
        %v4622 = vsel %vm1522, %v4601, 0
        %v4625 = vsel %vm1522, %v4602, 0
        %4627 = vmatpush.msra.mxu0 0.0
        %4628 = vmatpush.msra.mxu0 0.0
        %4629 = vmatpush.msra.mxu0 0.0
        %4630 = vmatpush.msra.mxu0 0.0
        %4631 = vmatpush.msra.mxu0 0.0
        %4632 = vmatpush.msra.mxu0 0.0
        %4633 = vmatpush.msra.mxu0 0.0
        %4634 = vmatpush.msra.mxu0 0.0
        %4635 = vmatpush.msra.mxu0 0.0
        %4636 = vmatpush.msra.mxu0 0.0
        %4637 = vmatpush.msra.mxu0 %v4450
        %4638 = vmatpush.msra.mxu0 %v4449
        %4639 = vmatpush.msra.mxu0 %v4448
        %4640 = vmatpush.msra.mxu0 %v4447
        %4641 = vmatpush.msra.mxu0 %v4446
        %4642 = vmatpush.msra.mxu0 %v4445
        %4643 = vmatmul.f32.gmra.mxu0 %v4604
        %v4644 = vpop.f32.mrf.mxu0
        %v4645 = vadd.f32 0.0, %v4644
        %4646 = vmatmul.f32.gmra.mxu0 %v4607
        %v4647 = vpop.f32.mrf.mxu0
        %v4648 = vadd.f32 0.0, %v4647
        %4649 = vmatmul.f32.gmra.mxu0 %v4610
        %v4650 = vpop.f32.mrf.mxu0
        %v4651 = vadd.f32 0.0, %v4650
        %4652 = vmatmul.f32.gmra.mxu0 %v4613
        %v4653 = vpop.f32.mrf.mxu0
        %v4654 = vadd.f32 0.0, %v4653
        %4655 = vmatmul.f32.gmra.mxu0 %v4616
        %v4656 = vpop.f32.mrf.mxu0
        %v4657 = vadd.f32 0.0, %v4656
        %4658 = vmatmul.f32.gmra.mxu0 %v4619
        %v4659 = vpop.f32.mrf.mxu0
        %v4660 = vadd.f32 0.0, %v4659
        %4661 = vmatmul.f32.gmra.mxu0 %v4622
        %v4662 = vpop.f32.mrf.mxu0
        %v4663 = vadd.f32 0.0, %v4662
        %4664 = vmatmul.f32.gmra.mxu0 %v4625
        %v4665 = vpop.f32.mrf.mxu0
        %v4666 = vadd.f32 0.0, %v4665
        %4667 = vdwg.mxu0
        %v4668 = vadd.f32 %v4587, %v4645
        %v4669 = vadd.f32 %v4588, %v4648
        %v4670 = vadd.f32 %v4589, %v4651
        %v4671 = vadd.f32 %v4590, %v4654
        %v4672 = vadd.f32 %v4591, %v4657
        %v4673 = vadd.f32 %v4592, %v4660
        %v4674 = vadd.f32 %v4593, %v4663
        %v4675 = vadd.f32 %v4594, %v4666
        %v4676 = vrot.slane %v4431, 1
        %v4677 = vrot.slane %v4432, 1
        %v4678 = vrot.slane %v4433, 1
        %v4679 = vrot.slane %v4434, 1
        %v4680 = vrot.slane %v4435, 1
        %v4681 = vrot.slane %v4436, 1
        %v4682 = vrot.slane %v4437, 1
        %v4683 = vrot.slane %v4438, 1
        %v4684 = vsel %vm2600, %v4682, %v4683
        %v4685 = vsel %vm2600, %v4681, %v4682
        %v4686 = vsel %vm2600, %v4680, %v4681
        %v4687 = vsel %vm2600, %v4679, %v4680
        %v4688 = vsel %vm2600, %v4678, %v4679
        %v4689 = vsel %vm2600, %v4677, %v4678
        %v4690 = vsel %vm2600, %v4676, %v4677
        %v4691 = vsel %vm2600, %v4683, %v4676
        %v4692 = vmul.f32 %v4691, %v2612
        %v4693 = vmul.f32 %v4690, %v2617
        %v4694 = vmul.f32 %v4689, %v2622
        %v4695 = vmul.f32 %v4688, %v2627
        %v4696 = vmul.f32 %v4687, %v2632
        %v4697 = vmul.f32 %v4686, %v2637
        %v4698 = vmul.f32 %v4685, %v2642
        %v4699 = vmul.f32 %v4684, %v2647
        %v4701 = vsel %vm1522, %v4692, 0
        %v4704 = vsel %vm1522, %v4693, 0
        %v4707 = vsel %vm1522, %v4694, 0
        %v4710 = vsel %vm1522, %v4695, 0
        %v4713 = vsel %vm1522, %v4696, 0
        %v4716 = vsel %vm1522, %v4697, 0
        %v4719 = vsel %vm1522, %v4698, 0
        %v4722 = vsel %vm1522, %v4699, 0
        %4724 = vmatpush.msra.mxu0 0.0
        %4725 = vmatpush.msra.mxu0 0.0
        %4726 = vmatpush.msra.mxu0 0.0
        %4727 = vmatpush.msra.mxu0 0.0
        %4728 = vmatpush.msra.mxu0 0.0
        %4729 = vmatpush.msra.mxu0 0.0
        %4730 = vmatpush.msra.mxu0 0.0
        %4731 = vmatpush.msra.mxu0 0.0
        %4732 = vmatpush.msra.mxu0 0.0
        %4733 = vmatpush.msra.mxu0 0.0
        %4734 = vmatpush.msra.mxu0 %v4456
        %4735 = vmatpush.msra.mxu0 %v4455
        %4736 = vmatpush.msra.mxu0 %v4454
        %4737 = vmatpush.msra.mxu0 %v4453
        %4738 = vmatpush.msra.mxu0 %v4452
        %4739 = vmatpush.msra.mxu0 %v4451
        %4740 = vmatmul.f32.gmra.mxu0 %v4701
        %v4741 = vpop.f32.mrf.mxu0
        %v4742 = vadd.f32 0.0, %v4741
        %4743 = vmatmul.f32.gmra.mxu0 %v4704
        %v4744 = vpop.f32.mrf.mxu0
        %v4745 = vadd.f32 0.0, %v4744
        %4746 = vmatmul.f32.gmra.mxu0 %v4707
        %v4747 = vpop.f32.mrf.mxu0
        %v4748 = vadd.f32 0.0, %v4747
        %4749 = vmatmul.f32.gmra.mxu0 %v4710
        %v4750 = vpop.f32.mrf.mxu0
        %v4751 = vadd.f32 0.0, %v4750
        %4752 = vmatmul.f32.gmra.mxu0 %v4713
        %v4753 = vpop.f32.mrf.mxu0
        %v4754 = vadd.f32 0.0, %v4753
        %4755 = vmatmul.f32.gmra.mxu0 %v4716
        %v4756 = vpop.f32.mrf.mxu0
        %v4757 = vadd.f32 0.0, %v4756
        %4758 = vmatmul.f32.gmra.mxu0 %v4719
        %v4759 = vpop.f32.mrf.mxu0
        %v4760 = vadd.f32 0.0, %v4759
        %4761 = vmatmul.f32.gmra.mxu0 %v4722
        %v4762 = vpop.f32.mrf.mxu0
        %v4763 = vadd.f32 0.0, %v4762
        %4764 = vdwg.mxu0
        %v4765 = vadd.f32 %v4668, %v4742
        %v4766 = vadd.f32 %v4669, %v4745
        %v4767 = vadd.f32 %v4670, %v4748
        %v4768 = vadd.f32 %v4671, %v4751
        %v4769 = vadd.f32 %v4672, %v4754
        %v4770 = vadd.f32 %v4673, %v4757
        %v4771 = vadd.f32 %v4674, %v4760
        %v4772 = vadd.f32 %v4675, %v4763
        %v4773 = vmul.f32 %v4513, %v2733
        %v4774 = vmul.f32 %v4512, %v2738
        %v4775 = vmul.f32 %v4511, %v2743
        %v4776 = vmul.f32 %v4510, %v2748
        %v4777 = vmul.f32 %v4509, %v2753
        %v4778 = vmul.f32 %v4508, %v2758
        %v4779 = vmul.f32 %v4507, %v2763
        %v4780 = vmul.f32 %v4506, %v2768
        %v4782 = vsel %vm1522, %v4773, 0
        %v4785 = vsel %vm1522, %v4774, 0
        %v4788 = vsel %vm1522, %v4775, 0
        %v4791 = vsel %vm1522, %v4776, 0
        %v4794 = vsel %vm1522, %v4777, 0
        %v4797 = vsel %vm1522, %v4778, 0
        %v4800 = vsel %vm1522, %v4779, 0
        %v4803 = vsel %vm1522, %v4780, 0
        %4805 = vmatpush.msra.mxu0 0.0
        %4806 = vmatpush.msra.mxu0 0.0
        %4807 = vmatpush.msra.mxu0 0.0
        %4808 = vmatpush.msra.mxu0 0.0
        %4809 = vmatpush.msra.mxu0 0.0
        %4810 = vmatpush.msra.mxu0 0.0
        %4811 = vmatpush.msra.mxu0 0.0
        %4812 = vmatpush.msra.mxu0 0.0
        %4813 = vmatpush.msra.mxu0 0.0
        %4814 = vmatpush.msra.mxu0 0.0
        %4815 = vmatpush.msra.mxu0 %v4462
        %4816 = vmatpush.msra.mxu0 %v4461
        %4817 = vmatpush.msra.mxu0 %v4460
        %4818 = vmatpush.msra.mxu0 %v4459
        %4819 = vmatpush.msra.mxu0 %v4458
        %4820 = vmatpush.msra.mxu0 %v4457
        %4821 = vmatmul.f32.gmra.mxu0 %v4782
        %v4822 = vpop.f32.mrf.mxu0
        %v4823 = vadd.f32 0.0, %v4822
        %4824 = vmatmul.f32.gmra.mxu0 %v4785
        %v4825 = vpop.f32.mrf.mxu0
        %v4826 = vadd.f32 0.0, %v4825
        %4827 = vmatmul.f32.gmra.mxu0 %v4788
        %v4828 = vpop.f32.mrf.mxu0
        %v4829 = vadd.f32 0.0, %v4828
        %4830 = vmatmul.f32.gmra.mxu0 %v4791
        %v4831 = vpop.f32.mrf.mxu0
        %v4832 = vadd.f32 0.0, %v4831
        %4833 = vmatmul.f32.gmra.mxu0 %v4794
        %v4834 = vpop.f32.mrf.mxu0
        %v4835 = vadd.f32 0.0, %v4834
        %4836 = vmatmul.f32.gmra.mxu0 %v4797
        %v4837 = vpop.f32.mrf.mxu0
        %v4838 = vadd.f32 0.0, %v4837
        %4839 = vmatmul.f32.gmra.mxu0 %v4800
        %v4840 = vpop.f32.mrf.mxu0
        %v4841 = vadd.f32 0.0, %v4840
        %4842 = vmatmul.f32.gmra.mxu0 %v4803
        %v4843 = vpop.f32.mrf.mxu0
        %v4844 = vadd.f32 0.0, %v4843
        %4845 = vdwg.mxu0
        %v4846 = vadd.f32 %v4765, %v4823
        %v4847 = vadd.f32 %v4766, %v4826
        %v4848 = vadd.f32 %v4767, %v4829
        %v4849 = vadd.f32 %v4768, %v4832
        %v4850 = vadd.f32 %v4769, %v4835
        %v4851 = vadd.f32 %v4770, %v4838
        %v4852 = vadd.f32 %v4771, %v4841
        %v4853 = vadd.f32 %v4772, %v4844
        %v4854 = vmul.f32 %v4431, %v2854
        %v4855 = vmul.f32 %v4432, %v2859
        %v4856 = vmul.f32 %v4433, %v2864
        %v4857 = vmul.f32 %v4434, %v2869
        %v4858 = vmul.f32 %v4435, %v2874
        %v4859 = vmul.f32 %v4436, %v2879
        %v4860 = vmul.f32 %v4437, %v2884
        %v4861 = vmul.f32 %v4438, %v2889
        %v4863 = vsel %vm1522, %v4854, 0
        %v4866 = vsel %vm1522, %v4855, 0
        %v4869 = vsel %vm1522, %v4856, 0
        %v4872 = vsel %vm1522, %v4857, 0
        %v4875 = vsel %vm1522, %v4858, 0
        %v4878 = vsel %vm1522, %v4859, 0
        %v4881 = vsel %vm1522, %v4860, 0
        %v4884 = vsel %vm1522, %v4861, 0
        %4886 = vmatpush.msra.mxu0 0.0
        %4887 = vmatpush.msra.mxu0 0.0
        %4888 = vmatpush.msra.mxu0 0.0
        %4889 = vmatpush.msra.mxu0 0.0
        %4890 = vmatpush.msra.mxu0 0.0
        %4891 = vmatpush.msra.mxu0 0.0
        %4892 = vmatpush.msra.mxu0 0.0
        %4893 = vmatpush.msra.mxu0 0.0
        %4894 = vmatpush.msra.mxu0 0.0
        %4895 = vmatpush.msra.mxu0 0.0
        %4896 = vmatpush.msra.mxu0 %v4468
        %4897 = vmatpush.msra.mxu0 %v4467
        %4898 = vmatpush.msra.mxu0 %v4466
        %4899 = vmatpush.msra.mxu0 %v4465
        %4900 = vmatpush.msra.mxu0 %v4464
        %4901 = vmatpush.msra.mxu0 %v4463
        %4902 = vmatmul.f32.gmra.mxu0 %v4863
        %v4903 = vpop.f32.mrf.mxu0
        %v4904 = vadd.f32 0.0, %v4903
        %4905 = vmatmul.f32.gmra.mxu0 %v4866
        %v4906 = vpop.f32.mrf.mxu0
        %v4907 = vadd.f32 0.0, %v4906
        %4908 = vmatmul.f32.gmra.mxu0 %v4869
        %v4909 = vpop.f32.mrf.mxu0
        %v4910 = vadd.f32 0.0, %v4909
        %4911 = vmatmul.f32.gmra.mxu0 %v4872
        %v4912 = vpop.f32.mrf.mxu0
        %v4913 = vadd.f32 0.0, %v4912
        %4914 = vmatmul.f32.gmra.mxu0 %v4875
        %v4915 = vpop.f32.mrf.mxu0
        %v4916 = vadd.f32 0.0, %v4915
        %4917 = vmatmul.f32.gmra.mxu0 %v4878
        %v4918 = vpop.f32.mrf.mxu0
        %v4919 = vadd.f32 0.0, %v4918
        %4920 = vmatmul.f32.gmra.mxu0 %v4881
        %v4921 = vpop.f32.mrf.mxu0
        %v4922 = vadd.f32 0.0, %v4921
        %4923 = vmatmul.f32.gmra.mxu0 %v4884
        %v4924 = vpop.f32.mrf.mxu0
        %v4925 = vadd.f32 0.0, %v4924
        %4926 = vdwg.mxu0
        %v4927 = vadd.f32 %v4846, %v4904
        %v4928 = vadd.f32 %v4847, %v4907
        %v4929 = vadd.f32 %v4848, %v4910
        %v4930 = vadd.f32 %v4849, %v4913
        %v4931 = vadd.f32 %v4850, %v4916
        %v4932 = vadd.f32 %v4851, %v4919
        %v4933 = vadd.f32 %v4852, %v4922
        %v4934 = vadd.f32 %v4853, %v4925
        %v4935 = vmul.f32 %v4690, %v2975
        %v4936 = vmul.f32 %v4689, %v2980
        %v4937 = vmul.f32 %v4688, %v2985
        %v4938 = vmul.f32 %v4687, %v2990
        %v4939 = vmul.f32 %v4686, %v2995
        %v4940 = vmul.f32 %v4685, %v3000
        %v4941 = vmul.f32 %v4684, %v3005
        %v4942 = vmul.f32 %v4691, %v3010
        %v4944 = vsel %vm1522, %v4935, 0
        %v4947 = vsel %vm1522, %v4936, 0
        %v4950 = vsel %vm1522, %v4937, 0
        %v4953 = vsel %vm1522, %v4938, 0
        %v4956 = vsel %vm1522, %v4939, 0
        %v4959 = vsel %vm1522, %v4940, 0
        %v4962 = vsel %vm1522, %v4941, 0
        %v4965 = vsel %vm1522, %v4942, 0
        %4967 = vmatpush.msra.mxu0 0.0
        %4968 = vmatpush.msra.mxu0 0.0
        %4969 = vmatpush.msra.mxu0 0.0
        %4970 = vmatpush.msra.mxu0 0.0
        %4971 = vmatpush.msra.mxu0 0.0
        %4972 = vmatpush.msra.mxu0 0.0
        %4973 = vmatpush.msra.mxu0 0.0
        %4974 = vmatpush.msra.mxu0 0.0
        %4975 = vmatpush.msra.mxu0 0.0
        %4976 = vmatpush.msra.mxu0 0.0
        %4977 = vmatpush.msra.mxu0 %v4474
        %4978 = vmatpush.msra.mxu0 %v4473
        %4979 = vmatpush.msra.mxu0 %v4472
        %4980 = vmatpush.msra.mxu0 %v4471
        %4981 = vmatpush.msra.mxu0 %v4470
        %4982 = vmatpush.msra.mxu0 %v4469
        %4983 = vmatmul.f32.gmra.mxu0 %v4944
        %v4984 = vpop.f32.mrf.mxu0
        %v4985 = vadd.f32 0.0, %v4984
        %4986 = vmatmul.f32.gmra.mxu0 %v4947
        %v4987 = vpop.f32.mrf.mxu0
        %v4988 = vadd.f32 0.0, %v4987
        %4989 = vmatmul.f32.gmra.mxu0 %v4950
        %v4990 = vpop.f32.mrf.mxu0
        %v4991 = vadd.f32 0.0, %v4990
        %4992 = vmatmul.f32.gmra.mxu0 %v4953
        %v4993 = vpop.f32.mrf.mxu0
        %v4994 = vadd.f32 0.0, %v4993
        %4995 = vmatmul.f32.gmra.mxu0 %v4956
        %v4996 = vpop.f32.mrf.mxu0
        %v4997 = vadd.f32 0.0, %v4996
        %4998 = vmatmul.f32.gmra.mxu0 %v4959
        %v4999 = vpop.f32.mrf.mxu0
        %v5000 = vadd.f32 0.0, %v4999
        %5001 = vmatmul.f32.gmra.mxu0 %v4962
        %v5002 = vpop.f32.mrf.mxu0
        %v5003 = vadd.f32 0.0, %v5002
        %5004 = vmatmul.f32.gmra.mxu0 %v4965
        %v5005 = vpop.f32.mrf.mxu0
        %v5006 = vadd.f32 0.0, %v5005
        %5007 = vdwg.mxu0
        %v5008 = vadd.f32 %v4927, %v4985
        %v5009 = vadd.f32 %v4928, %v4988
        %v5010 = vadd.f32 %v4929, %v4991
        %v5011 = vadd.f32 %v4930, %v4994
        %v5012 = vadd.f32 %v4931, %v4997
        %v5013 = vadd.f32 %v4932, %v5000
        %v5014 = vadd.f32 %v4933, %v5003
        %v5015 = vadd.f32 %v4934, %v5006
        %v5016 = vmul.f32 %v4512, %v3096
        %v5017 = vmul.f32 %v4511, %v3101
        %v5018 = vmul.f32 %v4510, %v3106
        %v5019 = vmul.f32 %v4509, %v3111
        %v5020 = vmul.f32 %v4508, %v3116
        %v5021 = vmul.f32 %v4507, %v3121
        %v5022 = vmul.f32 %v4506, %v3126
        %v5023 = vmul.f32 %v4513, %v3131
        %v5025 = vsel %vm1522, %v5016, 0
        %v5028 = vsel %vm1522, %v5017, 0
        %v5031 = vsel %vm1522, %v5018, 0
        %v5034 = vsel %vm1522, %v5019, 0
        %v5037 = vsel %vm1522, %v5020, 0
        %v5040 = vsel %vm1522, %v5021, 0
        %v5043 = vsel %vm1522, %v5022, 0
        %v5046 = vsel %vm1522, %v5023, 0
        %5048 = vmatpush.msra.mxu0 0.0
        %5049 = vmatpush.msra.mxu0 0.0
        %5050 = vmatpush.msra.mxu0 0.0
        %5051 = vmatpush.msra.mxu0 0.0
        %5052 = vmatpush.msra.mxu0 0.0
        %5053 = vmatpush.msra.mxu0 0.0
        %5054 = vmatpush.msra.mxu0 0.0
        %5055 = vmatpush.msra.mxu0 0.0
        %5056 = vmatpush.msra.mxu0 0.0
        %5057 = vmatpush.msra.mxu0 0.0
        %5058 = vmatpush.msra.mxu0 %v4480
        %5059 = vmatpush.msra.mxu0 %v4479
        %5060 = vmatpush.msra.mxu0 %v4478
        %5061 = vmatpush.msra.mxu0 %v4477
        %5062 = vmatpush.msra.mxu0 %v4476
        %5063 = vmatpush.msra.mxu0 %v4475
        %5064 = vmatmul.f32.gmra.mxu0 %v5025
        %v5065 = vpop.f32.mrf.mxu0
        %v5066 = vadd.f32 0.0, %v5065
        %5067 = vmatmul.f32.gmra.mxu0 %v5028
        %v5068 = vpop.f32.mrf.mxu0
        %v5069 = vadd.f32 0.0, %v5068
        %5070 = vmatmul.f32.gmra.mxu0 %v5031
        %v5071 = vpop.f32.mrf.mxu0
        %v5072 = vadd.f32 0.0, %v5071
        %5073 = vmatmul.f32.gmra.mxu0 %v5034
        %v5074 = vpop.f32.mrf.mxu0
        %v5075 = vadd.f32 0.0, %v5074
        %5076 = vmatmul.f32.gmra.mxu0 %v5037
        %v5077 = vpop.f32.mrf.mxu0
        %v5078 = vadd.f32 0.0, %v5077
        %5079 = vmatmul.f32.gmra.mxu0 %v5040
        %v5080 = vpop.f32.mrf.mxu0
        %v5081 = vadd.f32 0.0, %v5080
        %5082 = vmatmul.f32.gmra.mxu0 %v5043
        %v5083 = vpop.f32.mrf.mxu0
        %v5084 = vadd.f32 0.0, %v5083
        %5085 = vmatmul.f32.gmra.mxu0 %v5046
        %v5086 = vpop.f32.mrf.mxu0
        %v5087 = vadd.f32 0.0, %v5086
        %5088 = vdwg.mxu0
        %v5089 = vadd.f32 %v5008, %v5066
        %v5090 = vadd.f32 %v5009, %v5069
        %v5091 = vadd.f32 %v5010, %v5072
        %v5092 = vadd.f32 %v5011, %v5075
        %v5093 = vadd.f32 %v5012, %v5078
        %v5094 = vadd.f32 %v5013, %v5081
        %v5095 = vadd.f32 %v5014, %v5084
        %v5096 = vadd.f32 %v5015, %v5087
        %v5097 = vmul.f32 %v4432, %v3217
        %v5098 = vmul.f32 %v4433, %v3222
        %v5099 = vmul.f32 %v4434, %v3227
        %v5100 = vmul.f32 %v4435, %v3232
        %v5101 = vmul.f32 %v4436, %v3237
        %v5102 = vmul.f32 %v4437, %v3242
        %v5103 = vmul.f32 %v4438, %v3247
        %v5104 = vmul.f32 %v4431, %v3252
        %v5106 = vsel %vm1522, %v5097, 0
        %v5109 = vsel %vm1522, %v5098, 0
        %v5112 = vsel %vm1522, %v5099, 0
        %v5115 = vsel %vm1522, %v5100, 0
        %v5118 = vsel %vm1522, %v5101, 0
        %v5121 = vsel %vm1522, %v5102, 0
        %v5124 = vsel %vm1522, %v5103, 0
        %v5127 = vsel %vm1522, %v5104, 0
        %5129 = vmatpush.msra.mxu0 0.0
        %5130 = vmatpush.msra.mxu0 0.0
        %5131 = vmatpush.msra.mxu0 0.0
        %5132 = vmatpush.msra.mxu0 0.0
        %5133 = vmatpush.msra.mxu0 0.0
        %5134 = vmatpush.msra.mxu0 0.0
        %5135 = vmatpush.msra.mxu0 0.0
        %5136 = vmatpush.msra.mxu0 0.0
        %5137 = vmatpush.msra.mxu0 0.0
        %5138 = vmatpush.msra.mxu0 0.0
        %5139 = vmatpush.msra.mxu0 %v4486
        %5140 = vmatpush.msra.mxu0 %v4485
        %5141 = vmatpush.msra.mxu0 %v4484
        %5142 = vmatpush.msra.mxu0 %v4483
        %5143 = vmatpush.msra.mxu0 %v4482
        %5144 = vmatpush.msra.mxu0 %v4481
        %5145 = vmatmul.f32.gmra.mxu0 %v5106
        %v5146 = vpop.f32.mrf.mxu0
        %v5147 = vadd.f32 0.0, %v5146
        %5148 = vmatmul.f32.gmra.mxu0 %v5109
        %v5149 = vpop.f32.mrf.mxu0
        %v5150 = vadd.f32 0.0, %v5149
        %5151 = vmatmul.f32.gmra.mxu0 %v5112
        %v5152 = vpop.f32.mrf.mxu0
        %v5153 = vadd.f32 0.0, %v5152
        %5154 = vmatmul.f32.gmra.mxu0 %v5115
        %v5155 = vpop.f32.mrf.mxu0
        %v5156 = vadd.f32 0.0, %v5155
        %5157 = vmatmul.f32.gmra.mxu0 %v5118
        %v5158 = vpop.f32.mrf.mxu0
        %v5159 = vadd.f32 0.0, %v5158
        %5160 = vmatmul.f32.gmra.mxu0 %v5121
        %v5161 = vpop.f32.mrf.mxu0
        %v5162 = vadd.f32 0.0, %v5161
        %5163 = vmatmul.f32.gmra.mxu0 %v5124
        %v5164 = vpop.f32.mrf.mxu0
        %v5165 = vadd.f32 0.0, %v5164
        %5166 = vmatmul.f32.gmra.mxu0 %v5127
        %v5167 = vpop.f32.mrf.mxu0
        %v5168 = vadd.f32 0.0, %v5167
        %5169 = vdwg.mxu0
        %v5170 = vadd.f32 %v5089, %v5147
        %v5171 = vadd.f32 %v5090, %v5150
        %v5172 = vadd.f32 %v5091, %v5153
        %v5173 = vadd.f32 %v5092, %v5156
        %v5174 = vadd.f32 %v5093, %v5159
        %v5175 = vadd.f32 %v5094, %v5162
        %v5176 = vadd.f32 %v5095, %v5165
        %v5177 = vadd.f32 %v5096, %v5168
        %v5178 = vmul.f32 %v4689, %v3338
        %v5179 = vmul.f32 %v4688, %v3343
        %v5180 = vmul.f32 %v4687, %v3348
        %v5181 = vmul.f32 %v4686, %v3353
        %v5182 = vmul.f32 %v4685, %v3358
        %v5183 = vmul.f32 %v4684, %v3363
        %v5184 = vmul.f32 %v4691, %v3368
        %v5185 = vmul.f32 %v4690, %v3373
        %v5187 = vsel %vm1522, %v5178, 0
        %v5190 = vsel %vm1522, %v5179, 0
        %v5193 = vsel %vm1522, %v5180, 0
        %v5196 = vsel %vm1522, %v5181, 0
        %v5199 = vsel %vm1522, %v5182, 0
        %v5202 = vsel %vm1522, %v5183, 0
        %v5205 = vsel %vm1522, %v5184, 0
        %v5208 = vsel %vm1522, %v5185, 0
        %5210 = vmatpush.msra.mxu0 0.0
        %5211 = vmatpush.msra.mxu0 0.0
        %5212 = vmatpush.msra.mxu0 0.0
        %5213 = vmatpush.msra.mxu0 0.0
        %5214 = vmatpush.msra.mxu0 0.0
        %5215 = vmatpush.msra.mxu0 0.0
        %5216 = vmatpush.msra.mxu0 0.0
        %5217 = vmatpush.msra.mxu0 0.0
        %5218 = vmatpush.msra.mxu0 0.0
        %5219 = vmatpush.msra.mxu0 0.0
        %5220 = vmatpush.msra.mxu0 %v4492
        %5221 = vmatpush.msra.mxu0 %v4491
        %5222 = vmatpush.msra.mxu0 %v4490
        %5223 = vmatpush.msra.mxu0 %v4489
        %5224 = vmatpush.msra.mxu0 %v4488
        %5225 = vmatpush.msra.mxu0 %v4487
        %5226 = vmatmul.f32.gmra.mxu0 %v5187
        %v5227 = vpop.f32.mrf.mxu0
        %v5228 = vadd.f32 0.0, %v5227
        %5229 = vmatmul.f32.gmra.mxu0 %v5190
        %v5230 = vpop.f32.mrf.mxu0
        %v5231 = vadd.f32 0.0, %v5230
        %5232 = vmatmul.f32.gmra.mxu0 %v5193
        %v5233 = vpop.f32.mrf.mxu0
        %v5234 = vadd.f32 0.0, %v5233
        %5235 = vmatmul.f32.gmra.mxu0 %v5196
        %v5236 = vpop.f32.mrf.mxu0
        %v5237 = vadd.f32 0.0, %v5236
        %5238 = vmatmul.f32.gmra.mxu0 %v5199
        %v5239 = vpop.f32.mrf.mxu0
        %v5240 = vadd.f32 0.0, %v5239
        %5241 = vmatmul.f32.gmra.mxu0 %v5202
        %v5242 = vpop.f32.mrf.mxu0
        %v5243 = vadd.f32 0.0, %v5242
        %5244 = vmatmul.f32.gmra.mxu0 %v5205
        %v5245 = vpop.f32.mrf.mxu0
        %v5246 = vadd.f32 0.0, %v5245
        %5247 = vmatmul.f32.gmra.mxu0 %v5208
        %v5248 = vpop.f32.mrf.mxu0
        %v5249 = vadd.f32 0.0, %v5248
        %5250 = vdwg.mxu0
        %v5251 = vadd.f32 %v5170, %v5228
        %v5252 = vadd.f32 %v5171, %v5231
        %v5253 = vadd.f32 %v5172, %v5234
        %v5254 = vadd.f32 %v5173, %v5237
        %v5255 = vadd.f32 %v5174, %v5240
        %v5256 = vadd.f32 %v5175, %v5243
        %v5257 = vadd.f32 %v5176, %v5246
        %v5258 = vadd.f32 %v5177, %v5249
        %5267 = vrot.lane.b32.xlu0 %v5251, 48
        %v5268 = vpop.permute.xlu0 %5267
        %5269 = vrot.lane.b32.xlu0 %v5252, 48
        %v5270 = vpop.permute.xlu0 %5269
        %5271 = vrot.lane.b32.xlu0 %v5253, 48
        %v5272 = vpop.permute.xlu0 %5271
        %5273 = vrot.lane.b32.xlu0 %v5254, 48
        %v5274 = vpop.permute.xlu0 %5273
        %5275 = vrot.lane.b32.xlu0 %v5255, 48
        %v5276 = vpop.permute.xlu0 %5275
        %5277 = vrot.lane.b32.xlu0 %v5256, 48
        %v5278 = vpop.permute.xlu0 %5277
        %5279 = vrot.lane.b32.xlu0 %v5257, 48
        %v5280 = vpop.permute.xlu0 %5279
        %5281 = vrot.lane.b32.xlu0 %v5258, 48
        %v5282 = vpop.permute.xlu0 %5281
        %v5291 = vsel %vm1522, %v4399, %v5268
        %v5292 = vsel %vm1522, %v4400, %v5270
        %v5293 = vsel %vm1522, %v4401, %v5272
        %v5294 = vsel %vm1522, %v4402, %v5274
        %v5295 = vsel %vm1522, %v4403, %v5276
        %v5296 = vsel %vm1522, %v4404, %v5278
        %v5297 = vsel %vm1522, %v4405, %v5280
        %v5298 = vsel %vm1522, %v4406, %v5282
        %v5299 = vld [vmem:[%s67] sm:$0xff]
        %v5300 = vld [vmem:[%s67 + $0x8] sm:$0xff]
        %v5301 = vld [vmem:[%s67 + $0x10] sm:$0xff]
        %v5302 = vld [vmem:[%s67 + $0x18] sm:$0xff]
        %v5303 = vld [vmem:[%s67 + $0x20] sm:$0xff]
        %v5304 = vld [vmem:[%s67 + $0x28] sm:$0xff]
        %v5305 = vld [vmem:[%s67 + $0x30] sm:$0xff]
        %v5306 = vld [vmem:[%s67 + $0x38] sm:$0xf]
        %v5307 = vld [vmem:[%s69] sm:$0x1]
        %v5309 = vperm.slane %v5307, 0
        %v5312 = vsel %vm1991, %v5291, 0
        %v5315 = vsel %vm1991, %v5292, 0
        %v5318 = vsel %vm1991, %v5293, 0
        %v5321 = vsel %vm1991, %v5294, 0
        %v5324 = vsel %vm1991, %v5295, 0
        %v5327 = vsel %vm1991, %v5296, 0
        %v5330 = vsel %vm1991, %v5297, 0
        %v5333 = vsel %vm1991, %v5298, 0
        %v5336 = vsel %vm1290, %v5306, 0
        %5338 = vmatpush.msra.mxu0 0.0
        %5339 = vmatpush.msra.mxu0 0.0
        %5340 = vmatpush.msra.mxu0 0.0
        %5341 = vmatpush.msra.mxu0 0.0
        %5342 = vmatpush.msra.mxu0 0.0
        %5343 = vmatpush.msra.mxu0 0.0
        %5344 = vmatpush.msra.mxu0 0.0
        %5345 = vmatpush.msra.mxu0 0.0
        %5346 = vmatpush.msra.mxu0 %v5336
        %5347 = vmatpush.msra.mxu0 %v5305
        %5348 = vmatpush.msra.mxu0 %v5304
        %5349 = vmatpush.msra.mxu0 %v5303
        %5350 = vmatpush.msra.mxu0 %v5302
        %5351 = vmatpush.msra.mxu0 %v5301
        %5352 = vmatpush.msra.mxu0 %v5300
        %5353 = vmatpush.msra.mxu0 %v5299
        %5354 = vmatmul.f32.gmra.mxu0 %v5312
        %v5355 = vpop.f32.mrf.mxu0
        %v5356 = vadd.f32 %v5309, %v5355
        %5357 = vmatmul.f32.gmra.mxu0 %v5315
        %v5358 = vpop.f32.mrf.mxu0
        %v5359 = vadd.f32 %v5309, %v5358
        %5360 = vmatmul.f32.gmra.mxu0 %v5318
        %v5361 = vpop.f32.mrf.mxu0
        %v5362 = vadd.f32 %v5309, %v5361
        %5363 = vmatmul.f32.gmra.mxu0 %v5321
        %v5364 = vpop.f32.mrf.mxu0
        %v5365 = vadd.f32 %v5309, %v5364
        %5366 = vmatmul.f32.gmra.mxu0 %v5324
        %v5367 = vpop.f32.mrf.mxu0
        %v5368 = vadd.f32 %v5309, %v5367
        %5369 = vmatmul.f32.gmra.mxu0 %v5327
        %v5370 = vpop.f32.mrf.mxu0
        %v5371 = vadd.f32 %v5309, %v5370
        %5372 = vmatmul.f32.gmra.mxu0 %v5330
        %v5373 = vpop.f32.mrf.mxu0
        %v5374 = vadd.f32 %v5309, %v5373
        %5375 = vmatmul.f32.gmra.mxu0 %v5333
        %v5376 = vpop.f32.mrf.mxu0
        %v5377 = vadd.f32 %v5309, %v5376
        %5378 = vdwg.mxu0
        %5387 = vrot.lane.b32.xlu0 %v5356, 120
        %v5388 = vpop.permute.xlu0 %5387
        %5389 = vrot.lane.b32.xlu0 %v5359, 120
        %v5390 = vpop.permute.xlu0 %5389
        %5391 = vrot.lane.b32.xlu0 %v5362, 120
        %v5392 = vpop.permute.xlu0 %5391
        %5393 = vrot.lane.b32.xlu0 %v5365, 120
        %v5394 = vpop.permute.xlu0 %5393
        %5395 = vrot.lane.b32.xlu0 %v5368, 120
        %v5396 = vpop.permute.xlu0 %5395
        %5397 = vrot.lane.b32.xlu0 %v5371, 120
        %v5398 = vpop.permute.xlu0 %5397
        %5399 = vrot.lane.b32.xlu0 %v5374, 120
        %v5400 = vpop.permute.xlu0 %5399
        %5401 = vrot.lane.b32.xlu0 %v5377, 120
        %v5402 = vpop.permute.xlu0 %5401
        %vm5403 = vcmask 64512
        %v5404 = vsel %vm5403, %v5356, 0
        %v5406 = vsel %vm5403, %v5359, 0
        %v5408 = vsel %vm5403, %v5362, 0
        %v5410 = vsel %vm5403, %v5365, 0
        %v5412 = vsel %vm5403, %v5368, 0
        %v5414 = vsel %vm5403, %v5371, 0
        %v5416 = vsel %vm5403, %v5374, 0
        %v5418 = vsel %vm5403, %v5377, 0
        %v5420 = vsel %vm5403, %v5388, 0
        %v5422 = vsel %vm5403, %v5390, 0
        %v5424 = vsel %vm5403, %v5392, 0
        %v5426 = vsel %vm5403, %v5394, 0
        %v5428 = vsel %vm5403, %v5396, 0
        %v5430 = vsel %vm5403, %v5398, 0
        %v5432 = vsel %vm5403, %v5400, 0
        %v5434 = vsel %vm5403, %v5402, 0
        %5436 = vmatpush.xpose.msra.mxu0 0.0
        %5437 = vmatpush.xpose.msra.mxu0 0.0
        %5438 = vmatpush.xpose.msra.mxu0 0.0
        %5439 = vmatpush.xpose.msra.mxu0 0.0
        %5440 = vmatpush.xpose.msra.mxu0 0.0
        %5441 = vmatpush.xpose.msra.mxu0 0.0
        %5442 = vmatpush.xpose.msra.mxu0 0.0
        %5443 = vmatpush.xpose.msra.mxu0 0.0
        %5444 = vmatpush.xpose.msra.mxu0 %v5434
        %5445 = vmatpush.xpose.msra.mxu0 %v5432
        %5446 = vmatpush.xpose.msra.mxu0 %v5430
        %5447 = vmatpush.xpose.msra.mxu0 %v5428
        %5448 = vmatpush.xpose.msra.mxu0 %v5426
        %5449 = vmatpush.xpose.msra.mxu0 %v5424
        %5450 = vmatpush.xpose.msra.mxu0 %v5422
        %5451 = vmatpush.xpose.msra.mxu0 %v5420
        %5452 = vmatmul.f32.gmra.mxu0 %v5404
        %v5453 = vpop.f32.mrf.mxu0
        %v5454 = vadd.f32 0.0, %v5453
        %5455 = vmatmul.f32.gmra.mxu0 %v5406
        %v5456 = vpop.f32.mrf.mxu0
        %v5457 = vadd.f32 0.0, %v5456
        %5458 = vmatmul.f32.gmra.mxu0 %v5408
        %v5459 = vpop.f32.mrf.mxu0
        %v5460 = vadd.f32 0.0, %v5459
        %5461 = vmatmul.f32.gmra.mxu0 %v5410
        %v5462 = vpop.f32.mrf.mxu0
        %v5463 = vadd.f32 0.0, %v5462
        %5464 = vmatmul.f32.gmra.mxu0 %v5412
        %v5465 = vpop.f32.mrf.mxu0
        %v5466 = vadd.f32 0.0, %v5465
        %5467 = vmatmul.f32.gmra.mxu0 %v5414
        %v5468 = vpop.f32.mrf.mxu0
        %v5469 = vadd.f32 0.0, %v5468
        %5470 = vmatmul.f32.gmra.mxu0 %v5416
        %v5471 = vpop.f32.mrf.mxu0
        %v5472 = vadd.f32 0.0, %v5471
        %5473 = vmatmul.f32.gmra.mxu0 %v5418
        %v5474 = vpop.f32.mrf.mxu0
        %v5475 = vadd.f32 0.0, %v5474
        %5476 = vdwg.mxu0
        %v5477 = vsel %vm1925, %v5454, -inf
        %5478 = vmax.xlane.f32.xlu0 %v5477
        %v5479 = vpop.xlane.xlu0 %5478
        %v5480 = vsel %vm1925, %v5457, -inf
        %5481 = vmax.xlane.f32.xlu0 %v5480
        %v5482 = vpop.xlane.xlu0 %5481
        %v5483 = vsel %vm1925, %v5460, -inf
        %5484 = vmax.xlane.f32.xlu0 %v5483
        %v5485 = vpop.xlane.xlu0 %5484
        %v5486 = vsel %vm1925, %v5463, -inf
        %5487 = vmax.xlane.f32.xlu0 %v5486
        %v5488 = vpop.xlane.xlu0 %5487
        %v5489 = vsel %vm1925, %v5466, -inf
        %5490 = vmax.xlane.f32.xlu0 %v5489
        %v5491 = vpop.xlane.xlu0 %5490
        %v5492 = vsel %vm1925, %v5469, -inf
        %5493 = vmax.xlane.f32.xlu0 %v5492
        %v5494 = vpop.xlane.xlu0 %5493
        %v5495 = vsel %vm1925, %v5472, -inf
        %5496 = vmax.xlane.f32.xlu0 %v5495
        %v5497 = vpop.xlane.xlu0 %5496
        %v5498 = vsel %vm1925, %v5475, -inf
        %5499 = vmax.xlane.f32.xlu0 %v5498
        %v5500 = vpop.xlane.xlu0 %5499
        %v5501 = vsub.f32 %v5454, %v5479
        %v5502 = vsub.f32 %v5457, %v5482
        %v5503 = vsub.f32 %v5460, %v5485
        %v5504 = vsub.f32 %v5463, %v5488
        %v5505 = vsub.f32 %v5466, %v5491
        %v5506 = vsub.f32 %v5469, %v5494
        %v5507 = vsub.f32 %v5472, %v5497
        %v5508 = vsub.f32 %v5475, %v5500
        %v5509 = vmul.f32 %v5501, 1.442695
        %v5510 = vpow.pop %v5509
        %v5511 = vmul.f32 %v5502, 1.442695
        %v5512 = vpow.pop %v5511
        %v5513 = vmul.f32 %v5503, 1.442695
        %v5514 = vpow.pop %v5513
        %v5515 = vmul.f32 %v5504, 1.442695
        %v5516 = vpow.pop %v5515
        %v5517 = vmul.f32 %v5505, 1.442695
        %v5518 = vpow.pop %v5517
        %v5519 = vmul.f32 %v5506, 1.442695
        %v5520 = vpow.pop %v5519
        %v5521 = vmul.f32 %v5507, 1.442695
        %v5522 = vpow.pop %v5521
        %v5523 = vmul.f32 %v5508, 1.442695
        %v5524 = vpow.pop %v5523
        %v5525 = vsel %vm1925, %v5510, 0.0
        %5526 = vadd.xlane.f32.xlu0 %v5525
        %v5527 = vpop.xlane.xlu0 %5526
        %v5528 = vsel %vm1925, %v5512, 0.0
        %5529 = vadd.xlane.f32.xlu0 %v5528
        %v5530 = vpop.xlane.xlu0 %5529
        %v5531 = vsel %vm1925, %v5514, 0.0
        %5532 = vadd.xlane.f32.xlu0 %v5531
        %v5533 = vpop.xlane.xlu0 %5532
        %v5534 = vsel %vm1925, %v5516, 0.0
        %5535 = vadd.xlane.f32.xlu0 %v5534
        %v5536 = vpop.xlane.xlu0 %5535
        %v5537 = vsel %vm1925, %v5518, 0.0
        %5538 = vadd.xlane.f32.xlu0 %v5537
        %v5539 = vpop.xlane.xlu0 %5538
        %v5540 = vsel %vm1925, %v5520, 0.0
        %5541 = vadd.xlane.f32.xlu0 %v5540
        %v5542 = vpop.xlane.xlu0 %5541
        %v5543 = vsel %vm1925, %v5522, 0.0
        %5544 = vadd.xlane.f32.xlu0 %v5543
        %v5545 = vpop.xlane.xlu0 %5544
        %v5546 = vsel %vm1925, %v5524, 0.0
        %5547 = vadd.xlane.f32.xlu0 %v5546
        %v5548 = vpop.xlane.xlu0 %5547
        %v5549 = vrcp.pop %v5527
        %v5550 = vrcp.pop %v5530
        %v5551 = vrcp.pop %v5533
        %v5552 = vrcp.pop %v5536
        %v5553 = vrcp.pop %v5539
        %v5554 = vrcp.pop %v5542
        %v5555 = vrcp.pop %v5545
        %v5556 = vrcp.pop %v5548
        %v5557 = vmul.f32 %v5510, %v5549
        %v5558 = vmul.f32 %v5512, %v5550
        %v5559 = vmul.f32 %v5514, %v5551
        %v5560 = vmul.f32 %v5516, %v5552
        %v5561 = vmul.f32 %v5518, %v5553
        %v5562 = vmul.f32 %v5520, %v5554
        %v5563 = vmul.f32 %v5522, %v5555
        %v5564 = vmul.f32 %v5524, %v5556
        %v5566 = vsel %vm1925, %v5557, 0
        %v5569 = vsel %vm1925, %v5558, 0
        %v5572 = vsel %vm1925, %v5559, 0
        %v5575 = vsel %vm1925, %v5560, 0
        %v5578 = vsel %vm1925, %v5561, 0
        %v5581 = vsel %vm1925, %v5562, 0
        %v5584 = vsel %vm1925, %v5563, 0
        %v5587 = vsel %vm1925, %v5564, 0
        %5589 = vmatpush.msra.mxu0 0.0
        %5590 = vmatpush.msra.mxu0 0.0
        %5591 = vmatpush.msra.mxu0 0.0
        %5592 = vmatpush.msra.mxu0 0.0
        %5593 = vmatpush.msra.mxu0 0.0
        %5594 = vmatpush.msra.mxu0 0.0
        %5595 = vmatpush.msra.mxu0 0.0
        %5596 = vmatpush.msra.mxu0 0.0
        %5597 = vmatpush.msra.mxu0 %v5298
        %5598 = vmatpush.msra.mxu0 %v5297
        %5599 = vmatpush.msra.mxu0 %v5296
        %5600 = vmatpush.msra.mxu0 %v5295
        %5601 = vmatpush.msra.mxu0 %v5294
        %5602 = vmatpush.msra.mxu0 %v5293
        %5603 = vmatpush.msra.mxu0 %v5292
        %5604 = vmatpush.msra.mxu0 %v5291
        %5605 = vmatmul.f32.gmra.mxu0 %v5566
        %v5606 = vpop.f32.mrf.mxu0
        %v5607 = vadd.f32 0.0, %v5606
        %5608 = vmatmul.f32.gmra.mxu0 %v5569
        %v5609 = vpop.f32.mrf.mxu0
        %v5610 = vadd.f32 0.0, %v5609
        %5611 = vmatmul.f32.gmra.mxu0 %v5572
        %v5612 = vpop.f32.mrf.mxu0
        %v5613 = vadd.f32 0.0, %v5612
        %5614 = vmatmul.f32.gmra.mxu0 %v5575
        %v5615 = vpop.f32.mrf.mxu0
        %v5616 = vadd.f32 0.0, %v5615
        %5617 = vmatmul.f32.gmra.mxu0 %v5578
        %v5618 = vpop.f32.mrf.mxu0
        %v5619 = vadd.f32 0.0, %v5618
        %5620 = vmatmul.f32.gmra.mxu0 %v5581
        %v5621 = vpop.f32.mrf.mxu0
        %v5622 = vadd.f32 0.0, %v5621
        %5623 = vmatmul.f32.gmra.mxu0 %v5584
        %v5624 = vpop.f32.mrf.mxu0
        %v5625 = vadd.f32 0.0, %v5624
        %5626 = vmatmul.f32.gmra.mxu0 %v5587
        %v5627 = vpop.f32.mrf.mxu0
        %v5628 = vadd.f32 0.0, %v5627
        %5629 = vdwg.mxu0
        %v5630 = vmul.f32 %v5607, 0.5
        %v5631 = vmul.f32 %v5610, 0.5
        %v5632 = vmul.f32 %v5613, 0.5
        %v5633 = vmul.f32 %v5616, 0.5
        %v5634 = vmul.f32 %v5619, 0.5
        %v5635 = vmul.f32 %v5622, 0.5
        %v5636 = vmul.f32 %v5625, 0.5
        %v5637 = vmul.f32 %v5628, 0.5
        %v5638 = vadd.f32 %v5630, %v5291
        %v5639 = vadd.f32 %v5631, %v5292
        %v5640 = vadd.f32 %v5632, %v5293
        %v5641 = vadd.f32 %v5633, %v5294
        %v5642 = vadd.f32 %v5634, %v5295
        %v5643 = vadd.f32 %v5635, %v5296
        %v5644 = vadd.f32 %v5636, %v5297
        %v5645 = vadd.f32 %v5637, %v5298
        %v5646 = vld [vmem:[%s71] sm:$0xff]
        %v5647 = vld [vmem:[%s71 + $0x8] sm:$0xff]
        %v5648 = vld [vmem:[%s71 + $0x10] sm:$0xff]
        %v5649 = vld [vmem:[%s71 + $0x18] sm:$0xff]
        %v5650 = vld [vmem:[%s71 + $0x20] sm:$0xff]
        %v5651 = vld [vmem:[%s71 + $0x28] sm:$0xff]
        %v5652 = vld [vmem:[%s71 + $0x30] sm:$0xff]
        %v5653 = vld [vmem:[%s71 + $0x38] sm:$0xf]
        %v5654 = vld [vmem:[%s73] sm:$0xff]
        %v5655 = vld [vmem:[%s73 + $0x8] sm:$0xff]
        %v5656 = vld [vmem:[%s73 + $0x10] sm:$0xff]
        %v5657 = vld [vmem:[%s73 + $0x18] sm:$0xff]
        %v5658 = vld [vmem:[%s73 + $0x20] sm:$0xff]
        %v5659 = vld [vmem:[%s73 + $0x28] sm:$0xff]
        %v5660 = vld [vmem:[%s73 + $0x30] sm:$0xff]
        %v5661 = vld [vmem:[%s73 + $0x38] sm:$0xf]
        %v5663 = vsel %vm1991, %v5638, 0
        %v5666 = vsel %vm1991, %v5639, 0
        %v5669 = vsel %vm1991, %v5640, 0
        %v5672 = vsel %vm1991, %v5641, 0
        %v5675 = vsel %vm1991, %v5642, 0
        %v5678 = vsel %vm1991, %v5643, 0
        %v5681 = vsel %vm1991, %v5644, 0
        %v5684 = vsel %vm1991, %v5645, 0
        %v5687 = vsel %vm1290, %v5661, 0
        %5689 = vmatpush.msra.mxu0 0.0
        %5690 = vmatpush.msra.mxu0 0.0
        %5691 = vmatpush.msra.mxu0 0.0
        %5692 = vmatpush.msra.mxu0 0.0
        %5693 = vmatpush.msra.mxu0 0.0
        %5694 = vmatpush.msra.mxu0 0.0
        %5695 = vmatpush.msra.mxu0 0.0
        %5696 = vmatpush.msra.mxu0 0.0
        %5697 = vmatpush.msra.mxu0 %v5687
        %5698 = vmatpush.msra.mxu0 %v5660
        %5699 = vmatpush.msra.mxu0 %v5659
        %5700 = vmatpush.msra.mxu0 %v5658
        %5701 = vmatpush.msra.mxu0 %v5657
        %5702 = vmatpush.msra.mxu0 %v5656
        %5703 = vmatpush.msra.mxu0 %v5655
        %5704 = vmatpush.msra.mxu0 %v5654
        %5705 = vmatmul.f32.gmra.mxu0 %v5663
        %v5706 = vpop.f32.mrf.mxu0
        %v5707 = vadd.f32 0.0, %v5706
        %5708 = vmatmul.f32.gmra.mxu0 %v5666
        %v5709 = vpop.f32.mrf.mxu0
        %v5710 = vadd.f32 0.0, %v5709
        %5711 = vmatmul.f32.gmra.mxu0 %v5669
        %v5712 = vpop.f32.mrf.mxu0
        %v5713 = vadd.f32 0.0, %v5712
        %5714 = vmatmul.f32.gmra.mxu0 %v5672
        %v5715 = vpop.f32.mrf.mxu0
        %v5716 = vadd.f32 0.0, %v5715
        %5717 = vmatmul.f32.gmra.mxu0 %v5675
        %v5718 = vpop.f32.mrf.mxu0
        %v5719 = vadd.f32 0.0, %v5718
        %5720 = vmatmul.f32.gmra.mxu0 %v5678
        %v5721 = vpop.f32.mrf.mxu0
        %v5722 = vadd.f32 0.0, %v5721
        %5723 = vmatmul.f32.gmra.mxu0 %v5681
        %v5724 = vpop.f32.mrf.mxu0
        %v5725 = vadd.f32 0.0, %v5724
        %5726 = vmatmul.f32.gmra.mxu0 %v5684
        %v5727 = vpop.f32.mrf.mxu0
        %v5728 = vadd.f32 0.0, %v5727
        %5729 = vdwg.mxu0
        %v5731 = vsel %vm1991, %v2210, 0
        %v5734 = vsel %vm1991, %v2211, 0
        %v5737 = vsel %vm1991, %v2212, 0
        %v5740 = vsel %vm1991, %v2213, 0
        %v5743 = vsel %vm1991, %v2214, 0
        %v5746 = vsel %vm1991, %v2215, 0
        %v5749 = vsel %vm1991, %v2216, 0
        %v5752 = vsel %vm1991, %v2217, 0
        %v5755 = vsel %vm1290, %v5653, 0
        %5757 = vmatpush.msra.mxu0 0.0
        %5758 = vmatpush.msra.mxu0 0.0
        %5759 = vmatpush.msra.mxu0 0.0
        %5760 = vmatpush.msra.mxu0 0.0
        %5761 = vmatpush.msra.mxu0 0.0
        %5762 = vmatpush.msra.mxu0 0.0
        %5763 = vmatpush.msra.mxu0 0.0
        %5764 = vmatpush.msra.mxu0 0.0
        %5765 = vmatpush.msra.mxu0 %v5755
        %5766 = vmatpush.msra.mxu0 %v5652
        %5767 = vmatpush.msra.mxu0 %v5651
        %5768 = vmatpush.msra.mxu0 %v5650
        %5769 = vmatpush.msra.mxu0 %v5649
        %5770 = vmatpush.msra.mxu0 %v5648
        %5771 = vmatpush.msra.mxu0 %v5647
        %5772 = vmatpush.msra.mxu0 %v5646
        %5773 = vmatmul.f32.gmra.mxu0 %v5731
        %v5774 = vpop.f32.mrf.mxu0
        %v5775 = vadd.f32 %v5707, %v5774
        %5776 = vmatmul.f32.gmra.mxu0 %v5734
        %v5777 = vpop.f32.mrf.mxu0
        %v5778 = vadd.f32 %v5710, %v5777
        %5779 = vmatmul.f32.gmra.mxu0 %v5737
        %v5780 = vpop.f32.mrf.mxu0
        %v5781 = vadd.f32 %v5713, %v5780
        %5782 = vmatmul.f32.gmra.mxu0 %v5740
        %v5783 = vpop.f32.mrf.mxu0
        %v5784 = vadd.f32 %v5716, %v5783
        %5785 = vmatmul.f32.gmra.mxu0 %v5743
        %v5786 = vpop.f32.mrf.mxu0
        %v5787 = vadd.f32 %v5719, %v5786
        %5788 = vmatmul.f32.gmra.mxu0 %v5746
        %v5789 = vpop.f32.mrf.mxu0
        %v5790 = vadd.f32 %v5722, %v5789
        %5791 = vmatmul.f32.gmra.mxu0 %v5749
        %v5792 = vpop.f32.mrf.mxu0
        %v5793 = vadd.f32 %v5725, %v5792
        %5794 = vmatmul.f32.gmra.mxu0 %v5752
        %v5795 = vpop.f32.mrf.mxu0
        %v5796 = vadd.f32 %v5728, %v5795
        %5797 = vdwg.mxu0
        %vm5798 = vcmask 39936
        %v5799 = vsel %vm5798, %v5775, 0.0
        %v5800 = vsel %vm5798, %v5778, 0.0
        %v5801 = vadd.f32 %v5799, %v5800
        %v5802 = vsel %vm5798, %v5781, 0.0
        %v5803 = vadd.f32 %v5801, %v5802
        %v5804 = vsel %vm5798, %v5784, 0.0
        %v5805 = vadd.f32 %v5803, %v5804
        %v5806 = vsel %vm5798, %v5787, 0.0
        %v5807 = vadd.f32 %v5805, %v5806
        %v5808 = vsel %vm5798, %v5790, 0.0
        %v5809 = vadd.f32 %v5807, %v5808
        %v5810 = vsel %vm5798, %v5793, 0.0
        %v5811 = vadd.f32 %v5809, %v5810
        %v5812 = vsel %vm5798, %v5796, 0.0
        %v5813 = vadd.f32 %v5811, %v5812
        %v5814 = vrot.slane %v5813, 4
        %v5815 = vadd.f32 %v5813, %v5814
        %v5816 = vrot.slane %v5815, 2
        %v5817 = vadd.f32 %v5815, %v5816
        %v5818 = vrot.slane %v5817, 1
        %v5819 = vadd.f32 %v5817, %v5818
        %v5820 = vrcp.pop 64.0
        %v5821 = vmul.f32 64.0, %v5820
        %v5822 = vsub.f32 1.0, %v5821
        %v5823 = vmul.f32 %v5820, %v5822
        %v5824 = vadd.f32 %v5820, %v5823
        %vm5825 = vweird.f32 %v5820
        %v5826 = vsel %vm5825, %v5820, %v5824
        %v5827 = vmul.f32 %v5819, %v5826
        %v5828 = vld [vmem:[%s75] sm:$0x1]
        %v5829 = vadd.f32 %v5827, %v5828
        %vm5830 = vcmask 32768
        %5831 = vst.msk [vmem:[%s1174] sm:$0x1] %vm5830, %v5829
        %s5832 = sand.u32 %s925, 1
        %s5833 = scalar_lea.sflag [#allocation3], %s5832
        %s5834 = sand.u32 %s925, 1
        %s5835 = scalar_lea.vmem [#allocation2], %s5834
        // Predicated region
        $region177: #{tpu_custom_call.1} parent=175 // pred_check
          %p5836 = pneg %p935
        $region178: #{tpu_custom_call.1} parent=175 // pred_check_branch
          %5838 = sbr.rel (%p5836) target = $region180
        $region179: #{tpu_custom_call.1} parent=175 // pred_region
          %5840 = vsyncadd %s5833, 0
          %s5841 = scalar_lea.hbm %s79, %s93
          %s5843 = sshll.u32 %s5835, 4
          %s5844 = int_to_ptr.vmem [resolvable:$true] %s5843
          %s5845 = sshll.u32 %s5841, 4
          %s5846 = int_to_ptr.hbm [resolvable:$true] %s5845
          %5848 = dma.vmem_to_hbm [thread:$0]  %s5844, 16, %s5846, %s5833
        $region180: #{tpu_custom_call.1} parent=175 // pred_fallthru
          _
      $region176: #{tpu_custom_call.1} parent=5 // pred_fallthru
        _
      %p5849 = scmp.le.s32.totalorder 2, %s88
      // Predicated region
      $region181: #{tpu_custom_call.1} parent=5 // pred_check
        %p5850 = pneg %p5849
      $region182: #{tpu_custom_call.1} parent=5 // pred_check_branch
        %5852 = sbr.rel (%p5850) target = $region184
      $region183: #{tpu_custom_call.1} parent=5 // pred_region
        %s5853 = ssub.s32 %s88, 2
        // Predicated region
        $region185: #{tpu_custom_call.1} parent=183 // pred_check
          %p5854 = pneg %p941
        $region186: #{tpu_custom_call.1} parent=183 // pred_check_branch
          %5856 = sbr.rel (%p5854) target = $region188
        $region187: #{tpu_custom_call.1} parent=183 // pred_region
          %s5857 = sand.u32 %s926, 1
          %s5858 = scalar_lea.sflag [#allocation3], %s5857
          %s5859 = sand.u32 %s926, 1
          %s5860 = scalar_lea.vmem [#allocation2], %s5859
          %5862 = dma.done %s5858, 16
        $region188: #{tpu_custom_call.1} parent=183 // pred_fallthru
          _
      $region184: #{tpu_custom_call.1} parent=5 // pred_fallthru
        _
    $region6: #{tpu_custom_call.1} parent=1 // loop_footer
      %s92 = sadd.s32 1, %s88
    $region7: #{tpu_custom_call.1} parent=1 // loop_footer_branch
      %87 = sbr.rel target = $region3
    $region8: #{tpu_custom_call.1} parent=1 // loop_exit
      _
    %5863 = vsyncpa [#allocation3], 1
    %s5864 = scalar_lea.sflag [#allocation3], 1
    %5865 = vsyncpa %s5864, 1

</llo_original>
